<compile_context>
chip_gen: v6e
topology: v6e:2x2x1
jax: 0.10.0
libtpu: 0.0.40
codegen_flags: <defaults>
</compile_context>

<pallas_src>
import functools

import jax
import jax.numpy as jnp
import numpy as np
from jax.experimental import pallas as pl
from jax.experimental.pallas import tpu as pltpu

NEG_SLOPE = 0.2     # GATv2Conv default negative_slope
LN_EPS = 1e-5       # nn.LayerNorm default eps
NEG_INF = -1e30     # mask value for the dense softmax


def _stacked_gatv2_kernel(x_ref, wenc_ref, benc_ref, adj_ref,
                          wlr_ref, blr_ref, att_ref, bconv_ref,
                          gamma_ref, beta_ref,
                          out_ref, h_ref,
                          *, n_heads, head_dim):
    layer = pl.program_id(0)
    hidden = n_heads * head_dim

    # ---- node encoder + ReLU: only at the first grid step -------------------
    @pl.when(layer == 0)
    def _():
        h0 = jnp.dot(x_ref[...], wenc_ref[...],
                     preferred_element_type=jnp.float32) + benc_ref[...]
        h_ref[...] = jnp.maximum(h0, 0.0)

    h = h_ref[...]                                   # (N, H) VMEM-resident carry
    adj = adj_ref[...]                               # (N, N), adj[i, j]=1 <=> edge j->i

    # ---- GATv2Conv: fused left/right projection (single MXU pass) -----------
    g = jnp.dot(h, wlr_ref[...], preferred_element_type=jnp.float32) + blr_ref[...]
    gl = g[:, :hidden]                               # source projection (lin_l)
    gr = g[:, hidden:]                               # target projection (lin_r)
    att = att_ref[...]                               # (n_heads, head_dim)

    head_outs = []
    for hh in range(n_heads):                        # unrolled at trace time
        lo, hi = hh * head_dim, (hh + 1) * head_dim
        gl_h = gl[:, lo:hi]                          # (N, d)
        gr_h = gr[:, lo:hi]                          # (N, d)
        # GATv2 logits: e[i, j] = a . leaky_relu(gr[i] + gl[j])
        s = gr_h[:, None, :] + gl_h[None, :, :]      # (N, N, d)
        s = jnp.where(s > 0, s, NEG_SLOPE * s)       # LeakyReLU before att (v2!)
        e = jnp.sum(s * att[hh:hh + 1, :], axis=-1)  # (N, N)
        # dense masked softmax over source nodes j (numerically stable)
        e = jnp.where(adj > 0, e, NEG_INF)
        p = jnp.exp(e - jnp.max(e, axis=1, keepdims=True))   # masked entries -> 0
        denom = jnp.sum(p, axis=1, keepdims=True)
        alpha = p * pl.reciprocal(denom, approx=True)        # EUP reciprocal
        head_outs.append(jnp.dot(alpha, gl_h,
                                 preferred_element_type=jnp.float32))
    hc = jnp.concatenate(head_outs, axis=1) + bconv_ref[...]  # (N, H) + final bias

    # ---- LayerNorm(H) --------------------------------------------------------
    mu = jnp.mean(hc, axis=-1, keepdims=True)
    ctr = hc - mu
    var = jnp.mean(ctr * ctr, axis=-1, keepdims=True)
    hn = ctr * jax.lax.rsqrt(var + LN_EPS) * gamma_ref[...] + beta_ref[...]

    # ---- ELU (dropout is identity at inference) ------------------------------
    # TODO(synk): training-mode dropout (pltpu.prng_random_bits mask) not implemented.
    out = jnp.where(hn > 0, hn, jnp.exp(hn) - 1.0)

    h_ref[...] = out          # carry to the next layer (stays in VMEM)
    out_ref[...] = out        # HBM writeback happens once, at grid end


def stacked_gatv2_forward(x, adj, params):
    n, node_feats = x.shape
    n_layers, n_heads, head_dim = params["att"].shape
    hidden = n_heads * head_dim

    kernel = functools.partial(_stacked_gatv2_kernel,
                               n_heads=n_heads, head_dim=head_dim)

    grid_spec = pltpu.PrefetchScalarGridSpec(
        num_scalar_prefetch=0,
        grid=(n_layers,),
        in_specs=[
            pl.BlockSpec((n, node_feats), lambda l: (0, 0)),             # x
            pl.BlockSpec((node_feats, hidden), lambda l: (0, 0)),        # w_enc
            pl.BlockSpec((1, hidden), lambda l: (0, 0)),                 # b_enc
            pl.BlockSpec((n, n), lambda l: (0, 0)),                      # adj
            pl.BlockSpec((None, hidden, 2 * hidden), lambda l: (l, 0, 0)),  # [Wl|Wr]
            pl.BlockSpec((None, 1, 2 * hidden), lambda l: (l, 0, 0)),       # [bl|br]
            pl.BlockSpec((None, n_heads, head_dim), lambda l: (l, 0, 0)),   # att
            pl.BlockSpec((None, 1, hidden), lambda l: (l, 0, 0)),           # conv bias
            pl.BlockSpec((None, 1, hidden), lambda l: (l, 0, 0)),           # LN gamma
            pl.BlockSpec((None, 1, hidden), lambda l: (l, 0, 0)),           # LN beta
        ],
        out_specs=pl.BlockSpec((n, hidden), lambda l: (0, 0)),
        scratch_shapes=[pltpu.VMEM((n, hidden), jnp.float32)],           # resident h
    )

    return pl.pallas_call(
        kernel,
        out_shape=jax.ShapeDtypeStruct((n, hidden), jnp.float32),
        grid_spec=grid_spec,
        compiler_params=pltpu.CompilerParams(
            dimension_semantics=("arbitrary",),      # layers are sequential
            vmem_limit_bytes=32 * 1024 * 1024,
        ),
    )(x, params["w_enc"], params["b_enc"], adj,
      params["wlr"], params["blr"], params["att"],
      params["b_conv"], params["gamma"], params["beta"])


# --------------------------- pure-JAX reference -------------------------------
def reference_forward(x, adj, params):
    n_layers, n_heads, head_dim = params["att"].shape
    hidden = n_heads * head_dim
    h = jnp.maximum(x @ params["w_enc"] + params["b_enc"], 0.0)
    for l in range(n_layers):
        g = h @ params["wlr"][l] + params["blr"][l]
        gl, gr = g[:, :hidden], g[:, hidden:]
        outs = []
        for hh in range(n_heads):
            lo, hi = hh * head_dim, (hh + 1) * head_dim
            gl_h, gr_h = gl[:, lo:hi], gr[:, lo:hi]
            s = gr_h[:, None, :] + gl_h[None, :, :]
            s = jnp.where(s > 0, s, NEG_SLOPE * s)
            e = jnp.sum(s * params["att"][l, hh][None, None, :], axis=-1)
            e = jnp.where(adj > 0, e, NEG_INF)
            p = jnp.exp(e - jnp.max(e, axis=1, keepdims=True))
            outs.append((p / jnp.sum(p, axis=1, keepdims=True)) @ gl_h)
        hc = jnp.concatenate(outs, axis=1) + params["b_conv"][l]
        mu = jnp.mean(hc, axis=-1, keepdims=True)
        ctr = hc - mu
        var = jnp.mean(ctr * ctr, axis=-1, keepdims=True)
        hn = ctr * jax.lax.rsqrt(var + LN_EPS) * params["gamma"][l] + params["beta"][l]
        h = jnp.where(hn > 0, hn, jnp.exp(hn) - 1.0)
    return h


# --------------------------- parameter init -----------------------------------
def _glorot(key, shape, gain=1.0):
    fan_in, fan_out = shape[-2], shape[-1]
    bound = gain * np.sqrt(6.0 / (fan_in + fan_out))
    return jax.random.uniform(key, shape, jnp.float32, -bound, bound)


def init_params(key, node_feats, n_layers, n_heads, head_dim):
    hidden = n_heads * head_dim
    ks = jax.random.split(key, 6)
    u = lambda k, shape, b: jax.random.uniform(k, shape, jnp.float32, -b, b)
    return {
        "w_enc": _glorot(ks[0], (node_feats, hidden)),
        "b_enc": u(ks[1], (1, hidden), 0.1),
        "wlr":   _glorot(ks[2], (n_layers, hidden, 2 * hidden)),   # [Wl | Wr]
        "blr":   u(ks[3], (n_layers, 1, 2 * hidden), 0.1),
        "att":   _glorot(ks[4], (n_layers, n_heads, head_dim)),
        "b_conv": u(ks[5], (n_layers, 1, hidden), 0.1),
        "gamma": jnp.ones((n_layers, 1, hidden), jnp.float32),
        "beta":  jnp.zeros((n_layers, 1, hidden), jnp.float32),
    }


if __name__ == "__main__":
    N = 16                 # nodes
    NODE_FEATS = 16
    N_LAYERS = 3
    N_HEADS = 4
    HIDDEN = 128           # lane-dense hidden width (multiple of 128)
    HEAD_DIM = HIDDEN // N_HEADS

    key = jax.random.PRNGKey(0)
    k_par, k_x, k_adj = jax.random.split(key, 3)
    params = init_params(k_par, NODE_FEATS, N_LAYERS, N_HEADS, HEAD_DIM)

    x = jax.random.normal(k_x, (N, NODE_FEATS), jnp.float32)
    # Dense 0/1 adjacency (adj[i, j] = 1 <=> edge j -> i) with self-loops,
    # mirroring GATv2Conv(add_self_loops=True) on an edge_index.
    adj = (jax.random.uniform(k_adj, (N, N)) > 0.6).astype(jnp.float32)
    adj = jnp.maximum(adj, jnp.eye(N, dtype=jnp.float32))

    out = stacked_gatv2_forward(x, adj, params)
    jax.block_until_ready(out)

    ref = reference_forward(x, adj, params)
    assert out.shape == (N, HIDDEN)
    assert bool(jnp.isfinite(out).all())
    np.testing.assert_allclose(np.asarray(out), np.asarray(ref), rtol=5e-2, atol=5e-2)
    print("KERNEL_OK")
</pallas_src>

<mosaic_0001>
module attributes {stable_mosaic.version = 11 : i64} {
  func.func @_stacked_gatv2_kernel(%arg0: i32, %arg1: memref<16x16xf32, #tpu.memory_space<vmem>>, %arg2: memref<16x128xf32, #tpu.memory_space<vmem>>, %arg3: memref<1x128xf32, #tpu.memory_space<vmem>>, %arg4: memref<16x16xf32, #tpu.memory_space<vmem>>, %arg5: memref<1x128x256xf32, #tpu.memory_space<vmem>>, %arg6: memref<1x1x256xf32, #tpu.memory_space<vmem>>, %arg7: memref<1x4x32xf32, #tpu.memory_space<vmem>>, %arg8: memref<1x1x128xf32, #tpu.memory_space<vmem>>, %arg9: memref<1x1x128xf32, #tpu.memory_space<vmem>>, %arg10: memref<1x1x128xf32, #tpu.memory_space<vmem>>, %arg11: memref<16x128xf32, #tpu.memory_space<vmem>>, %arg12: memref<16x128xf32, #tpu.memory_space<vmem>>) attributes {dimension_semantics = [#tpu.dimension_semantics<arbitrary>], iteration_bounds = array<i64: 3>, scalar_prefetch = 0 : i64, scratch_operands = 1 : i64, tpu.core_type = #tpu.core_type<tc>, window_params = [{pipeline_mode = #tpu.pipeline_mode<synchronous>, transform_indices = @transform_0, window_bounds = array<i64: 16, 16>}, {pipeline_mode = #tpu.pipeline_mode<synchronous>, transform_indices = @transform_1, window_bounds = array<i64: 16, 128>}, {pipeline_mode = #tpu.pipeline_mode<synchronous>, transform_indices = @transform_2, window_bounds = array<i64: 1, 128>}, {pipeline_mode = #tpu.pipeline_mode<synchronous>, transform_indices = @transform_3, window_bounds = array<i64: 16, 16>}, {transform_indices = @transform_4, window_bounds = array<i64: 1, 128, 256>}, {transform_indices = @transform_5, window_bounds = array<i64: 1, 1, 256>}, {transform_indices = @transform_6, window_bounds = array<i64: 1, 4, 32>}, {transform_indices = @transform_7, window_bounds = array<i64: 1, 1, 128>}, {transform_indices = @transform_8, window_bounds = array<i64: 1, 1, 128>}, {transform_indices = @transform_9, window_bounds = array<i64: 1, 1, 128>}, {pipeline_mode = #tpu.pipeline_mode<synchronous>, transform_indices = @transform_10, window_bounds = array<i64: 16, 128>}]} {
    %c0_i32 = arith.constant 0 : i32
    %0 = arith.cmpi eq, %arg0, %c0_i32 : i32
    %1 = arith.extui %0 : i1 to i32
    %c0_i32_0 = arith.constant 0 : i32
    %2 = arith.cmpi ne, %1, %c0_i32_0 : i32
    scf.if %2 {
      %c0_65 = arith.constant 0 : index
      %c0_66 = arith.constant 0 : index
      %181 = vector.load %arg1[%c0_65, %c0_66] : memref<16x16xf32, #tpu.memory_space<vmem>>, vector<16x16xf32>
      %c0_67 = arith.constant 0 : index
      %c0_68 = arith.constant 0 : index
      %182 = vector.load %arg2[%c0_67, %c0_68] : memref<16x128xf32, #tpu.memory_space<vmem>>, vector<16x128xf32>
      %cst_69 = arith.constant dense<0.000000e+00> : vector<16x128xf32>
      %183 = tpu.matmul %181, %182, %cst_69 {dimension_numbers = #tpu.dot_dimension_numbers<[1], [0], [0], [1], [0, 0, 1, 1], [], []>} : vector<16x16xf32>, vector<16x128xf32>, vector<16x128xf32> -> vector<16x128xf32>
      %c0_70 = arith.constant 0 : index
      %c0_71 = arith.constant 0 : index
      %184 = vector.load %arg3[%c0_70, %c0_71] : memref<1x128xf32, #tpu.memory_space<vmem>>, vector<1x128xf32>
      %185 = vector.broadcast %184 : vector<1x128xf32> to vector<16x128xf32>
      %186 = arith.addf %183, %185 : vector<16x128xf32>
      %cst_72 = arith.constant 0.000000e+00 : f32
      %187 = vector.broadcast %cst_72 : f32 to vector<16x128xf32>
      %188 = arith.maximumf %186, %187 : vector<16x128xf32>
      %c0_73 = arith.constant 0 : index
      %c0_74 = arith.constant 0 : index
      %189 = vector.load %arg12[%c0_73, %c0_74] : memref<16x128xf32, #tpu.memory_space<vmem>>, vector<16x128xf32>
      tpu.vector_store %arg12[%c0_73, %c0_74], %188 {strides = array<i32>} : memref<16x128xf32, #tpu.memory_space<vmem>>, vector<16x128xf32>,
    } else {
    }
    %c0 = arith.constant 0 : index
    %c0_1 = arith.constant 0 : index
    %3 = vector.load %arg12[%c0, %c0_1] : memref<16x128xf32, #tpu.memory_space<vmem>>, vector<16x128xf32>
    %c0_2 = arith.constant 0 : index
    %c0_3 = arith.constant 0 : index
    %4 = vector.load %arg4[%c0_2, %c0_3] : memref<16x16xf32, #tpu.memory_space<vmem>>, vector<16x16xf32>
    %c0_4 = arith.constant 0 : index
    %c0_5 = arith.constant 0 : index
    %c0_6 = arith.constant 0 : index
    %5 = vector.load %arg5[%c0_4, %c0_5, %c0_6] : memref<1x128x256xf32, #tpu.memory_space<vmem>>, vector<1x128x256xf32>
    %6 = vector.shape_cast %5 : vector<1x128x256xf32> to vector<128x256xf32>
    %cst = arith.constant dense<0.000000e+00> : vector<16x256xf32>
    %7 = tpu.matmul %3, %6, %cst {dimension_numbers = #tpu.dot_dimension_numbers<[1], [0], [0], [1], [0, 0, 1, 1], [], []>} : vector<16x128xf32>, vector<128x256xf32>, vector<16x256xf32> -> vector<16x256xf32>
    %c0_7 = arith.constant 0 : index
    %c0_8 = arith.constant 0 : index
    %c0_9 = arith.constant 0 : index
    %8 = vector.load %arg6[%c0_7, %c0_8, %c0_9] : memref<1x1x256xf32, #tpu.memory_space<vmem>>, vector<1x1x256xf32>
    %9 = vector.shape_cast %8 : vector<1x1x256xf32> to vector<1x256xf32>
    %10 = vector.broadcast %9 : vector<1x256xf32> to vector<16x256xf32>
    %11 = arith.addf %7, %10 : vector<16x256xf32>
    %12 = vector.extract_strided_slice %11 {offsets = [0, 0], sizes = [16, 128], strides = [1, 1]} : vector<16x256xf32> to vector<16x128xf32>
    %13 = vector.extract_strided_slice %11 {offsets = [0, 128], sizes = [16, 128], strides = [1, 1]} : vector<16x256xf32> to vector<16x128xf32>
    %c0_10 = arith.constant 0 : index
    %c0_11 = arith.constant 0 : index
    %c0_12 = arith.constant 0 : index
    %14 = vector.load %arg7[%c0_10, %c0_11, %c0_12] : memref<1x4x32xf32, #tpu.memory_space<vmem>>, vector<1x4x32xf32>
    %15 = vector.shape_cast %14 : vector<1x4x32xf32> to vector<4x32xf32>
    %16 = vector.extract_strided_slice %12 {offsets = [0, 0], sizes = [16, 32], strides = [1, 1]} : vector<16x128xf32> to vector<16x32xf32>
    %17 = vector.extract_strided_slice %13 {offsets = [0, 0], sizes = [16, 32], strides = [1, 1]} : vector<16x128xf32> to vector<16x32xf32>
    %18 = vector.shape_cast %17 : vector<16x32xf32> to vector<16x1x32xf32>
    %19 = vector.shape_cast %16 : vector<16x32xf32> to vector<1x16x32xf32>
    %20 = vector.broadcast %18 : vector<16x1x32xf32> to vector<16x16x32xf32>
    %21 = vector.broadcast %19 : vector<1x16x32xf32> to vector<16x16x32xf32>
    %22 = arith.addf %20, %21 : vector<16x16x32xf32>
    %cst_13 = arith.constant 0.000000e+00 : f32
    %23 = vector.broadcast %cst_13 : f32 to vector<16x16x32xf32>
    %24 = arith.cmpf ogt, %22, %23 : vector<16x16x32xf32>
    %cst_14 = arith.constant 2.000000e-01 : f32
    %25 = vector.broadcast %cst_14 : f32 to vector<16x16x32xf32>
    %26 = arith.mulf %25, %22 : vector<16x16x32xf32>
    %27 = arith.select %24, %22, %26 : vector<16x16x32xi1>, vector<16x16x32xf32>
    %28 = vector.extract_strided_slice %15 {offsets = [0, 0], sizes = [1, 32], strides = [1, 1]} : vector<4x32xf32> to vector<1x32xf32>
    %29 = vector.shape_cast %28 : vector<1x32xf32> to vector<1x1x32xf32>
    %30 = vector.broadcast %29 : vector<1x1x32xf32> to vector<16x16x32xf32>
    %31 = arith.mulf %27, %30 : vector<16x16x32xf32>
    %cst_15 = arith.constant dense<0.000000e+00> : vector<16x16xf32>
    %32 = vector.multi_reduction <add>, %31, %cst_15 [2] : vector<16x16x32xf32> to vector<16x16xf32>
    %cst_16 = arith.constant 0.000000e+00 : f32
    %33 = vector.broadcast %cst_16 : f32 to vector<16x16xf32>
    %34 = arith.cmpf ogt, %4, %33 : vector<16x16xf32>
    %cst_17 = arith.constant -1.000000e+30 : f32
    %35 = vector.broadcast %cst_17 : f32 to vector<16x16xf32>
    %36 = arith.select %34, %32, %35 : vector<16x16xi1>, vector<16x16xf32>
    %cst_18 = arith.constant dense<0xFF800000> : vector<16xf32>
    %37 = vector.multi_reduction <maximumf>, %36, %cst_18 [1] : vector<16x16xf32> to vector<16xf32>
    %38 = vector.shape_cast %37 : vector<16xf32> to vector<16x1xf32>
    %39 = vector.broadcast %38 : vector<16x1xf32> to vector<16x16xf32>
    %40 = arith.subf %36, %39 : vector<16x16xf32>
    %41 = math.exp %40 : vector<16x16xf32>
    %cst_19 = arith.constant dense<0.000000e+00> : vector<16xf32>
    %42 = vector.multi_reduction <add>, %41, %cst_19 [1] : vector<16x16xf32> to vector<16xf32>
    %43 = vector.shape_cast %42 : vector<16xf32> to vector<16x1xf32>
    %44 = tpu.reciprocal %43 {approx = true} : vector<16x1xf32> -> vector<16x1xf32>
    %45 = vector.broadcast %44 : vector<16x1xf32> to vector<16x16xf32>
    %46 = arith.mulf %41, %45 : vector<16x16xf32>
    %cst_20 = arith.constant dense<0.000000e+00> : vector<16x32xf32>
    %47 = tpu.matmul %46, %16, %cst_20 {dimension_numbers = #tpu.dot_dimension_numbers<[1], [0], [0], [1], [0, 0, 1, 1], [], []>} : vector<16x16xf32>, vector<16x32xf32>, vector<16x32xf32> -> vector<16x32xf32>
    %48 = vector.extract_strided_slice %12 {offsets = [0, 32], sizes = [16, 32], strides = [1, 1]} : vector<16x128xf32> to vector<16x32xf32>
    %49 = vector.extract_strided_slice %13 {offsets = [0, 32], sizes = [16, 32], strides = [1, 1]} : vector<16x128xf32> to vector<16x32xf32>
    %50 = vector.shape_cast %49 : vector<16x32xf32> to vector<16x1x32xf32>
    %51 = vector.shape_cast %48 : vector<16x32xf32> to vector<1x16x32xf32>
    %52 = vector.broadcast %50 : vector<16x1x32xf32> to vector<16x16x32xf32>
    %53 = vector.broadcast %51 : vector<1x16x32xf32> to vector<16x16x32xf32>
    %54 = arith.addf %52, %53 : vector<16x16x32xf32>
    %cst_21 = arith.constant 0.000000e+00 : f32
    %55 = vector.broadcast %cst_21 : f32 to vector<16x16x32xf32>
    %56 = arith.cmpf ogt, %54, %55 : vector<16x16x32xf32>
    %cst_22 = arith.constant 2.000000e-01 : f32
    %57 = vector.broadcast %cst_22 : f32 to vector<16x16x32xf32>
    %58 = arith.mulf %57, %54 : vector<16x16x32xf32>
    %59 = arith.select %56, %54, %58 : vector<16x16x32xi1>, vector<16x16x32xf32>
    %60 = vector.extract_strided_slice %15 {offsets = [1, 0], sizes = [1, 32], strides = [1, 1]} : vector<4x32xf32> to vector<1x32xf32>
    %61 = vector.shape_cast %60 : vector<1x32xf32> to vector<1x1x32xf32>
    %62 = vector.broadcast %61 : vector<1x1x32xf32> to vector<16x16x32xf32>
    %63 = arith.mulf %59, %62 : vector<16x16x32xf32>
    %cst_23 = arith.constant dense<0.000000e+00> : vector<16x16xf32>
    %64 = vector.multi_reduction <add>, %63, %cst_23 [2] : vector<16x16x32xf32> to vector<16x16xf32>
    %cst_24 = arith.constant 0.000000e+00 : f32
    %65 = vector.broadcast %cst_24 : f32 to vector<16x16xf32>
    %66 = arith.cmpf ogt, %4, %65 : vector<16x16xf32>
    %cst_25 = arith.constant -1.000000e+30 : f32
    %67 = vector.broadcast %cst_25 : f32 to vector<16x16xf32>
    %68 = arith.select %66, %64, %67 : vector<16x16xi1>, vector<16x16xf32>
    %cst_26 = arith.constant dense<0xFF800000> : vector<16xf32>
    %69 = vector.multi_reduction <maximumf>, %68, %cst_26 [1] : vector<16x16xf32> to vector<16xf32>
    %70 = vector.shape_cast %69 : vector<16xf32> to vector<16x1xf32>
    %71 = vector.broadcast %70 : vector<16x1xf32> to vector<16x16xf32>
    %72 = arith.subf %68, %71 : vector<16x16xf32>
    %73 = math.exp %72 : vector<16x16xf32>
    %cst_27 = arith.constant dense<0.000000e+00> : vector<16xf32>
    %74 = vector.multi_reduction <add>, %73, %cst_27 [1] : vector<16x16xf32> to vector<16xf32>
    %75 = vector.shape_cast %74 : vector<16xf32> to vector<16x1xf32>
    %76 = tpu.reciprocal %75 {approx = true} : vector<16x1xf32> -> vector<16x1xf32>
    %77 = vector.broadcast %76 : vector<16x1xf32> to vector<16x16xf32>
    %78 = arith.mulf %73, %77 : vector<16x16xf32>
    %cst_28 = arith.constant dense<0.000000e+00> : vector<16x32xf32>
    %79 = tpu.matmul %78, %48, %cst_28 {dimension_numbers = #tpu.dot_dimension_numbers<[1], [0], [0], [1], [0, 0, 1, 1], [], []>} : vector<16x16xf32>, vector<16x32xf32>, vector<16x32xf32> -> vector<16x32xf32>
    %80 = vector.extract_strided_slice %12 {offsets = [0, 64], sizes = [16, 32], strides = [1, 1]} : vector<16x128xf32> to vector<16x32xf32>
    %81 = vector.extract_strided_slice %13 {offsets = [0, 64], sizes = [16, 32], strides = [1, 1]} : vector<16x128xf32> to vector<16x32xf32>
    %82 = vector.shape_cast %81 : vector<16x32xf32> to vector<16x1x32xf32>
    %83 = vector.shape_cast %80 : vector<16x32xf32> to vector<1x16x32xf32>
    %84 = vector.broadcast %82 : vector<16x1x32xf32> to vector<16x16x32xf32>
    %85 = vector.broadcast %83 : vector<1x16x32xf32> to vector<16x16x32xf32>
    %86 = arith.addf %84, %85 : vector<16x16x32xf32>
    %cst_29 = arith.constant 0.000000e+00 : f32
    %87 = vector.broadcast %cst_29 : f32 to vector<16x16x32xf32>
    %88 = arith.cmpf ogt, %86, %87 : vector<16x16x32xf32>
    %cst_30 = arith.constant 2.000000e-01 : f32
    %89 = vector.broadcast %cst_30 : f32 to vector<16x16x32xf32>
    %90 = arith.mulf %89, %86 : vector<16x16x32xf32>
    %91 = arith.select %88, %86, %90 : vector<16x16x32xi1>, vector<16x16x32xf32>
    %92 = vector.extract_strided_slice %15 {offsets = [2, 0], sizes = [1, 32], strides = [1, 1]} : vector<4x32xf32> to vector<1x32xf32>
    %93 = vector.shape_cast %92 : vector<1x32xf32> to vector<1x1x32xf32>
    %94 = vector.broadcast %93 : vector<1x1x32xf32> to vector<16x16x32xf32>
    %95 = arith.mulf %91, %94 : vector<16x16x32xf32>
    %cst_31 = arith.constant dense<0.000000e+00> : vector<16x16xf32>
    %96 = vector.multi_reduction <add>, %95, %cst_31 [2] : vector<16x16x32xf32> to vector<16x16xf32>
    %cst_32 = arith.constant 0.000000e+00 : f32
    %97 = vector.broadcast %cst_32 : f32 to vector<16x16xf32>
    %98 = arith.cmpf ogt, %4, %97 : vector<16x16xf32>
    %cst_33 = arith.constant -1.000000e+30 : f32
    %99 = vector.broadcast %cst_33 : f32 to vector<16x16xf32>
    %100 = arith.select %98, %96, %99 : vector<16x16xi1>, vector<16x16xf32>
    %cst_34 = arith.constant dense<0xFF800000> : vector<16xf32>
    %101 = vector.multi_reduction <maximumf>, %100, %cst_34 [1] : vector<16x16xf32> to vector<16xf32>
    %102 = vector.shape_cast %101 : vector<16xf32> to vector<16x1xf32>
    %103 = vector.broadcast %102 : vector<16x1xf32> to vector<16x16xf32>
    %104 = arith.subf %100, %103 : vector<16x16xf32>
    %105 = math.exp %104 : vector<16x16xf32>
    %cst_35 = arith.constant dense<0.000000e+00> : vector<16xf32>
    %106 = vector.multi_reduction <add>, %105, %cst_35 [1] : vector<16x16xf32> to vector<16xf32>
    %107 = vector.shape_cast %106 : vector<16xf32> to vector<16x1xf32>
    %108 = tpu.reciprocal %107 {approx = true} : vector<16x1xf32> -> vector<16x1xf32>
    %109 = vector.broadcast %108 : vector<16x1xf32> to vector<16x16xf32>
    %110 = arith.mulf %105, %109 : vector<16x16xf32>
    %cst_36 = arith.constant dense<0.000000e+00> : vector<16x32xf32>
    %111 = tpu.matmul %110, %80, %cst_36 {dimension_numbers = #tpu.dot_dimension_numbers<[1], [0], [0], [1], [0, 0, 1, 1], [], []>} : vector<16x16xf32>, vector<16x32xf32>, vector<16x32xf32> -> vector<16x32xf32>
    %112 = vector.extract_strided_slice %12 {offsets = [0, 96], sizes = [16, 32], strides = [1, 1]} : vector<16x128xf32> to vector<16x32xf32>
    %113 = vector.extract_strided_slice %13 {offsets = [0, 96], sizes = [16, 32], strides = [1, 1]} : vector<16x128xf32> to vector<16x32xf32>
    %114 = vector.shape_cast %113 : vector<16x32xf32> to vector<16x1x32xf32>
    %115 = vector.shape_cast %112 : vector<16x32xf32> to vector<1x16x32xf32>
    %116 = vector.broadcast %114 : vector<16x1x32xf32> to vector<16x16x32xf32>
    %117 = vector.broadcast %115 : vector<1x16x32xf32> to vector<16x16x32xf32>
    %118 = arith.addf %116, %117 : vector<16x16x32xf32>
    %cst_37 = arith.constant 0.000000e+00 : f32
    %119 = vector.broadcast %cst_37 : f32 to vector<16x16x32xf32>
    %120 = arith.cmpf ogt, %118, %119 : vector<16x16x32xf32>
    %cst_38 = arith.constant 2.000000e-01 : f32
    %121 = vector.broadcast %cst_38 : f32 to vector<16x16x32xf32>
    %122 = arith.mulf %121, %118 : vector<16x16x32xf32>
    %123 = arith.select %120, %118, %122 : vector<16x16x32xi1>, vector<16x16x32xf32>
    %124 = vector.extract_strided_slice %15 {offsets = [3, 0], sizes = [1, 32], strides = [1, 1]} : vector<4x32xf32> to vector<1x32xf32>
    %125 = vector.shape_cast %124 : vector<1x32xf32> to vector<1x1x32xf32>
    %126 = vector.broadcast %125 : vector<1x1x32xf32> to vector<16x16x32xf32>
    %127 = arith.mulf %123, %126 : vector<16x16x32xf32>
    %cst_39 = arith.constant dense<0.000000e+00> : vector<16x16xf32>
    %128 = vector.multi_reduction <add>, %127, %cst_39 [2] : vector<16x16x32xf32> to vector<16x16xf32>
    %cst_40 = arith.constant 0.000000e+00 : f32
    %129 = vector.broadcast %cst_40 : f32 to vector<16x16xf32>
    %130 = arith.cmpf ogt, %4, %129 : vector<16x16xf32>
    %cst_41 = arith.constant -1.000000e+30 : f32
    %131 = vector.broadcast %cst_41 : f32 to vector<16x16xf32>
    %132 = arith.select %130, %128, %131 : vector<16x16xi1>, vector<16x16xf32>
    %cst_42 = arith.constant dense<0xFF800000> : vector<16xf32>
    %133 = vector.multi_reduction <maximumf>, %132, %cst_42 [1] : vector<16x16xf32> to vector<16xf32>
    %134 = vector.shape_cast %133 : vector<16xf32> to vector<16x1xf32>
    %135 = vector.broadcast %134 : vector<16x1xf32> to vector<16x16xf32>
    %136 = arith.subf %132, %135 : vector<16x16xf32>
    %137 = math.exp %136 : vector<16x16xf32>
    %cst_43 = arith.constant dense<0.000000e+00> : vector<16xf32>
    %138 = vector.multi_reduction <add>, %137, %cst_43 [1] : vector<16x16xf32> to vector<16xf32>
    %139 = vector.shape_cast %138 : vector<16xf32> to vector<16x1xf32>
    %140 = tpu.reciprocal %139 {approx = true} : vector<16x1xf32> -> vector<16x1xf32>
    %141 = vector.broadcast %140 : vector<16x1xf32> to vector<16x16xf32>
    %142 = arith.mulf %137, %141 : vector<16x16xf32>
    %cst_44 = arith.constant dense<0.000000e+00> : vector<16x32xf32>
    %143 = tpu.matmul %142, %112, %cst_44 {dimension_numbers = #tpu.dot_dimension_numbers<[1], [0], [0], [1], [0, 0, 1, 1], [], []>} : vector<16x16xf32>, vector<16x32xf32>, vector<16x32xf32> -> vector<16x32xf32>
    %144 = tpu.concatenate %47, %79, %111, %143 in 1 : vector<16x32xf32>, vector<16x32xf32>, vector<16x32xf32>, vector<16x32xf32> -> vector<16x128xf32>
    %c0_45 = arith.constant 0 : index
    %c0_46 = arith.constant 0 : index
    %c0_47 = arith.constant 0 : index
    %145 = vector.load %arg8[%c0_45, %c0_46, %c0_47] : memref<1x1x128xf32, #tpu.memory_space<vmem>>, vector<1x1x128xf32>
    %146 = vector.shape_cast %145 : vector<1x1x128xf32> to vector<1x128xf32>
    %147 = vector.broadcast %146 : vector<1x128xf32> to vector<16x128xf32>
    %148 = arith.addf %144, %147 : vector<16x128xf32>
    %cst_48 = arith.constant dense<0.000000e+00> : vector<16xf32>
    %149 = vector.multi_reduction <add>, %148, %cst_48 [1] : vector<16x128xf32> to vector<16xf32>
    %150 = vector.shape_cast %149 : vector<16xf32> to vector<16x1xf32>
    %cst_49 = arith.constant 1.280000e+02 : f32
    %151 = vector.broadcast %cst_49 : f32 to vector<16x1xf32>
    %152 = arith.divf %150, %151 : vector<16x1xf32>
    %153 = vector.broadcast %152 : vector<16x1xf32> to vector<16x128xf32>
    %154 = arith.subf %148, %153 : vector<16x128xf32>
    %155 = arith.mulf %154, %154 : vector<16x128xf32>
    %cst_50 = arith.constant dense<0.000000e+00> : vector<16xf32>
    %156 = vector.multi_reduction <add>, %155, %cst_50 [1] : vector<16x128xf32> to vector<16xf32>
    %157 = vector.shape_cast %156 : vector<16xf32> to vector<16x1xf32>
    %cst_51 = arith.constant 1.280000e+02 : f32
    %158 = vector.broadcast %cst_51 : f32 to vector<16x1xf32>
    %159 = arith.divf %157, %158 : vector<16x1xf32>
    %cst_52 = arith.constant 9.99999974E-6 : f32
    %160 = vector.broadcast %cst_52 : f32 to vector<16x1xf32>
    %161 = arith.addf %159, %160 : vector<16x1xf32>
    %162 = math.rsqrt %161 : vector<16x1xf32>
    %163 = vector.broadcast %162 : vector<16x1xf32> to vector<16x128xf32>
    %164 = arith.mulf %154, %163 : vector<16x128xf32>
    %c0_53 = arith.constant 0 : index
    %c0_54 = arith.constant 0 : index
    %c0_55 = arith.constant 0 : index
    %165 = vector.load %arg9[%c0_53, %c0_54, %c0_55] : memref<1x1x128xf32, #tpu.memory_space<vmem>>, vector<1x1x128xf32>
    %166 = vector.shape_cast %165 : vector<1x1x128xf32> to vector<1x128xf32>
    %167 = vector.broadcast %166 : vector<1x128xf32> to vector<16x128xf32>
    %168 = arith.mulf %164, %167 : vector<16x128xf32>
    %c0_56 = arith.constant 0 : index
    %c0_57 = arith.constant 0 : index
    %c0_58 = arith.constant 0 : index
    %169 = vector.load %arg10[%c0_56, %c0_57, %c0_58] : memref<1x1x128xf32, #tpu.memory_space<vmem>>, vector<1x1x128xf32>
    %170 = vector.shape_cast %169 : vector<1x1x128xf32> to vector<1x128xf32>
    %171 = vector.broadcast %170 : vector<1x128xf32> to vector<16x128xf32>
    %172 = arith.addf %168, %171 : vector<16x128xf32>
    %cst_59 = arith.constant 0.000000e+00 : f32
    %173 = vector.broadcast %cst_59 : f32 to vector<16x128xf32>
    %174 = arith.cmpf ogt, %172, %173 : vector<16x128xf32>
    %175 = math.exp %172 : vector<16x128xf32>
    %cst_60 = arith.constant 1.000000e+00 : f32
    %176 = vector.broadcast %cst_60 : f32 to vector<16x128xf32>
    %177 = arith.subf %175, %176 : vector<16x128xf32>
    %178 = arith.select %174, %172, %177 : vector<16x128xi1>, vector<16x128xf32>
    %c0_61 = arith.constant 0 : index
    %c0_62 = arith.constant 0 : index
    %179 = vector.load %arg12[%c0_61, %c0_62] : memref<16x128xf32, #tpu.memory_space<vmem>>, vector<16x128xf32>
    tpu.vector_store %arg12[%c0_61, %c0_62], %178 {strides = array<i32>} : memref<16x128xf32, #tpu.memory_space<vmem>>, vector<16x128xf32>,
    %c0_63 = arith.constant 0 : index
    %c0_64 = arith.constant 0 : index
    %180 = vector.load %arg11[%c0_63, %c0_64] : memref<16x128xf32, #tpu.memory_space<vmem>>, vector<16x128xf32>
    tpu.vector_store %arg11[%c0_63, %c0_64], %178 {strides = array<i32>} : memref<16x128xf32, #tpu.memory_space<vmem>>, vector<16x128xf32>,
    return
  }
  func.func @transform_0(%arg0: i32) -> (i32, i32) {
    %c0_i32 = arith.constant 0 : i32
    %c0_i32_0 = arith.constant 0 : i32
    %c0_i32_1 = arith.constant 0 : i32
    return %c0_i32, %c0_i32_0 : i32, i32
  }
  func.func @transform_1(%arg0: i32) -> (i32, i32) {
    %c0_i32 = arith.constant 0 : i32
    %c0_i32_0 = arith.constant 0 : i32
    %c0_i32_1 = arith.constant 0 : i32
    return %c0_i32, %c0_i32_0 : i32, i32
  }
  func.func @transform_2(%arg0: i32) -> (i32, i32) {
    %c0_i32 = arith.constant 0 : i32
    %c0_i32_0 = arith.constant 0 : i32
    %c0_i32_1 = arith.constant 0 : i32
    return %c0_i32, %c0_i32_0 : i32, i32
  }
  func.func @transform_3(%arg0: i32) -> (i32, i32) {
    %c0_i32 = arith.constant 0 : i32
    %c0_i32_0 = arith.constant 0 : i32
    %c0_i32_1 = arith.constant 0 : i32
    return %c0_i32, %c0_i32_0 : i32, i32
  }
  func.func @transform_4(%arg0: i32) -> (i32, i32, i32) {
    %c0_i32 = arith.constant 0 : i32
    %c0_i32_0 = arith.constant 0 : i32
    %c0_i32_1 = arith.constant 0 : i32
    return %arg0, %c0_i32, %c0_i32_0 : i32, i32, i32
  }
  func.func @transform_5(%arg0: i32) -> (i32, i32, i32) {
    %c0_i32 = arith.constant 0 : i32
    %c0_i32_0 = arith.constant 0 : i32
    %c0_i32_1 = arith.constant 0 : i32
    return %arg0, %c0_i32, %c0_i32_0 : i32, i32, i32
  }
  func.func @transform_6(%arg0: i32) -> (i32, i32, i32) {
    %c0_i32 = arith.constant 0 : i32
    %c0_i32_0 = arith.constant 0 : i32
    %c0_i32_1 = arith.constant 0 : i32
    return %arg0, %c0_i32, %c0_i32_0 : i32, i32, i32
  }
  func.func @transform_7(%arg0: i32) -> (i32, i32, i32) {
    %c0_i32 = arith.constant 0 : i32
    %c0_i32_0 = arith.constant 0 : i32
    %c0_i32_1 = arith.constant 0 : i32
    return %arg0, %c0_i32, %c0_i32_0 : i32, i32, i32
  }
  func.func @transform_8(%arg0: i32) -> (i32, i32, i32) {
    %c0_i32 = arith.constant 0 : i32
    %c0_i32_0 = arith.constant 0 : i32
    %c0_i32_1 = arith.constant 0 : i32
    return %arg0, %c0_i32, %c0_i32_0 : i32, i32, i32
  }
  func.func @transform_9(%arg0: i32) -> (i32, i32, i32) {
    %c0_i32 = arith.constant 0 : i32
    %c0_i32_0 = arith.constant 0 : i32
    %c0_i32_1 = arith.constant 0 : i32
    return %arg0, %c0_i32, %c0_i32_0 : i32, i32, i32
  }
  func.func @transform_10(%arg0: i32) -> (i32, i32) {
    %c0_i32 = arith.constant 0 : i32
    %c0_i32_0 = arith.constant 0 : i32
    %c0_i32_1 = arith.constant 0 : i32
    return %c0_i32, %c0_i32_0 : i32, i32
  }
}

</mosaic_0001>

<llo_original>
// kernel: tpu_custom_call.1
$region0: #{tpu_custom_call.1}
  #allocation0 [shape = 'u32[]', space=smem, size = 0x4, offset = 0x4, fixed_abs, tag = 'smem constant byte address 0x4 - core index']
  #allocation1 [shape = 'u32[144,128]{1,0:T(1,128)}', space=vmem, size = 0x12000, scoped, tag = 'internal scratch']
  #allocation2 [shape = 'f32[16,128]{1,0:T(8,128)}', space=vmem, size = 0x2000, scoped, tag = 'scratch operand']
  %s0 = inlined_call_operand.hbm [shape: f32[16,16], index: 0, kind: input, shape index: {}]
  %s1 = inlined_call_operand.hbm [shape: f32[16,128], index: 1, kind: input, shape index: {}]
  %s2 = inlined_call_operand.hbm [shape: f32[1,128], index: 2, kind: input, shape index: {}]
  %s3 = inlined_call_operand.hbm [shape: f32[16,16], index: 3, kind: input, shape index: {}]
  %s4 = inlined_call_operand.hbm [shape: f32[3,128,256], index: 4, kind: input, shape index: {}]
  %s5 = inlined_call_operand.vmem [shape: f32[3,1,256], index: 5, kind: input, shape index: {}]
  %s6 = inlined_call_operand.hbm [shape: f32[3,4,32], index: 6, kind: input, shape index: {}]
  %s7 = inlined_call_operand.vmem [shape: f32[3,1,128], index: 7, kind: input, shape index: {}]
  %s8 = inlined_call_operand.vmem [shape: f32[3,1,128], index: 8, kind: input, shape index: {}]
  %s9 = inlined_call_operand.vmem [shape: f32[3,1,128], index: 9, kind: input, shape index: {}]
  %s10 = inlined_call_operand.hbm [shape: f32[16,128], index: 10, kind: output, shape index: {}]
  %s11 = sld [smem:[#allocation0]]
  $region101: #{tpu_custom_call.1} parent=0
    _
  %s13 = ssub.s32 1, %s11
  %s14 = scalar_select 0, %s13, %s11
  $region1: #{tpu_custom_call.1} parent=0
    #allocation3 [shape = 'u8[8192]{0}', space=vmem, size = 0x2000, scoped, tag = 'input window, operand 0, single buffered']
    #allocation4 [shape = 's32[2]{0}', space=sflag, size = 0x8, scoped, tag = 'scoped memory for tpu_custom_call.1']
    #allocation5 [shape = 's32[2]{0}', space=sflag, size = 0x8, scoped, tag = 'scoped memory for tpu_custom_call.1']
    #allocation6 [shape = 'u8[8192]{0}', space=vmem, size = 0x2000, scoped, tag = 'input window, operand 1, single buffered']
    #allocation7 [shape = 's32[1]{0}', space=sflag, size = 0x4, scoped, tag = 'scoped memory for tpu_custom_call.1']
    #allocation8 [shape = 'u8[512]{0}', space=vmem, size = 0x400, scoped, tag = 'input window, operand 2, single buffered']
    #allocation9 [shape = 'u8[8192]{0}', space=vmem, size = 0x2000, scoped, tag = 'input window, operand 3, single buffered']
    #allocation10 [shape = 's32[1]{0}', space=sflag, size = 0x4, scoped, tag = 'scoped memory for tpu_custom_call.1']
    #allocation11 [shape = 'u8[262144]{0}', space=vmem, size = 0x40000, scoped, tag = 'input window, operand 4']
    #allocation12 [shape = 'u8[4096]{0}', space=vmem, size = 0x1000, scoped, tag = 'input window, operand 6']
    #allocation13 [shape = 'u8[8192]{0}', space=vmem, size = 0x2000, scoped, tag = 'output window, operand 0, single buffered']
    %15 = vsyncpa [#allocation4], 0
    %16 = vsyncpa [#allocation7], 0
    %17 = vsyncpa [#allocation10], 0
    %18 = vsyncpa [#allocation5], 0
    loop: start=0, step=1, limit=5
    $region2: #{tpu_custom_call.1} parent=1 // loop_pre_header
      _
    $region3: #{tpu_custom_call.1} parent=1 // loop_header
      %s20 = sphi 0, %s24
      %p21 = scmp.ge.s32.totalorder %s20, 5
      %s28 = sphi 0, %s28
      %s30 = sphi 0, %s28
      %s31 = sphi 0, %s30
      %s45 = sphi 0, %s31
      %s49 = sphi 0, %s49
      %s51 = sphi 0, %s49
      %s52 = sphi 0, %s51
      %s66 = sphi 0, %s52
      %s70 = sphi 0, %s70
      %s72 = sphi 0, %s70
      %s73 = sphi 0, %s72
      %s87 = sphi 0, %s73
      %s91 = sphi 0, %s91
      %s93 = sphi 0, %s91
      %s94 = sphi 0, %s93
      %s108 = sphi 0, %s94
      %s114 = sphi 0, %s116
      %s117 = sphi 0, %s114
      %s118 = sphi 0, %s117
      %s134 = sphi 0, %s118
      %s140 = sphi 0, %s142
      %s143 = sphi 0, %s140
      %s144 = sphi 0, %s143
      %s160 = sphi 0, %s144
      %s166 = sphi 0, %s168
      %s169 = sphi 0, %s166
      %s170 = sphi 0, %s169
      %s186 = sphi 0, %s170
      %s192 = sphi 0, %s194
      %s195 = sphi 0, %s192
      %s196 = sphi 0, %s195
      %s212 = sphi 0, %s196
      %s218 = sphi 0, %s220
      %s221 = sphi 0, %s218
      %s222 = sphi 0, %s221
      %s238 = sphi 0, %s222
      %s244 = sphi 0, %s246
      %s247 = sphi 0, %s244
      %s248 = sphi 0, %s247
      %s264 = sphi 0, %s248
      %s268 = sphi 0, %s268
      %s270 = sphi 0, %s268
      %s271 = sphi 0, %s270
      %s285 = sphi 0, %s271
    $region4: #{tpu_custom_call.1} parent=1 // loop_header_branch
      %23 = sbr.rel (%p21) target = $region8
    $region5: #{tpu_custom_call.1} parent=1 // loop_body
      %s25 = ssub.s32 %s20, 1
      %s26 = ssub.s32 %s20, 2
      %s27 = sadd.s32 %s20, 1
      %s29 = sadd.s32 %s28, 1
      %p32 = scmp.eq.s32.totalorder %s20, 2
      %p33 = scmp.ne.s32.totalorder %s28, %s30
      %p34 = scmp.eq.s32.totalorder %s20, 0
      %p35 = por %p33, %p34
      %p36 = scmp.ne.s32.totalorder %s28, %s30
      %p37 = scmp.eq.s32.totalorder %s25, 2
      %p38 = por %p36, %p37
      %p39 = scmp.ne.s32.totalorder %s30, %s31
      %p40 = scmp.eq.s32.totalorder %s25, 0
      %p41 = por %p39, %p40
      %p42 = scmp.ne.s32.totalorder %s30, %s31
      %p43 = scmp.eq.s32.totalorder %s26, 2
      %p44 = por %p42, %p43
      %p46 = scmp.ne.s32.totalorder %s31, %s45
      %p47 = scmp.eq.s32.totalorder %s26, 0
      %p48 = por %p46, %p47
      %s50 = sadd.s32 %s49, 1
      %p53 = scmp.eq.s32.totalorder %s20, 2
      %p54 = scmp.ne.s32.totalorder %s49, %s51
      %p55 = scmp.eq.s32.totalorder %s20, 0
      %p56 = por %p54, %p55
      %p57 = scmp.ne.s32.totalorder %s49, %s51
      %p58 = scmp.eq.s32.totalorder %s25, 2
      %p59 = por %p57, %p58
      %p60 = scmp.ne.s32.totalorder %s51, %s52
      %p61 = scmp.eq.s32.totalorder %s25, 0
      %p62 = por %p60, %p61
      %p63 = scmp.ne.s32.totalorder %s51, %s52
      %p64 = scmp.eq.s32.totalorder %s26, 2
      %p65 = por %p63, %p64
      %p67 = scmp.ne.s32.totalorder %s52, %s66
      %p68 = scmp.eq.s32.totalorder %s26, 0
      %p69 = por %p67, %p68
      %s71 = sadd.s32 %s70, 1
      %p74 = scmp.eq.s32.totalorder %s20, 2
      %p75 = scmp.ne.s32.totalorder %s70, %s72
      %p76 = scmp.eq.s32.totalorder %s20, 0
      %p77 = por %p75, %p76
      %p78 = scmp.ne.s32.totalorder %s70, %s72
      %p79 = scmp.eq.s32.totalorder %s25, 2
      %p80 = por %p78, %p79
      %p81 = scmp.ne.s32.totalorder %s72, %s73
      %p82 = scmp.eq.s32.totalorder %s25, 0
      %p83 = por %p81, %p82
      %p84 = scmp.ne.s32.totalorder %s72, %s73
      %p85 = scmp.eq.s32.totalorder %s26, 2
      %p86 = por %p84, %p85
      %p88 = scmp.ne.s32.totalorder %s73, %s87
      %p89 = scmp.eq.s32.totalorder %s26, 0
      %p90 = por %p88, %p89
      %s92 = sadd.s32 %s91, 1
      %p95 = scmp.eq.s32.totalorder %s20, 2
      %p96 = scmp.ne.s32.totalorder %s91, %s93
      %p97 = scmp.eq.s32.totalorder %s20, 0
      %p98 = por %p96, %p97
      %p99 = scmp.ne.s32.totalorder %s91, %s93
      %p100 = scmp.eq.s32.totalorder %s25, 2
      %p101 = por %p99, %p100
      %p102 = scmp.ne.s32.totalorder %s93, %s94
      %p103 = scmp.eq.s32.totalorder %s25, 0
      %p104 = por %p102, %p103
      %p105 = scmp.ne.s32.totalorder %s93, %s94
      %p106 = scmp.eq.s32.totalorder %s26, 2
      %p107 = por %p105, %p106
      %p109 = scmp.ne.s32.totalorder %s94, %s108
      %p110 = scmp.eq.s32.totalorder %s26, 0
      %p111 = por %p109, %p110
      %s112 = ssub.s32 %s20, %s27
      %p113 = scmp.eq.s32.totalorder %s112, 0
      %s115 = sadd.s32 %s114, 1
      %s116 = scalar_select %p113, %s114, %s115
      %p119 = pneg %p113
      %p120 = scmp.eq.s32.totalorder %s20, 2
      %p121 = por %p119, %p120
      %p122 = scmp.ne.s32.totalorder %s114, %s117
      %p123 = scmp.eq.s32.totalorder %s20, 0
      %p124 = por %p122, %p123
      %p125 = scmp.ne.s32.totalorder %s114, %s117
      %p126 = scmp.eq.s32.totalorder %s25, 2
      %p127 = por %p125, %p126
      %p128 = scmp.ne.s32.totalorder %s117, %s118
      %p129 = scmp.eq.s32.totalorder %s25, 0
      %p130 = por %p128, %p129
      %p131 = scmp.ne.s32.totalorder %s117, %s118
      %p132 = scmp.eq.s32.totalorder %s26, 2
      %p133 = por %p131, %p132
      %p135 = scmp.ne.s32.totalorder %s118, %s134
      %p136 = scmp.eq.s32.totalorder %s26, 0
      %p137 = por %p135, %p136
      %s138 = ssub.s32 %s20, %s27
      %p139 = scmp.eq.s32.totalorder %s138, 0
      %s141 = sadd.s32 %s140, 1
      %s142 = scalar_select %p139, %s140, %s141
      %p145 = pneg %p139
      %p146 = scmp.eq.s32.totalorder %s20, 2
      %p147 = por %p145, %p146
      %p148 = scmp.ne.s32.totalorder %s140, %s143
      %p149 = scmp.eq.s32.totalorder %s20, 0
      %p150 = por %p148, %p149
      %p151 = scmp.ne.s32.totalorder %s140, %s143
      %p152 = scmp.eq.s32.totalorder %s25, 2
      %p153 = por %p151, %p152
      %p154 = scmp.ne.s32.totalorder %s143, %s144
      %p155 = scmp.eq.s32.totalorder %s25, 0
      %p156 = por %p154, %p155
      %p157 = scmp.ne.s32.totalorder %s143, %s144
      %p158 = scmp.eq.s32.totalorder %s26, 2
      %p159 = por %p157, %p158
      %p161 = scmp.ne.s32.totalorder %s144, %s160
      %p162 = scmp.eq.s32.totalorder %s26, 0
      %p163 = por %p161, %p162
      %s164 = ssub.s32 %s20, %s27
      %p165 = scmp.eq.s32.totalorder %s164, 0
      %s167 = sadd.s32 %s166, 1
      %s168 = scalar_select %p165, %s166, %s167
      %p171 = pneg %p165
      %p172 = scmp.eq.s32.totalorder %s20, 2
      %p173 = por %p171, %p172
      %p174 = scmp.ne.s32.totalorder %s166, %s169
      %p175 = scmp.eq.s32.totalorder %s20, 0
      %p176 = por %p174, %p175
      %p177 = scmp.ne.s32.totalorder %s166, %s169
      %p178 = scmp.eq.s32.totalorder %s25, 2
      %p179 = por %p177, %p178
      %p180 = scmp.ne.s32.totalorder %s169, %s170
      %p181 = scmp.eq.s32.totalorder %s25, 0
      %p182 = por %p180, %p181
      %p183 = scmp.ne.s32.totalorder %s169, %s170
      %p184 = scmp.eq.s32.totalorder %s26, 2
      %p185 = por %p183, %p184
      %p187 = scmp.ne.s32.totalorder %s170, %s186
      %p188 = scmp.eq.s32.totalorder %s26, 0
      %p189 = por %p187, %p188
      %s190 = ssub.s32 %s20, %s27
      %p191 = scmp.eq.s32.totalorder %s190, 0
      %s193 = sadd.s32 %s192, 1
      %s194 = scalar_select %p191, %s192, %s193
      %p197 = pneg %p191
      %p198 = scmp.eq.s32.totalorder %s20, 2
      %p199 = por %p197, %p198
      %p200 = scmp.ne.s32.totalorder %s192, %s195
      %p201 = scmp.eq.s32.totalorder %s20, 0
      %p202 = por %p200, %p201
      %p203 = scmp.ne.s32.totalorder %s192, %s195
      %p204 = scmp.eq.s32.totalorder %s25, 2
      %p205 = por %p203, %p204
      %p206 = scmp.ne.s32.totalorder %s195, %s196
      %p207 = scmp.eq.s32.totalorder %s25, 0
      %p208 = por %p206, %p207
      %p209 = scmp.ne.s32.totalorder %s195, %s196
      %p210 = scmp.eq.s32.totalorder %s26, 2
      %p211 = por %p209, %p210
      %p213 = scmp.ne.s32.totalorder %s196, %s212
      %p214 = scmp.eq.s32.totalorder %s26, 0
      %p215 = por %p213, %p214
      %s216 = ssub.s32 %s20, %s27
      %p217 = scmp.eq.s32.totalorder %s216, 0
      %s219 = sadd.s32 %s218, 1
      %s220 = scalar_select %p217, %s218, %s219
      %p223 = pneg %p217
      %p224 = scmp.eq.s32.totalorder %s20, 2
      %p225 = por %p223, %p224
      %p226 = scmp.ne.s32.totalorder %s218, %s221
      %p227 = scmp.eq.s32.totalorder %s20, 0
      %p228 = por %p226, %p227
      %p229 = scmp.ne.s32.totalorder %s218, %s221
      %p230 = scmp.eq.s32.totalorder %s25, 2
      %p231 = por %p229, %p230
      %p232 = scmp.ne.s32.totalorder %s221, %s222
      %p233 = scmp.eq.s32.totalorder %s25, 0
      %p234 = por %p232, %p233
      %p235 = scmp.ne.s32.totalorder %s221, %s222
      %p236 = scmp.eq.s32.totalorder %s26, 2
      %p237 = por %p235, %p236
      %p239 = scmp.ne.s32.totalorder %s222, %s238
      %p240 = scmp.eq.s32.totalorder %s26, 0
      %p241 = por %p239, %p240
      %s242 = ssub.s32 %s20, %s27
      %p243 = scmp.eq.s32.totalorder %s242, 0
      %s245 = sadd.s32 %s244, 1
      %s246 = scalar_select %p243, %s244, %s245
      %p249 = pneg %p243
      %p250 = scmp.eq.s32.totalorder %s20, 2
      %p251 = por %p249, %p250
      %p252 = scmp.ne.s32.totalorder %s244, %s247
      %p253 = scmp.eq.s32.totalorder %s20, 0
      %p254 = por %p252, %p253
      %p255 = scmp.ne.s32.totalorder %s244, %s247
      %p256 = scmp.eq.s32.totalorder %s25, 2
      %p257 = por %p255, %p256
      %p258 = scmp.ne.s32.totalorder %s247, %s248
      %p259 = scmp.eq.s32.totalorder %s25, 0
      %p260 = por %p258, %p259
      %p261 = scmp.ne.s32.totalorder %s247, %s248
      %p262 = scmp.eq.s32.totalorder %s26, 2
      %p263 = por %p261, %p262
      %p265 = scmp.ne.s32.totalorder %s248, %s264
      %p266 = scmp.eq.s32.totalorder %s26, 0
      %p267 = por %p265, %p266
      %s269 = sadd.s32 %s268, 1
      %p272 = scmp.eq.s32.totalorder %s20, 2
      %p273 = scmp.ne.s32.totalorder %s268, %s270
      %p274 = scmp.eq.s32.totalorder %s20, 0
      %p275 = por %p273, %p274
      %p276 = scmp.ne.s32.totalorder %s268, %s270
      %p277 = scmp.eq.s32.totalorder %s25, 2
      %p278 = por %p276, %p277
      %p279 = scmp.ne.s32.totalorder %s270, %s271
      %p280 = scmp.eq.s32.totalorder %s25, 0
      %p281 = por %p279, %p280
      %p282 = scmp.ne.s32.totalorder %s270, %s271
      %p283 = scmp.eq.s32.totalorder %s26, 2
      %p284 = por %p282, %p283
      %p286 = scmp.ne.s32.totalorder %s271, %s285
      %p287 = scmp.eq.s32.totalorder %s26, 0
      %p288 = por %p286, %p287
      %p289 = scmp.le.s32.totalorder 1, %s20
      %p290 = scmp.lt.s32.totalorder %s20, 4
      %p291 = pnand %p289, %p290
      %p292 = pneg %p291
      // Predicated region
      $region9: #{tpu_custom_call.1} parent=5 // pred_check
        _
      $region10: #{tpu_custom_call.1} parent=5 // pred_check_branch
        %294 = sbr.rel (%p291) target = $region12
      $region11: #{tpu_custom_call.1} parent=5 // pred_region
        %s295 = ssub.s32 %s20, 1
        // Predicated region
        $region13: #{tpu_custom_call.1} parent=11 // pred_check
          %p296 = pneg %p41
        $region14: #{tpu_custom_call.1} parent=11 // pred_check_branch
          %298 = sbr.rel (%p296) target = $region16
        $region15: #{tpu_custom_call.1} parent=11 // pred_region
          %s300 = ssub.s32 256, 256
          %301 = vsyncadd [#allocation4], %s300
          %s302 = sshll.u32 [#allocation3], 4
          %s303 = int_to_ptr.vmem [resolvable:$true] %s302
          %308 = dma.hbm_to_vmem [thread:$0]  %s0, 256, %s303, [#allocation4], 128, 128, 8
        $region16: #{tpu_custom_call.1} parent=11 // pred_fallthru
          _
        // Predicated region
        $region17: #{tpu_custom_call.1} parent=11 // pred_check
          %p309 = pneg %p62
        $region18: #{tpu_custom_call.1} parent=11 // pred_check_branch
          %311 = sbr.rel (%p309) target = $region20
        $region19: #{tpu_custom_call.1} parent=11 // pred_region
          %s313 = ssub.s32 256, 256
          %314 = vsyncadd [#allocation7], %s313
          %s315 = sshll.u32 [#allocation6], 4
          %s316 = int_to_ptr.vmem [resolvable:$true] %s315
          %321 = dma.hbm_to_vmem [thread:$0]  %s1, 256, %s316, [#allocation7], 128, 128, 8
        $region20: #{tpu_custom_call.1} parent=11 // pred_fallthru
          _
        // Predicated region
        $region21: #{tpu_custom_call.1} parent=11 // pred_check
          %p322 = pneg %p83
        $region22: #{tpu_custom_call.1} parent=11 // pred_check_branch
          %324 = sbr.rel (%p322) target = $region24
        $region23: #{tpu_custom_call.1} parent=11 // pred_region
          %s326 = ssub.s32 16, 16
          %327 = vsyncadd [#allocation7], %s326
          %s329 = sshll.u32 [#allocation8], 4
          %s330 = int_to_ptr.vmem [resolvable:$true] %s329
          %332 = dma.hbm_to_vmem [thread:$0]  %s2, 16, %s330, [#allocation7]
        $region24: #{tpu_custom_call.1} parent=11 // pred_fallthru
          _
        // Predicated region
        $region25: #{tpu_custom_call.1} parent=11 // pred_check
          %p333 = pneg %p104
        $region26: #{tpu_custom_call.1} parent=11 // pred_check_branch
          %335 = sbr.rel (%p333) target = $region28
        $region27: #{tpu_custom_call.1} parent=11 // pred_region
          %s337 = ssub.s32 256, 256
          %338 = vsyncadd [#allocation10], %s337
          %s339 = sshll.u32 [#allocation9], 4
          %s340 = int_to_ptr.vmem [resolvable:$true] %s339
          %345 = dma.hbm_to_vmem [thread:$0]  %s3, 256, %s340, [#allocation10], 128, 128, 8
        $region28: #{tpu_custom_call.1} parent=11 // pred_fallthru
          _
      $region12: #{tpu_custom_call.1} parent=5 // pred_fallthru
        _
      %p346 = scmp.lt.s32.totalorder %s20, 3
      // Predicated region
      $region29: #{tpu_custom_call.1} parent=5 // pred_check
        %p347 = pneg %p346
      $region30: #{tpu_custom_call.1} parent=5 // pred_check_branch
        %349 = sbr.rel (%p347) target = $region32
      $region31: #{tpu_custom_call.1} parent=5 // pred_region
        // Predicated region
        $region33: #{tpu_custom_call.1} parent=31 // pred_check
          %p350 = pneg %p124
        $region34: #{tpu_custom_call.1} parent=31 // pred_check_branch
          %352 = sbr.rel (%p350) target = $region36
        $region35: #{tpu_custom_call.1} parent=31 // pred_region
          %s353 = sand.u32 %s20, 1
          %s354 = scalar_lea.sflag [#allocation4], %s353
          %s355 = sand.u32 %s114, 1
          %s356 = smul.addr %s355, 256
          %s357 = scalar_lea.vmem [#allocation11], %s356
          %s359 = ssub.s32 4096, 4096
          %360 = vsyncadd %s354, %s359
          %s361 = smul.addr %s20, 32
          %s362 = smul.addr %s361, 128
          %s363 = scalar_lea.hbm %s4, %s362
          %s364 = sshll.u32 %s357, 4
          %s365 = int_to_ptr.vmem [resolvable:$true] %s364
          %370 = dma.hbm_to_vmem [thread:$0]  %s363, 4096, %s365, %s354, 256, 256, 16
        $region36: #{tpu_custom_call.1} parent=31 // pred_fallthru
          _
        // Predicated region
        $region37: #{tpu_custom_call.1} parent=31 // pred_check
          %p371 = pneg %p150
        $region38: #{tpu_custom_call.1} parent=31 // pred_check_branch
          %373 = sbr.rel (%p371) target = $region40
        $region39: #{tpu_custom_call.1} parent=31 // pred_region
          %p374 = scmp.lt.s32.totalorder %s20, 2
          %s375 = scalar_select %p374, %s20, 2
          %s376 = smul.addr %s375, 2
          %s377 = scalar_lea.vmem %s5, %s376
        $region40: #{tpu_custom_call.1} parent=31 // pred_fallthru
          _
        // Predicated region
        $region41: #{tpu_custom_call.1} parent=31 // pred_check
          %p378 = pneg %p176
        $region42: #{tpu_custom_call.1} parent=31 // pred_check_branch
          %380 = sbr.rel (%p378) target = $region44
        $region43: #{tpu_custom_call.1} parent=31 // pred_region
          %s381 = sand.u32 %s20, 1
          %s382 = scalar_lea.sflag [#allocation4], %s381
          %s383 = sand.u32 %s166, 1
          %s384 = smul.addr %s383, 4
          %s385 = scalar_lea.vmem [#allocation12], %s384
          %s387 = ssub.s32 64, 64
          %388 = vsyncadd %s382, %s387
          %s389 = smul.addr %s20, 64
          %s390 = scalar_lea.hbm %s6, %s389
          %s392 = sshll.u32 %s385, 4
          %s393 = int_to_ptr.vmem [resolvable:$true] %s392
          %395 = dma.hbm_to_vmem [thread:$0]  %s390, 64, %s393, %s382
        $region44: #{tpu_custom_call.1} parent=31 // pred_fallthru
          _
        // Predicated region
        $region45: #{tpu_custom_call.1} parent=31 // pred_check
          %p396 = pneg %p202
        $region46: #{tpu_custom_call.1} parent=31 // pred_check_branch
          %398 = sbr.rel (%p396) target = $region48
        $region47: #{tpu_custom_call.1} parent=31 // pred_region
          %p399 = scmp.lt.s32.totalorder %s20, 2
          %s400 = scalar_select %p399, %s20, 2
          %s401 = scalar_lea.vmem %s7, %s400
        $region48: #{tpu_custom_call.1} parent=31 // pred_fallthru
          _
        // Predicated region
        $region49: #{tpu_custom_call.1} parent=31 // pred_check
          %p402 = pneg %p228
        $region50: #{tpu_custom_call.1} parent=31 // pred_check_branch
          %404 = sbr.rel (%p402) target = $region52
        $region51: #{tpu_custom_call.1} parent=31 // pred_region
          %p405 = scmp.lt.s32.totalorder %s20, 2
          %s406 = scalar_select %p405, %s20, 2
          %s407 = scalar_lea.vmem %s8, %s406
        $region52: #{tpu_custom_call.1} parent=31 // pred_fallthru
          _
        // Predicated region
        $region53: #{tpu_custom_call.1} parent=31 // pred_check
          %p408 = pneg %p254
        $region54: #{tpu_custom_call.1} parent=31 // pred_check_branch
          %410 = sbr.rel (%p408) target = $region56
        $region55: #{tpu_custom_call.1} parent=31 // pred_region
          %p411 = scmp.lt.s32.totalorder %s20, 2
          %s412 = scalar_select %p411, %s20, 2
          %s413 = scalar_lea.vmem %s9, %s412
        $region56: #{tpu_custom_call.1} parent=31 // pred_fallthru
          _
      $region32: #{tpu_custom_call.1} parent=5 // pred_fallthru
        _
      %p414 = scmp.le.s32.totalorder 1, %s20
      %p415 = scmp.lt.s32.totalorder %s20, 4
      %p416 = pnand %p414, %p415
      %p417 = pneg %p416
      // Predicated region
      $region57: #{tpu_custom_call.1} parent=5 // pred_check
        _
      $region58: #{tpu_custom_call.1} parent=5 // pred_check_branch
        %419 = sbr.rel (%p416) target = $region60
      $region59: #{tpu_custom_call.1} parent=5 // pred_region
        %s420 = ssub.s32 %s20, 1
        // Predicated region
        $region61: #{tpu_custom_call.1} parent=59 // pred_check
          %p421 = pneg %p41
        $region62: #{tpu_custom_call.1} parent=59 // pred_check_branch
          %423 = sbr.rel (%p421) target = $region64
        $region63: #{tpu_custom_call.1} parent=59 // pred_region
          %424 = dma.done [#allocation4], 256
        $region64: #{tpu_custom_call.1} parent=59 // pred_fallthru
          _
        // Predicated region
        $region65: #{tpu_custom_call.1} parent=59 // pred_check
          %p425 = pneg %p62
        $region66: #{tpu_custom_call.1} parent=59 // pred_check_branch
          %427 = sbr.rel (%p425) target = $region68
        $region67: #{tpu_custom_call.1} parent=59 // pred_region
          %428 = dma.done [#allocation7], 256
        $region68: #{tpu_custom_call.1} parent=59 // pred_fallthru
          _
        // Predicated region
        $region69: #{tpu_custom_call.1} parent=59 // pred_check
          %p429 = pneg %p83
        $region70: #{tpu_custom_call.1} parent=59 // pred_check_branch
          %431 = sbr.rel (%p429) target = $region72
        $region71: #{tpu_custom_call.1} parent=59 // pred_region
          %432 = dma.done [#allocation7], 16
        $region72: #{tpu_custom_call.1} parent=59 // pred_fallthru
          _
        // Predicated region
        $region73: #{tpu_custom_call.1} parent=59 // pred_check
          %p433 = pneg %p104
        $region74: #{tpu_custom_call.1} parent=59 // pred_check_branch
          %435 = sbr.rel (%p433) target = $region76
        $region75: #{tpu_custom_call.1} parent=59 // pred_region
          %436 = dma.done [#allocation10], 256
        $region76: #{tpu_custom_call.1} parent=59 // pred_fallthru
          _
        %s437 = sand.u32 %s25, 1
        %s438 = scalar_lea.sflag [#allocation4], %s437
        %s439 = sand.u32 %s117, 1
        %s440 = smul.addr %s439, 256
        %s441 = scalar_lea.vmem [#allocation11], %s440
        // Predicated region
        $region77: #{tpu_custom_call.1} parent=59 // pred_check
          %p442 = pneg %p130
        $region78: #{tpu_custom_call.1} parent=59 // pred_check_branch
          %444 = sbr.rel (%p442) target = $region80
        $region79: #{tpu_custom_call.1} parent=59 // pred_region
          %445 = dma.done %s438, 4096
        $region80: #{tpu_custom_call.1} parent=59 // pred_fallthru
          _
        %s446 = sand.u32 %s25, 1
        %s447 = scalar_lea.sflag [#allocation4], %s446
        %s448 = sand.u32 %s169, 1
        %s449 = smul.addr %s448, 4
        %s450 = scalar_lea.vmem [#allocation12], %s449
        // Predicated region
        $region81: #{tpu_custom_call.1} parent=59 // pred_check
          %p451 = pneg %p182
        $region82: #{tpu_custom_call.1} parent=59 // pred_check_branch
          %453 = sbr.rel (%p451) target = $region84
        $region83: #{tpu_custom_call.1} parent=59 // pred_region
          %454 = dma.done %s447, 64
        $region84: #{tpu_custom_call.1} parent=59 // pred_fallthru
          _
        %p455 = pneg %p41
        %p456 = pneg %p38
        %p457 = pneg %p62
        %p458 = pneg %p59
        %p459 = pneg %p83
        %p460 = pneg %p80
        %p461 = pneg %p104
        %p462 = pneg %p101
        %s463 = sand.u32 %s25, 1
        %s464 = scalar_lea.sflag [#allocation4], %s463
        %s465 = sand.u32 %s117, 1
        %s466 = smul.addr %s465, 256
        %s467 = scalar_lea.vmem [#allocation11], %s466
        %p468 = pneg %p130
        %p469 = pneg %p127
        %p470 = scmp.lt.s32.totalorder %s25, 2
        %s471 = scalar_select %p470, %s25, 2
        %s472 = smul.addr %s471, 2
        %s473 = scalar_lea.vmem %s5, %s472
        %p474 = pneg %p156
        %p475 = pneg %p153
        %s476 = sand.u32 %s25, 1
        %s477 = scalar_lea.sflag [#allocation4], %s476
        %s478 = sand.u32 %s169, 1
        %s479 = smul.addr %s478, 4
        %s480 = scalar_lea.vmem [#allocation12], %s479
        %p481 = pneg %p182
        %p482 = pneg %p179
        %p483 = scmp.lt.s32.totalorder %s25, 2
        %s484 = scalar_select %p483, %s25, 2
        %s485 = scalar_lea.vmem %s7, %s484
        %p486 = pneg %p208
        %p487 = pneg %p205
        %p488 = scmp.lt.s32.totalorder %s25, 2
        %s489 = scalar_select %p488, %s25, 2
        %s490 = scalar_lea.vmem %s8, %s489
        %p491 = pneg %p234
        %p492 = pneg %p231
        %p493 = scmp.lt.s32.totalorder %s25, 2
        %s494 = scalar_select %p493, %s25, 2
        %s495 = scalar_lea.vmem %s9, %s494
        %p496 = pneg %p260
        %p497 = pneg %p257
        %p498 = pneg %p281
        %p499 = pneg %p278
        %p500 = scmp.lt.s32.totalorder %s25, 2
        %s501 = scalar_select %p500, %s25, 2
        %s502 = smul.addr %s501, 2
        %s503 = scalar_lea.vmem %s5, %s502
        %p504 = scmp.lt.s32.totalorder %s25, 2
        %s505 = scalar_select %p504, %s25, 2
        %s506 = scalar_lea.vmem %s7, %s505
        %p507 = scmp.lt.s32.totalorder %s25, 2
        %s508 = scalar_select %p507, %s25, 2
        %s509 = scalar_lea.vmem %s8, %s508
        %p510 = scmp.lt.s32.totalorder %s25, 2
        %s511 = scalar_select %p510, %s25, 2
        %s512 = scalar_lea.vmem %s9, %s511
        %p513 = scmp.eq.s32.totalorder %s25, 0
        // Predicated region
        $region85: #{tpu_custom_call.1} parent=59 // pred_check
          %p514 = pneg %p513
        $region86: #{tpu_custom_call.1} parent=59 // pred_check_branch
          %516 = sbr.rel (%p514) target = $region88
        $region87: #{tpu_custom_call.1} parent=59 // pred_region
          %v517 = vld [vmem:[#allocation3] sm:$0xff]
          %v518 = vld [vmem:[#allocation3 + $0x8] sm:$0xff]
          %v519 = vld [vmem:[#allocation6] sm:$0xff]
          %v520 = vld [vmem:[#allocation6 + $0x8] sm:$0xff]
          %v521 = vld [vmem:[#allocation8] sm:$0x1]
          %v523 = vlaneseq
          %v524 = vshrl.u32 %v523, 7
          %v525 = vsub.s32 0, %v524
          %v526 = vrot.slane %v521, %v525
          %vm528 = vcmask 130048
          %v530 = vsel %vm528, %v517, 0
          %v533 = vsel %vm528, %v518, 0
          %535 = vmatprep.subr.mxu0 0.0
          %536 = vmatpush1.msra.mxu0 0.0
          %537 = vmatprep.subr.mxu0 0.0
          %538 = vmatpush1.msra.mxu0 0.0
          %539 = vmatprep.subr.mxu0 0.0
          %540 = vmatpush1.msra.mxu0 0.0
          %541 = vmatprep.subr.mxu0 0.0
          %542 = vmatpush1.msra.mxu0 0.0
          %543 = vmatprep.subr.mxu0 0.0
          %544 = vmatpush1.msra.mxu0 0.0
          %545 = vmatprep.subr.mxu0 0.0
          %546 = vmatpush1.msra.mxu0 0.0
          %547 = vmatprep.subr.mxu0 0.0
          %548 = vmatpush1.msra.mxu0 0.0
          %549 = vmatprep.subr.mxu0 0.0
          %550 = vmatpush1.msra.mxu0 0.0
          %551 = vmatprep.subr.mxu0 0.0
          %552 = vmatpush1.msra.mxu0 0.0
          %553 = vmatprep.subr.mxu0 0.0
          %554 = vmatpush1.msra.mxu0 0.0
          %555 = vmatprep.subr.mxu0 0.0
          %556 = vmatpush1.msra.mxu0 0.0
          %557 = vmatprep.subr.mxu0 0.0
          %558 = vmatpush1.msra.mxu0 0.0
          %559 = vmatprep.subr.mxu0 0.0
          %560 = vmatpush1.msra.mxu0 0.0
          %561 = vmatprep.subr.mxu0 0.0
          %562 = vmatpush1.msra.mxu0 0.0
          %563 = vmatprep.subr.mxu0 0.0
          %564 = vmatpush1.msra.mxu0 %v520
          %565 = vmatprep.subr.mxu0 0.0
          %566 = vmatpush1.msra.mxu0 %v519
          %567 = vmatprep.subr.mxu0 0.0
          %568 = vmatpush2.msra.mxu0 0.0
          %569 = vmatprep.subr.mxu0 0.0
          %570 = vmatpush2.msra.mxu0 0.0
          %571 = vmatprep.subr.mxu0 0.0
          %572 = vmatpush2.msra.mxu0 0.0
          %573 = vmatprep.subr.mxu0 0.0
          %574 = vmatpush2.msra.mxu0 0.0
          %575 = vmatprep.subr.mxu0 0.0
          %576 = vmatpush2.msra.mxu0 0.0
          %577 = vmatprep.subr.mxu0 0.0
          %578 = vmatpush2.msra.mxu0 0.0
          %579 = vmatprep.subr.mxu0 0.0
          %580 = vmatpush2.msra.mxu0 0.0
          %581 = vmatprep.subr.mxu0 0.0
          %582 = vmatpush2.msra.mxu0 0.0
          %583 = vmatprep.subr.mxu0 0.0
          %584 = vmatpush2.msra.mxu0 0.0
          %585 = vmatprep.subr.mxu0 0.0
          %586 = vmatpush2.msra.mxu0 0.0
          %587 = vmatprep.subr.mxu0 0.0
          %588 = vmatpush2.msra.mxu0 0.0
          %589 = vmatprep.subr.mxu0 0.0
          %590 = vmatpush2.msra.mxu0 0.0
          %591 = vmatprep.subr.mxu0 0.0
          %592 = vmatpush2.msra.mxu0 0.0
          %593 = vmatprep.subr.mxu0 0.0
          %594 = vmatpush2.msra.mxu0 0.0
          %595 = vmatprep.subr.mxu0 0.0
          %596 = vmatpush2.msra.mxu0 0.0
          %597 = vmatprep.subr.mxu0 0.0
          %598 = vmatpush2.msra.mxu0 0.0
          %599 = vmatprep.mubr.f32.mxu0 0.0
          %600 = vmatmul.mubr.f32.gmra.mxu0 %v530
          %v601 = vpop.f32.mrf.mxu0
          %v602 = vadd.f32 %v526, %v601
          %v603 = vpop.f32.mrf.mxu0
          %604 = vmatprep.mubr.f32.mxu0 0.0
          %605 = vmatmul.mubr.f32.gmra.mxu0 %v533
          %v606 = vpop.f32.mrf.mxu0
          %v607 = vadd.f32 %v526, %v606
          %v608 = vpop.f32.mrf.mxu0
          %609 = vdwg.mxu0
          %v610 = vmax.f32 %v602, 0.0
          %v611 = vmax.f32 %v607, 0.0
          %612 = vst [vmem:[#allocation2] sm:$0xff] %v610
          %613 = vst [vmem:[#allocation2 + $0x8] sm:$0xff] %v611
        $region88: #{tpu_custom_call.1} parent=59 // pred_fallthru
          _
        %v614 = vld [vmem:[#allocation2] sm:$0xff]
        %v615 = vld [vmem:[#allocation2 + $0x8] sm:$0xff]
        %v616 = vld [vmem:[#allocation9] sm:$0xff]
        %v617 = vld [vmem:[#allocation9 + $0x8] sm:$0xff]
        %v618 = vld [vmem:[%s441] sm:$0xff]
        %v619 = vld [vmem:[%s441 + $0x8] sm:$0xff]
        %v620 = vld [vmem:[%s441 + $0x10] sm:$0xff]
        %v621 = vld [vmem:[%s441 + $0x18] sm:$0xff]
        %v622 = vld [vmem:[%s441 + $0x20] sm:$0xff]
        %v623 = vld [vmem:[%s441 + $0x28] sm:$0xff]
        %v624 = vld [vmem:[%s441 + $0x30] sm:$0xff]
        %v625 = vld [vmem:[%s441 + $0x38] sm:$0xff]
        %v626 = vld [vmem:[%s441 + $0x40] sm:$0xff]
        %v627 = vld [vmem:[%s441 + $0x48] sm:$0xff]
        %v628 = vld [vmem:[%s441 + $0x50] sm:$0xff]
        %v629 = vld [vmem:[%s441 + $0x58] sm:$0xff]
        %v630 = vld [vmem:[%s441 + $0x60] sm:$0xff]
        %v631 = vld [vmem:[%s441 + $0x68] sm:$0xff]
        %v632 = vld [vmem:[%s441 + $0x70] sm:$0xff]
        %v633 = vld [vmem:[%s441 + $0x78] sm:$0xff]
        %v634 = vld [vmem:[%s441 + $0x80] sm:$0xff]
        %v635 = vld [vmem:[%s441 + $0x88] sm:$0xff]
        %v636 = vld [vmem:[%s441 + $0x90] sm:$0xff]
        %v637 = vld [vmem:[%s441 + $0x98] sm:$0xff]
        %v638 = vld [vmem:[%s441 + $0xa0] sm:$0xff]
        %v639 = vld [vmem:[%s441 + $0xa8] sm:$0xff]
        %v640 = vld [vmem:[%s441 + $0xb0] sm:$0xff]
        %v641 = vld [vmem:[%s441 + $0xb8] sm:$0xff]
        %v642 = vld [vmem:[%s441 + $0xc0] sm:$0xff]
        %v643 = vld [vmem:[%s441 + $0xc8] sm:$0xff]
        %v644 = vld [vmem:[%s441 + $0xd0] sm:$0xff]
        %v645 = vld [vmem:[%s441 + $0xd8] sm:$0xff]
        %v646 = vld [vmem:[%s441 + $0xe0] sm:$0xff]
        %v647 = vld [vmem:[%s441 + $0xe8] sm:$0xff]
        %v648 = vld [vmem:[%s441 + $0xf0] sm:$0xff]
        %v649 = vld [vmem:[%s441 + $0xf8] sm:$0xff]
        %v650 = vld [vmem:[%s503] sm:$0x3]
        %v652 = vlaneseq
        %v653 = vshrl.u32 %v652, 7
        %v654 = vsub.s32 0, %v653
        %v655 = vrot.slane %v650, %v654
        %v656 = vlaneseq
        %v657 = vshrl.u32 %v656, 7
        %v658 = vsub.s32 1, %v657
        %v659 = vrot.slane %v650, %v658
        %662 = vmatprep.subr.mxu0 %v649
        %663 = vmatpush1.msra.mxu0 %v648
        %664 = vmatprep.subr.mxu0 %v647
        %665 = vmatpush1.msra.mxu0 %v646
        %666 = vmatprep.subr.mxu0 %v645
        %667 = vmatpush1.msra.mxu0 %v644
        %668 = vmatprep.subr.mxu0 %v643
        %669 = vmatpush1.msra.mxu0 %v642
        %670 = vmatprep.subr.mxu0 %v641
        %671 = vmatpush1.msra.mxu0 %v640
        %672 = vmatprep.subr.mxu0 %v639
        %673 = vmatpush1.msra.mxu0 %v638
        %674 = vmatprep.subr.mxu0 %v637
        %675 = vmatpush1.msra.mxu0 %v636
        %676 = vmatprep.subr.mxu0 %v635
        %677 = vmatpush1.msra.mxu0 %v634
        %678 = vmatprep.subr.mxu0 %v633
        %679 = vmatpush1.msra.mxu0 %v632
        %680 = vmatprep.subr.mxu0 %v631
        %681 = vmatpush1.msra.mxu0 %v630
        %682 = vmatprep.subr.mxu0 %v629
        %683 = vmatpush1.msra.mxu0 %v628
        %684 = vmatprep.subr.mxu0 %v627
        %685 = vmatpush1.msra.mxu0 %v626
        %686 = vmatprep.subr.mxu0 %v625
        %687 = vmatpush1.msra.mxu0 %v624
        %688 = vmatprep.subr.mxu0 %v623
        %689 = vmatpush1.msra.mxu0 %v622
        %690 = vmatprep.subr.mxu0 %v621
        %691 = vmatpush1.msra.mxu0 %v620
        %692 = vmatprep.subr.mxu0 %v619
        %693 = vmatpush1.msra.mxu0 %v618
        %694 = vmatprep.subr.mxu0 0.0
        %695 = vmatpush2.msra.mxu0 0.0
        %696 = vmatprep.subr.mxu0 0.0
        %697 = vmatpush2.msra.mxu0 0.0
        %698 = vmatprep.subr.mxu0 0.0
        %699 = vmatpush2.msra.mxu0 0.0
        %700 = vmatprep.subr.mxu0 0.0
        %701 = vmatpush2.msra.mxu0 0.0
        %702 = vmatprep.subr.mxu0 0.0
        %703 = vmatpush2.msra.mxu0 0.0
        %704 = vmatprep.subr.mxu0 0.0
        %705 = vmatpush2.msra.mxu0 0.0
        %706 = vmatprep.subr.mxu0 0.0
        %707 = vmatpush2.msra.mxu0 0.0
        %708 = vmatprep.subr.mxu0 0.0
        %709 = vmatpush2.msra.mxu0 0.0
        %710 = vmatprep.subr.mxu0 0.0
        %711 = vmatpush2.msra.mxu0 0.0
        %712 = vmatprep.subr.mxu0 0.0
        %713 = vmatpush2.msra.mxu0 0.0
        %714 = vmatprep.subr.mxu0 0.0
        %715 = vmatpush2.msra.mxu0 0.0
        %716 = vmatprep.subr.mxu0 0.0
        %717 = vmatpush2.msra.mxu0 0.0
        %718 = vmatprep.subr.mxu0 0.0
        %719 = vmatpush2.msra.mxu0 0.0
        %720 = vmatprep.subr.mxu0 0.0
        %721 = vmatpush2.msra.mxu0 0.0
        %722 = vmatprep.subr.mxu0 0.0
        %723 = vmatpush2.msra.mxu0 0.0
        %724 = vmatprep.subr.mxu0 0.0
        %725 = vmatpush2.msra.mxu0 0.0
        %726 = vmatprep.mubr.f32.mxu0 0.0
        %727 = vmatmul.mubr.f32.gmra.mxu0 %v614
        %v728 = vpop.f32.mrf.mxu0
        %v729 = vadd.f32 %v655, %v728
        %v730 = vpop.f32.mrf.mxu0
        %v731 = vadd.f32 %v659, %v730
        %732 = vmatprep.mubr.f32.mxu0 0.0
        %733 = vmatmul.mubr.f32.gmra.mxu0 %v615
        %v734 = vpop.f32.mrf.mxu0
        %v735 = vadd.f32 %v655, %v734
        %v736 = vpop.f32.mrf.mxu0
        %v737 = vadd.f32 %v659, %v736
        %738 = vdwg.mxu0
        %v739 = vld [vmem:[%s450] sm:$0xf]
        %v742 = vcombine.high %v731, %v731
        %v744 = vunpack.c.l.s4 1966171168
        %v745 = vunpack.c.0.s8 %v744
        %v746 = vlaneseq
        %v747 = vshrl.u32 %v746, 7
        %v748 = vsub.s32 %v745, %v747
        %v749 = vrot.slane %v731, %v748
        %v751 = vunpack.c.l.s4 1966171168
        %v752 = vunpack.c.0.s8 %v751
        %v753 = vlaneseq
        %v754 = vshrl.u32 %v753, 7
        %v755 = vsub.s32 %v752, %v754
        %v756 = vrot.slane %v742, %v755
        %v757 = vcombine.high %v749, %v749
        %v758 = vcombine.high %v756, %v756
        %v760 = vunpack.c.l.s4 1966171168
        %v761 = vunpack.c.0.s8 %v760
        %v762 = vlaneseq
        %v763 = vshrl.u32 %v762, 7
        %v764 = vsub.s32 %v761, %v763
        %v765 = vrot.slane %v749, %v764
        %v767 = vunpack.c.l.s4 1966171168
        %v768 = vunpack.c.0.s8 %v767
        %v769 = vlaneseq
        %v770 = vshrl.u32 %v769, 7
        %v771 = vsub.s32 %v768, %v770
        %v772 = vrot.slane %v756, %v771
        %v774 = vunpack.c.l.s4 1966171168
        %v775 = vunpack.c.0.s8 %v774
        %v776 = vlaneseq
        %v777 = vshrl.u32 %v776, 7
        %v778 = vsub.s32 %v775, %v777
        %v779 = vrot.slane %v757, %v778
        %v781 = vunpack.c.l.s4 1966171168
        %v782 = vunpack.c.0.s8 %v781
        %v783 = vlaneseq
        %v784 = vshrl.u32 %v783, 7
        %v785 = vsub.s32 %v782, %v784
        %v786 = vrot.slane %v758, %v785
        %v787 = vcombine.high %v765, %v765
        %v788 = vcombine.high %v772, %v772
        %v789 = vcombine.high %v779, %v779
        %v790 = vcombine.high %v786, %v786
        %v791 = vcombine.high %v737, %v737
        %v793 = vunpack.c.l.s4 1966171168
        %v794 = vunpack.c.0.s8 %v793
        %v795 = vlaneseq
        %v796 = vshrl.u32 %v795, 7
        %v797 = vsub.s32 %v794, %v796
        %v798 = vrot.slane %v737, %v797
        %v800 = vunpack.c.l.s4 1966171168
        %v801 = vunpack.c.0.s8 %v800
        %v802 = vlaneseq
        %v803 = vshrl.u32 %v802, 7
        %v804 = vsub.s32 %v801, %v803
        %v805 = vrot.slane %v791, %v804
        %v806 = vcombine.high %v798, %v798
        %v807 = vcombine.high %v805, %v805
        %v809 = vunpack.c.l.s4 1966171168
        %v810 = vunpack.c.0.s8 %v809
        %v811 = vlaneseq
        %v812 = vshrl.u32 %v811, 7
        %v813 = vsub.s32 %v810, %v812
        %v814 = vrot.slane %v798, %v813
        %v816 = vunpack.c.l.s4 1966171168
        %v817 = vunpack.c.0.s8 %v816
        %v818 = vlaneseq
        %v819 = vshrl.u32 %v818, 7
        %v820 = vsub.s32 %v817, %v819
        %v821 = vrot.slane %v805, %v820
        %v823 = vunpack.c.l.s4 1966171168
        %v824 = vunpack.c.0.s8 %v823
        %v825 = vlaneseq
        %v826 = vshrl.u32 %v825, 7
        %v827 = vsub.s32 %v824, %v826
        %v828 = vrot.slane %v806, %v827
        %v830 = vunpack.c.l.s4 1966171168
        %v831 = vunpack.c.0.s8 %v830
        %v832 = vlaneseq
        %v833 = vshrl.u32 %v832, 7
        %v834 = vsub.s32 %v831, %v833
        %v835 = vrot.slane %v807, %v834
        %v836 = vcombine.high %v814, %v814
        %v837 = vcombine.high %v821, %v821
        %v838 = vcombine.high %v828, %v828
        %v839 = vcombine.high %v835, %v835
        %v840 = vlaneseq
        %v841 = vshrl.u32 %v840, 7
        %v842 = vsub.s32 0, %v841
        %v843 = vrot.slane %v765, %v842
        %v844 = vlaneseq
        %v845 = vshrl.u32 %v844, 7
        %v846 = vsub.s32 0, %v845
        %v847 = vrot.slane %v779, %v846
        %v848 = vlaneseq
        %v849 = vshrl.u32 %v848, 7
        %v850 = vsub.s32 0, %v849
        %v851 = vrot.slane %v787, %v850
        %v852 = vlaneseq
        %v853 = vshrl.u32 %v852, 7
        %v854 = vsub.s32 0, %v853
        %v855 = vrot.slane %v789, %v854
        %v856 = vlaneseq
        %v857 = vshrl.u32 %v856, 7
        %v858 = vsub.s32 0, %v857
        %v859 = vrot.slane %v772, %v858
        %v860 = vlaneseq
        %v861 = vshrl.u32 %v860, 7
        %v862 = vsub.s32 0, %v861
        %v863 = vrot.slane %v786, %v862
        %v864 = vlaneseq
        %v865 = vshrl.u32 %v864, 7
        %v866 = vsub.s32 0, %v865
        %v867 = vrot.slane %v788, %v866
        %v868 = vlaneseq
        %v869 = vshrl.u32 %v868, 7
        %v870 = vsub.s32 0, %v869
        %v871 = vrot.slane %v790, %v870
        %v872 = vlaneseq
        %v873 = vshrl.u32 %v872, 7
        %v874 = vsub.s32 0, %v873
        %v875 = vrot.slane %v814, %v874
        %v876 = vlaneseq
        %v877 = vshrl.u32 %v876, 7
        %v878 = vsub.s32 0, %v877
        %v879 = vrot.slane %v828, %v878
        %v880 = vlaneseq
        %v881 = vshrl.u32 %v880, 7
        %v882 = vsub.s32 0, %v881
        %v883 = vrot.slane %v836, %v882
        %v884 = vlaneseq
        %v885 = vshrl.u32 %v884, 7
        %v886 = vsub.s32 0, %v885
        %v887 = vrot.slane %v838, %v886
        %v888 = vlaneseq
        %v889 = vshrl.u32 %v888, 7
        %v890 = vsub.s32 0, %v889
        %v891 = vrot.slane %v821, %v890
        %v892 = vlaneseq
        %v893 = vshrl.u32 %v892, 7
        %v894 = vsub.s32 0, %v893
        %v895 = vrot.slane %v835, %v894
        %v896 = vlaneseq
        %v897 = vshrl.u32 %v896, 7
        %v898 = vsub.s32 0, %v897
        %v899 = vrot.slane %v837, %v898
        %v900 = vlaneseq
        %v901 = vshrl.u32 %v900, 7
        %v902 = vsub.s32 0, %v901
        %v903 = vrot.slane %v839, %v902
        %v920 = vadd.f32 %v843, %v729
        %v921 = vadd.f32 %v843, %v735
        %v922 = vadd.f32 %v847, %v729
        %v923 = vadd.f32 %v847, %v735
        %v924 = vadd.f32 %v851, %v729
        %v925 = vadd.f32 %v851, %v735
        %v926 = vadd.f32 %v855, %v729
        %v927 = vadd.f32 %v855, %v735
        %v928 = vadd.f32 %v859, %v729
        %v929 = vadd.f32 %v859, %v735
        %v930 = vadd.f32 %v863, %v729
        %v931 = vadd.f32 %v863, %v735
        %v932 = vadd.f32 %v867, %v729
        %v933 = vadd.f32 %v867, %v735
        %v934 = vadd.f32 %v871, %v729
        %v935 = vadd.f32 %v871, %v735
        %v936 = vadd.f32 %v875, %v729
        %v937 = vadd.f32 %v875, %v735
        %v938 = vadd.f32 %v879, %v729
        %v939 = vadd.f32 %v879, %v735
        %v940 = vadd.f32 %v883, %v729
        %v941 = vadd.f32 %v883, %v735
        %v942 = vadd.f32 %v887, %v729
        %v943 = vadd.f32 %v887, %v735
        %v944 = vadd.f32 %v891, %v729
        %v945 = vadd.f32 %v891, %v735
        %v946 = vadd.f32 %v895, %v729
        %v947 = vadd.f32 %v895, %v735
        %v948 = vadd.f32 %v899, %v729
        %v949 = vadd.f32 %v899, %v735
        %v950 = vadd.f32 %v903, %v729
        %v951 = vadd.f32 %v903, %v735
        %vm952 = vcmp.gt.f32.partialorder %v920, 0.0
        %vm953 = vcmp.gt.f32.partialorder %v921, 0.0
        %vm954 = vcmp.gt.f32.partialorder %v922, 0.0
        %vm955 = vcmp.gt.f32.partialorder %v923, 0.0
        %vm956 = vcmp.gt.f32.partialorder %v924, 0.0
        %vm957 = vcmp.gt.f32.partialorder %v925, 0.0
        %vm958 = vcmp.gt.f32.partialorder %v926, 0.0
        %vm959 = vcmp.gt.f32.partialorder %v927, 0.0
        %vm960 = vcmp.gt.f32.partialorder %v928, 0.0
        %vm961 = vcmp.gt.f32.partialorder %v929, 0.0
        %vm962 = vcmp.gt.f32.partialorder %v930, 0.0
        %vm963 = vcmp.gt.f32.partialorder %v931, 0.0
        %vm964 = vcmp.gt.f32.partialorder %v932, 0.0
        %vm965 = vcmp.gt.f32.partialorder %v933, 0.0
        %vm966 = vcmp.gt.f32.partialorder %v934, 0.0
        %vm967 = vcmp.gt.f32.partialorder %v935, 0.0
        %vm968 = vcmp.gt.f32.partialorder %v936, 0.0
        %vm969 = vcmp.gt.f32.partialorder %v937, 0.0
        %vm970 = vcmp.gt.f32.partialorder %v938, 0.0
        %vm971 = vcmp.gt.f32.partialorder %v939, 0.0
        %vm972 = vcmp.gt.f32.partialorder %v940, 0.0
        %vm973 = vcmp.gt.f32.partialorder %v941, 0.0
        %vm974 = vcmp.gt.f32.partialorder %v942, 0.0
        %vm975 = vcmp.gt.f32.partialorder %v943, 0.0
        %vm976 = vcmp.gt.f32.partialorder %v944, 0.0
        %vm977 = vcmp.gt.f32.partialorder %v945, 0.0
        %vm978 = vcmp.gt.f32.partialorder %v946, 0.0
        %vm979 = vcmp.gt.f32.partialorder %v947, 0.0
        %vm980 = vcmp.gt.f32.partialorder %v948, 0.0
        %vm981 = vcmp.gt.f32.partialorder %v949, 0.0
        %vm982 = vcmp.gt.f32.partialorder %v950, 0.0
        %vm983 = vcmp.gt.f32.partialorder %v951, 0.0
        %v984 = vmul.f32 %v920, 0.2
        %v985 = vmul.f32 %v921, 0.2
        %v986 = vmul.f32 %v922, 0.2
        %v987 = vmul.f32 %v923, 0.2
        %v988 = vmul.f32 %v924, 0.2
        %v989 = vmul.f32 %v925, 0.2
        %v990 = vmul.f32 %v926, 0.2
        %v991 = vmul.f32 %v927, 0.2
        %v992 = vmul.f32 %v928, 0.2
        %v993 = vmul.f32 %v929, 0.2
        %v994 = vmul.f32 %v930, 0.2
        %v995 = vmul.f32 %v931, 0.2
        %v996 = vmul.f32 %v932, 0.2
        %v997 = vmul.f32 %v933, 0.2
        %v998 = vmul.f32 %v934, 0.2
        %v999 = vmul.f32 %v935, 0.2
        %v1000 = vmul.f32 %v936, 0.2
        %v1001 = vmul.f32 %v937, 0.2
        %v1002 = vmul.f32 %v938, 0.2
        %v1003 = vmul.f32 %v939, 0.2
        %v1004 = vmul.f32 %v940, 0.2
        %v1005 = vmul.f32 %v941, 0.2
        %v1006 = vmul.f32 %v942, 0.2
        %v1007 = vmul.f32 %v943, 0.2
        %v1008 = vmul.f32 %v944, 0.2
        %v1009 = vmul.f32 %v945, 0.2
        %v1010 = vmul.f32 %v946, 0.2
        %v1011 = vmul.f32 %v947, 0.2
        %v1012 = vmul.f32 %v948, 0.2
        %v1013 = vmul.f32 %v949, 0.2
        %v1014 = vmul.f32 %v950, 0.2
        %v1015 = vmul.f32 %v951, 0.2
        %v1016 = vsel %vm952, %v920, %v984
        %v1017 = vsel %vm953, %v921, %v985
        %v1018 = vsel %vm954, %v922, %v986
        %v1019 = vsel %vm955, %v923, %v987
        %v1020 = vsel %vm956, %v924, %v988
        %v1021 = vsel %vm957, %v925, %v989
        %v1022 = vsel %vm958, %v926, %v990
        %v1023 = vsel %vm959, %v927, %v991
        %v1024 = vsel %vm960, %v928, %v992
        %v1025 = vsel %vm961, %v929, %v993
        %v1026 = vsel %vm962, %v930, %v994
        %v1027 = vsel %vm963, %v931, %v995
        %v1028 = vsel %vm964, %v932, %v996
        %v1029 = vsel %vm965, %v933, %v997
        %v1030 = vsel %vm966, %v934, %v998
        %v1031 = vsel %vm967, %v935, %v999
        %v1032 = vsel %vm968, %v936, %v1000
        %v1033 = vsel %vm969, %v937, %v1001
        %v1034 = vsel %vm970, %v938, %v1002
        %v1035 = vsel %vm971, %v939, %v1003
        %v1036 = vsel %vm972, %v940, %v1004
        %v1037 = vsel %vm973, %v941, %v1005
        %v1038 = vsel %vm974, %v942, %v1006
        %v1039 = vsel %vm975, %v943, %v1007
        %v1040 = vsel %vm976, %v944, %v1008
        %v1041 = vsel %vm977, %v945, %v1009
        %v1042 = vsel %vm978, %v946, %v1010
        %v1043 = vsel %vm979, %v947, %v1011
        %v1044 = vsel %vm980, %v948, %v1012
        %v1045 = vsel %vm981, %v949, %v1013
        %v1046 = vsel %vm982, %v950, %v1014
        %v1047 = vsel %vm983, %v951, %v1015
        %v1048 = vlaneseq
        %v1049 = vshrl.u32 %v1048, 7
        %v1050 = vsub.s32 0, %v1049
        %v1051 = vrot.slane %v739, %v1050
        %v1052 = vmul.f32 %v1016, %v1051
        %v1053 = vmul.f32 %v1017, %v1051
        %v1054 = vmul.f32 %v1018, %v1051
        %v1055 = vmul.f32 %v1019, %v1051
        %v1056 = vmul.f32 %v1020, %v1051
        %v1057 = vmul.f32 %v1021, %v1051
        %v1058 = vmul.f32 %v1022, %v1051
        %v1059 = vmul.f32 %v1023, %v1051
        %v1060 = vmul.f32 %v1024, %v1051
        %v1061 = vmul.f32 %v1025, %v1051
        %v1062 = vmul.f32 %v1026, %v1051
        %v1063 = vmul.f32 %v1027, %v1051
        %v1064 = vmul.f32 %v1028, %v1051
        %v1065 = vmul.f32 %v1029, %v1051
        %v1066 = vmul.f32 %v1030, %v1051
        %v1067 = vmul.f32 %v1031, %v1051
        %v1068 = vmul.f32 %v1032, %v1051
        %v1069 = vmul.f32 %v1033, %v1051
        %v1070 = vmul.f32 %v1034, %v1051
        %v1071 = vmul.f32 %v1035, %v1051
        %v1072 = vmul.f32 %v1036, %v1051
        %v1073 = vmul.f32 %v1037, %v1051
        %v1074 = vmul.f32 %v1038, %v1051
        %v1075 = vmul.f32 %v1039, %v1051
        %v1076 = vmul.f32 %v1040, %v1051
        %v1077 = vmul.f32 %v1041, %v1051
        %v1078 = vmul.f32 %v1042, %v1051
        %v1079 = vmul.f32 %v1043, %v1051
        %v1080 = vmul.f32 %v1044, %v1051
        %v1081 = vmul.f32 %v1045, %v1051
        %v1082 = vmul.f32 %v1046, %v1051
        %v1083 = vmul.f32 %v1047, %v1051
        %vm1084 = vcmask 261120
        %v1085 = vsel %vm1084, %v1052, 0.0
        %1086 = vadd.xlane.f32.xlu0 %v1085
        %v1087 = vpop.xlane.xlu0 %1086
        %v1088 = vsel %vm1084, %v1053, 0.0
        %1089 = vadd.xlane.f32.xlu0 %v1088
        %v1090 = vpop.xlane.xlu0 %1089
        %v1091 = vsel %vm1084, %v1054, 0.0
        %1092 = vadd.xlane.f32.xlu0 %v1091
        %v1093 = vpop.xlane.xlu0 %1092
        %v1094 = vsel %vm1084, %v1055, 0.0
        %1095 = vadd.xlane.f32.xlu0 %v1094
        %v1096 = vpop.xlane.xlu0 %1095
        %v1097 = vsel %vm1084, %v1056, 0.0
        %1098 = vadd.xlane.f32.xlu0 %v1097
        %v1099 = vpop.xlane.xlu0 %1098
        %v1100 = vsel %vm1084, %v1057, 0.0
        %1101 = vadd.xlane.f32.xlu0 %v1100
        %v1102 = vpop.xlane.xlu0 %1101
        %v1103 = vsel %vm1084, %v1058, 0.0
        %1104 = vadd.xlane.f32.xlu0 %v1103
        %v1105 = vpop.xlane.xlu0 %1104
        %v1106 = vsel %vm1084, %v1059, 0.0
        %1107 = vadd.xlane.f32.xlu0 %v1106
        %v1108 = vpop.xlane.xlu0 %1107
        %v1109 = vsel %vm1084, %v1060, 0.0
        %1110 = vadd.xlane.f32.xlu0 %v1109
        %v1111 = vpop.xlane.xlu0 %1110
        %v1112 = vsel %vm1084, %v1061, 0.0
        %1113 = vadd.xlane.f32.xlu0 %v1112
        %v1114 = vpop.xlane.xlu0 %1113
        %v1115 = vsel %vm1084, %v1062, 0.0
        %1116 = vadd.xlane.f32.xlu0 %v1115
        %v1117 = vpop.xlane.xlu0 %1116
        %v1118 = vsel %vm1084, %v1063, 0.0
        %1119 = vadd.xlane.f32.xlu0 %v1118
        %v1120 = vpop.xlane.xlu0 %1119
        %v1121 = vsel %vm1084, %v1064, 0.0
        %1122 = vadd.xlane.f32.xlu0 %v1121
        %v1123 = vpop.xlane.xlu0 %1122
        %v1124 = vsel %vm1084, %v1065, 0.0
        %1125 = vadd.xlane.f32.xlu0 %v1124
        %v1126 = vpop.xlane.xlu0 %1125
        %v1127 = vsel %vm1084, %v1066, 0.0
        %1128 = vadd.xlane.f32.xlu0 %v1127
        %v1129 = vpop.xlane.xlu0 %1128
        %v1130 = vsel %vm1084, %v1067, 0.0
        %1131 = vadd.xlane.f32.xlu0 %v1130
        %v1132 = vpop.xlane.xlu0 %1131
        %v1133 = vsel %vm1084, %v1068, 0.0
        %1134 = vadd.xlane.f32.xlu0 %v1133
        %v1135 = vpop.xlane.xlu0 %1134
        %v1136 = vsel %vm1084, %v1069, 0.0
        %1137 = vadd.xlane.f32.xlu0 %v1136
        %v1138 = vpop.xlane.xlu0 %1137
        %v1139 = vsel %vm1084, %v1070, 0.0
        %1140 = vadd.xlane.f32.xlu0 %v1139
        %v1141 = vpop.xlane.xlu0 %1140
        %v1142 = vsel %vm1084, %v1071, 0.0
        %1143 = vadd.xlane.f32.xlu0 %v1142
        %v1144 = vpop.xlane.xlu0 %1143
        %v1145 = vsel %vm1084, %v1072, 0.0
        %1146 = vadd.xlane.f32.xlu0 %v1145
        %v1147 = vpop.xlane.xlu0 %1146
        %v1148 = vsel %vm1084, %v1073, 0.0
        %1149 = vadd.xlane.f32.xlu0 %v1148
        %v1150 = vpop.xlane.xlu0 %1149
        %v1151 = vsel %vm1084, %v1074, 0.0
        %1152 = vadd.xlane.f32.xlu0 %v1151
        %v1153 = vpop.xlane.xlu0 %1152
        %v1154 = vsel %vm1084, %v1075, 0.0
        %1155 = vadd.xlane.f32.xlu0 %v1154
        %v1156 = vpop.xlane.xlu0 %1155
        %v1157 = vsel %vm1084, %v1076, 0.0
        %1158 = vadd.xlane.f32.xlu0 %v1157
        %v1159 = vpop.xlane.xlu0 %1158
        %v1160 = vsel %vm1084, %v1077, 0.0
        %1161 = vadd.xlane.f32.xlu0 %v1160
        %v1162 = vpop.xlane.xlu0 %1161
        %v1163 = vsel %vm1084, %v1078, 0.0
        %1164 = vadd.xlane.f32.xlu0 %v1163
        %v1165 = vpop.xlane.xlu0 %1164
        %v1166 = vsel %vm1084, %v1079, 0.0
        %1167 = vadd.xlane.f32.xlu0 %v1166
        %v1168 = vpop.xlane.xlu0 %1167
        %v1169 = vsel %vm1084, %v1080, 0.0
        %1170 = vadd.xlane.f32.xlu0 %v1169
        %v1171 = vpop.xlane.xlu0 %1170
        %v1172 = vsel %vm1084, %v1081, 0.0
        %1173 = vadd.xlane.f32.xlu0 %v1172
        %v1174 = vpop.xlane.xlu0 %1173
        %v1175 = vsel %vm1084, %v1082, 0.0
        %1176 = vadd.xlane.f32.xlu0 %v1175
        %v1177 = vpop.xlane.xlu0 %1176
        %v1178 = vsel %vm1084, %v1083, 0.0
        %1179 = vadd.xlane.f32.xlu0 %v1178
        %v1180 = vpop.xlane.xlu0 %1179
        %vm1181 = vcmp.gt.f32.partialorder %v616, 0.0
        %vm1182 = vcmp.gt.f32.partialorder %v617, 0.0
        %v1215 = vlaneseq
        %v1216 = vand.u32 %v1215, 127
        %v1217 = vlaneseq
        %v1218 = vshrl.u32 %v1217, 7
        %v1219 = vsub.s32 %v1216, %v1218
        %v1220 = vrot.slane %v1087, %v1219
        %v1221 = vadd.s32 %v1216, 4294967288
        %v1222 = vlaneseq
        %v1223 = vshrl.u32 %v1222, 7
        %v1224 = vsub.s32 %v1221, %v1223
        %v1225 = vrot.slane %v1090, %v1224
        %vm1226 = vcmask 130112
        %v1227 = vsel %vm1226, %v1225, %v1220
        %v1228 = vlaneseq
        %v1229 = vshrl.u32 %v1228, 7
        %v1230 = vsub.s32 %v1216, %v1229
        %v1231 = vrot.slane %v1093, %v1230
        %v1232 = vlaneseq
        %v1233 = vshrl.u32 %v1232, 7
        %v1234 = vsub.s32 %v1221, %v1233
        %v1235 = vrot.slane %v1096, %v1234
        %v1236 = vsel %vm1226, %v1235, %v1231
        %v1237 = vlaneseq
        %v1238 = vshrl.u32 %v1237, 7
        %v1239 = vsub.s32 %v1216, %v1238
        %v1240 = vrot.slane %v1099, %v1239
        %v1241 = vlaneseq
        %v1242 = vshrl.u32 %v1241, 7
        %v1243 = vsub.s32 %v1221, %v1242
        %v1244 = vrot.slane %v1102, %v1243
        %v1245 = vsel %vm1226, %v1244, %v1240
        %v1246 = vlaneseq
        %v1247 = vshrl.u32 %v1246, 7
        %v1248 = vsub.s32 %v1216, %v1247
        %v1249 = vrot.slane %v1105, %v1248
        %v1250 = vlaneseq
        %v1251 = vshrl.u32 %v1250, 7
        %v1252 = vsub.s32 %v1221, %v1251
        %v1253 = vrot.slane %v1108, %v1252
        %v1254 = vsel %vm1226, %v1253, %v1249
        %v1255 = vlaneseq
        %v1256 = vshrl.u32 %v1255, 7
        %v1257 = vsub.s32 %v1216, %v1256
        %v1258 = vrot.slane %v1111, %v1257
        %v1259 = vlaneseq
        %v1260 = vshrl.u32 %v1259, 7
        %v1261 = vsub.s32 %v1221, %v1260
        %v1262 = vrot.slane %v1114, %v1261
        %v1263 = vsel %vm1226, %v1262, %v1258
        %v1264 = vlaneseq
        %v1265 = vshrl.u32 %v1264, 7
        %v1266 = vsub.s32 %v1216, %v1265
        %v1267 = vrot.slane %v1117, %v1266
        %v1268 = vlaneseq
        %v1269 = vshrl.u32 %v1268, 7
        %v1270 = vsub.s32 %v1221, %v1269
        %v1271 = vrot.slane %v1120, %v1270
        %v1272 = vsel %vm1226, %v1271, %v1267
        %v1273 = vlaneseq
        %v1274 = vshrl.u32 %v1273, 7
        %v1275 = vsub.s32 %v1216, %v1274
        %v1276 = vrot.slane %v1123, %v1275
        %v1277 = vlaneseq
        %v1278 = vshrl.u32 %v1277, 7
        %v1279 = vsub.s32 %v1221, %v1278
        %v1280 = vrot.slane %v1126, %v1279
        %v1281 = vsel %vm1226, %v1280, %v1276
        %v1282 = vlaneseq
        %v1283 = vshrl.u32 %v1282, 7
        %v1284 = vsub.s32 %v1216, %v1283
        %v1285 = vrot.slane %v1129, %v1284
        %v1286 = vlaneseq
        %v1287 = vshrl.u32 %v1286, 7
        %v1288 = vsub.s32 %v1221, %v1287
        %v1289 = vrot.slane %v1132, %v1288
        %v1290 = vsel %vm1226, %v1289, %v1285
        %v1291 = vlaneseq
        %v1292 = vshrl.u32 %v1291, 7
        %v1293 = vsub.s32 %v1216, %v1292
        %v1294 = vrot.slane %v1135, %v1293
        %v1295 = vlaneseq
        %v1296 = vshrl.u32 %v1295, 7
        %v1297 = vsub.s32 %v1221, %v1296
        %v1298 = vrot.slane %v1138, %v1297
        %v1299 = vsel %vm1226, %v1298, %v1294
        %v1300 = vlaneseq
        %v1301 = vshrl.u32 %v1300, 7
        %v1302 = vsub.s32 %v1216, %v1301
        %v1303 = vrot.slane %v1141, %v1302
        %v1304 = vlaneseq
        %v1305 = vshrl.u32 %v1304, 7
        %v1306 = vsub.s32 %v1221, %v1305
        %v1307 = vrot.slane %v1144, %v1306
        %v1308 = vsel %vm1226, %v1307, %v1303
        %v1309 = vlaneseq
        %v1310 = vshrl.u32 %v1309, 7
        %v1311 = vsub.s32 %v1216, %v1310
        %v1312 = vrot.slane %v1147, %v1311
        %v1313 = vlaneseq
        %v1314 = vshrl.u32 %v1313, 7
        %v1315 = vsub.s32 %v1221, %v1314
        %v1316 = vrot.slane %v1150, %v1315
        %v1317 = vsel %vm1226, %v1316, %v1312
        %v1318 = vlaneseq
        %v1319 = vshrl.u32 %v1318, 7
        %v1320 = vsub.s32 %v1216, %v1319
        %v1321 = vrot.slane %v1153, %v1320
        %v1322 = vlaneseq
        %v1323 = vshrl.u32 %v1322, 7
        %v1324 = vsub.s32 %v1221, %v1323
        %v1325 = vrot.slane %v1156, %v1324
        %v1326 = vsel %vm1226, %v1325, %v1321
        %v1327 = vlaneseq
        %v1328 = vshrl.u32 %v1327, 7
        %v1329 = vsub.s32 %v1216, %v1328
        %v1330 = vrot.slane %v1159, %v1329
        %v1331 = vlaneseq
        %v1332 = vshrl.u32 %v1331, 7
        %v1333 = vsub.s32 %v1221, %v1332
        %v1334 = vrot.slane %v1162, %v1333
        %v1335 = vsel %vm1226, %v1334, %v1330
        %v1336 = vlaneseq
        %v1337 = vshrl.u32 %v1336, 7
        %v1338 = vsub.s32 %v1216, %v1337
        %v1339 = vrot.slane %v1165, %v1338
        %v1340 = vlaneseq
        %v1341 = vshrl.u32 %v1340, 7
        %v1342 = vsub.s32 %v1221, %v1341
        %v1343 = vrot.slane %v1168, %v1342
        %v1344 = vsel %vm1226, %v1343, %v1339
        %v1345 = vlaneseq
        %v1346 = vshrl.u32 %v1345, 7
        %v1347 = vsub.s32 %v1216, %v1346
        %v1348 = vrot.slane %v1171, %v1347
        %v1349 = vlaneseq
        %v1350 = vshrl.u32 %v1349, 7
        %v1351 = vsub.s32 %v1221, %v1350
        %v1352 = vrot.slane %v1174, %v1351
        %v1353 = vsel %vm1226, %v1352, %v1348
        %v1354 = vlaneseq
        %v1355 = vshrl.u32 %v1354, 7
        %v1356 = vsub.s32 %v1216, %v1355
        %v1357 = vrot.slane %v1177, %v1356
        %v1358 = vlaneseq
        %v1359 = vshrl.u32 %v1358, 7
        %v1360 = vsub.s32 %v1221, %v1359
        %v1361 = vrot.slane %v1180, %v1360
        %v1362 = vsel %vm1226, %v1361, %v1357
        %vm1363 = vcmask 1041409
        %v1364 = vsel %vm1363, %v1236, %v1227
        %vm1365 = vcmask 1042434
        %v1366 = vsel %vm1365, %v1245, %v1364
        %vm1367 = vcmask 1043459
        %v1368 = vsel %vm1367, %v1254, %v1366
        %vm1369 = vcmask 1044484
        %v1370 = vsel %vm1369, %v1263, %v1368
        %vm1371 = vcmask 1045509
        %v1372 = vsel %vm1371, %v1272, %v1370
        %vm1373 = vcmask 1046534
        %v1374 = vsel %vm1373, %v1281, %v1372
        %vm1375 = vcmask 1047559
        %v1376 = vsel %vm1375, %v1290, %v1374
        %v1377 = vsel %vm1363, %v1308, %v1299
        %v1378 = vsel %vm1365, %v1317, %v1377
        %v1379 = vsel %vm1367, %v1326, %v1378
        %v1380 = vsel %vm1369, %v1335, %v1379
        %v1381 = vsel %vm1371, %v1344, %v1380
        %v1382 = vsel %vm1373, %v1353, %v1381
        %v1383 = vsel %vm1375, %v1362, %v1382
        %v1386 = vsel %vm1181, %v1376, -1e+30
        %v1387 = vsel %vm1182, %v1383, -1e+30
        %vm1388 = vcmask 130048
        %v1389 = vsel %vm1388, %v1386, -inf
        %1390 = vmax.xlane.f32.xlu0 %v1389
        %v1391 = vpop.xlane.xlu0 %1390
        %v1392 = vsel %vm1388, %v1387, -inf
        %1393 = vmax.xlane.f32.xlu0 %v1392
        %v1394 = vpop.xlane.xlu0 %1393
        %v1395 = vsub.f32 %v1386, %v1391
        %v1396 = vsub.f32 %v1387, %v1394
        %v1397 = vmul.f32 %v1395, 1.442695
        %v1398 = vpow.pop %v1397
        %v1399 = vmul.f32 %v1396, 1.442695
        %v1400 = vpow.pop %v1399
        %v1401 = vsel %vm1388, %v1398, 0.0
        %1402 = vadd.xlane.f32.xlu0 %v1401
        %v1403 = vpop.xlane.xlu0 %1402
        %v1404 = vsel %vm1388, %v1400, 0.0
        %1405 = vadd.xlane.f32.xlu0 %v1404
        %v1406 = vpop.xlane.xlu0 %1405
        %v1407 = vrcp.pop %v1403
        %v1408 = vrcp.pop %v1406
        %v1409 = vmul.f32 %v1398, %v1407
        %v1410 = vmul.f32 %v1400, %v1408
        %v1412 = vsel %vm1388, %v1409, 0
        %v1415 = vsel %vm1388, %v1410, 0
        %1417 = vmatprep.subr.mxu0 0.0
        %1418 = vmatpush1.msra.mxu0 0.0
        %1419 = vmatprep.subr.mxu0 0.0
        %1420 = vmatpush1.msra.mxu0 0.0
        %1421 = vmatprep.subr.mxu0 0.0
        %1422 = vmatpush1.msra.mxu0 0.0
        %1423 = vmatprep.subr.mxu0 0.0
        %1424 = vmatpush1.msra.mxu0 0.0
        %1425 = vmatprep.subr.mxu0 0.0
        %1426 = vmatpush1.msra.mxu0 0.0
        %1427 = vmatprep.subr.mxu0 0.0
        %1428 = vmatpush1.msra.mxu0 0.0
        %1429 = vmatprep.subr.mxu0 0.0
        %1430 = vmatpush1.msra.mxu0 0.0
        %1431 = vmatprep.subr.mxu0 0.0
        %1432 = vmatpush1.msra.mxu0 0.0
        %1433 = vmatprep.subr.mxu0 0.0
        %1434 = vmatpush1.msra.mxu0 0.0
        %1435 = vmatprep.subr.mxu0 0.0
        %1436 = vmatpush1.msra.mxu0 0.0
        %1437 = vmatprep.subr.mxu0 0.0
        %1438 = vmatpush1.msra.mxu0 0.0
        %1439 = vmatprep.subr.mxu0 0.0
        %1440 = vmatpush1.msra.mxu0 0.0
        %1441 = vmatprep.subr.mxu0 0.0
        %1442 = vmatpush1.msra.mxu0 0.0
        %1443 = vmatprep.subr.mxu0 0.0
        %1444 = vmatpush1.msra.mxu0 0.0
        %1445 = vmatprep.subr.mxu0 0.0
        %1446 = vmatpush1.msra.mxu0 %v735
        %1447 = vmatprep.subr.mxu0 0.0
        %1448 = vmatpush1.msra.mxu0 %v729
        %1449 = vmatprep.subr.mxu0 0.0
        %1450 = vmatpush2.msra.mxu0 0.0
        %1451 = vmatprep.subr.mxu0 0.0
        %1452 = vmatpush2.msra.mxu0 0.0
        %1453 = vmatprep.subr.mxu0 0.0
        %1454 = vmatpush2.msra.mxu0 0.0
        %1455 = vmatprep.subr.mxu0 0.0
        %1456 = vmatpush2.msra.mxu0 0.0
        %1457 = vmatprep.subr.mxu0 0.0
        %1458 = vmatpush2.msra.mxu0 0.0
        %1459 = vmatprep.subr.mxu0 0.0
        %1460 = vmatpush2.msra.mxu0 0.0
        %1461 = vmatprep.subr.mxu0 0.0
        %1462 = vmatpush2.msra.mxu0 0.0
        %1463 = vmatprep.subr.mxu0 0.0
        %1464 = vmatpush2.msra.mxu0 0.0
        %1465 = vmatprep.subr.mxu0 0.0
        %1466 = vmatpush2.msra.mxu0 0.0
        %1467 = vmatprep.subr.mxu0 0.0
        %1468 = vmatpush2.msra.mxu0 0.0
        %1469 = vmatprep.subr.mxu0 0.0
        %1470 = vmatpush2.msra.mxu0 0.0
        %1471 = vmatprep.subr.mxu0 0.0
        %1472 = vmatpush2.msra.mxu0 0.0
        %1473 = vmatprep.subr.mxu0 0.0
        %1474 = vmatpush2.msra.mxu0 0.0
        %1475 = vmatprep.subr.mxu0 0.0
        %1476 = vmatpush2.msra.mxu0 0.0
        %1477 = vmatprep.subr.mxu0 0.0
        %1478 = vmatpush2.msra.mxu0 0.0
        %1479 = vmatprep.subr.mxu0 0.0
        %1480 = vmatpush2.msra.mxu0 0.0
        %1481 = vmatprep.mubr.f32.mxu0 0.0
        %1482 = vmatmul.mubr.f32.gmra.mxu0 %v1412
        %v1483 = vpop.f32.mrf.mxu0
        %v1484 = vadd.f32 0.0, %v1483
        %v1485 = vpop.f32.mrf.mxu0
        %1486 = vmatprep.mubr.f32.mxu0 0.0
        %1487 = vmatmul.mubr.f32.gmra.mxu0 %v1415
        %v1488 = vpop.f32.mrf.mxu0
        %v1489 = vadd.f32 0.0, %v1488
        %v1490 = vpop.f32.mrf.mxu0
        %1491 = vdwg.mxu0
        %v1492 = vlaneseq
        %v1493 = vshrl.u32 %v1492, 7
        %v1494 = vsub.s32 1, %v1493
        %v1495 = vrot.slane %v739, %v1494
        %1497 = vrot.lane.b32.xlu0 %v1495, 32
        %v1498 = vpop.permute.xlu0 %1497
        %v1500 = vmul.f32 %v1016, %v1498
        %v1501 = vmul.f32 %v1017, %v1498
        %v1502 = vmul.f32 %v1018, %v1498
        %v1503 = vmul.f32 %v1019, %v1498
        %v1504 = vmul.f32 %v1020, %v1498
        %v1505 = vmul.f32 %v1021, %v1498
        %v1506 = vmul.f32 %v1022, %v1498
        %v1507 = vmul.f32 %v1023, %v1498
        %v1508 = vmul.f32 %v1024, %v1498
        %v1509 = vmul.f32 %v1025, %v1498
        %v1510 = vmul.f32 %v1026, %v1498
        %v1511 = vmul.f32 %v1027, %v1498
        %v1512 = vmul.f32 %v1028, %v1498
        %v1513 = vmul.f32 %v1029, %v1498
        %v1514 = vmul.f32 %v1030, %v1498
        %v1515 = vmul.f32 %v1031, %v1498
        %v1516 = vmul.f32 %v1032, %v1498
        %v1517 = vmul.f32 %v1033, %v1498
        %v1518 = vmul.f32 %v1034, %v1498
        %v1519 = vmul.f32 %v1035, %v1498
        %v1520 = vmul.f32 %v1036, %v1498
        %v1521 = vmul.f32 %v1037, %v1498
        %v1522 = vmul.f32 %v1038, %v1498
        %v1523 = vmul.f32 %v1039, %v1498
        %v1524 = vmul.f32 %v1040, %v1498
        %v1525 = vmul.f32 %v1041, %v1498
        %v1526 = vmul.f32 %v1042, %v1498
        %v1527 = vmul.f32 %v1043, %v1498
        %v1528 = vmul.f32 %v1044, %v1498
        %v1529 = vmul.f32 %v1045, %v1498
        %v1530 = vmul.f32 %v1046, %v1498
        %v1531 = vmul.f32 %v1047, %v1498
        %1564 = vrot.lane.b32.xlu0 %v1500, 96
        %v1565 = vpop.permute.xlu0 %1564
        %1566 = vrot.lane.b32.xlu0 %v1501, 96
        %v1567 = vpop.permute.xlu0 %1566
        %1568 = vrot.lane.b32.xlu0 %v1502, 96
        %v1569 = vpop.permute.xlu0 %1568
        %1570 = vrot.lane.b32.xlu0 %v1503, 96
        %v1571 = vpop.permute.xlu0 %1570
        %1572 = vrot.lane.b32.xlu0 %v1504, 96
        %v1573 = vpop.permute.xlu0 %1572
        %1574 = vrot.lane.b32.xlu0 %v1505, 96
        %v1575 = vpop.permute.xlu0 %1574
        %1576 = vrot.lane.b32.xlu0 %v1506, 96
        %v1577 = vpop.permute.xlu0 %1576
        %1578 = vrot.lane.b32.xlu0 %v1507, 96
        %v1579 = vpop.permute.xlu0 %1578
        %1580 = vrot.lane.b32.xlu0 %v1508, 96
        %v1581 = vpop.permute.xlu0 %1580
        %1582 = vrot.lane.b32.xlu0 %v1509, 96
        %v1583 = vpop.permute.xlu0 %1582
        %1584 = vrot.lane.b32.xlu0 %v1510, 96
        %v1585 = vpop.permute.xlu0 %1584
        %1586 = vrot.lane.b32.xlu0 %v1511, 96
        %v1587 = vpop.permute.xlu0 %1586
        %1588 = vrot.lane.b32.xlu0 %v1512, 96
        %v1589 = vpop.permute.xlu0 %1588
        %1590 = vrot.lane.b32.xlu0 %v1513, 96
        %v1591 = vpop.permute.xlu0 %1590
        %1592 = vrot.lane.b32.xlu0 %v1514, 96
        %v1593 = vpop.permute.xlu0 %1592
        %1594 = vrot.lane.b32.xlu0 %v1515, 96
        %v1595 = vpop.permute.xlu0 %1594
        %1596 = vrot.lane.b32.xlu0 %v1516, 96
        %v1597 = vpop.permute.xlu0 %1596
        %1598 = vrot.lane.b32.xlu0 %v1517, 96
        %v1599 = vpop.permute.xlu0 %1598
        %1600 = vrot.lane.b32.xlu0 %v1518, 96
        %v1601 = vpop.permute.xlu0 %1600
        %1602 = vrot.lane.b32.xlu0 %v1519, 96
        %v1603 = vpop.permute.xlu0 %1602
        %1604 = vrot.lane.b32.xlu0 %v1520, 96
        %v1605 = vpop.permute.xlu0 %1604
        %1606 = vrot.lane.b32.xlu0 %v1521, 96
        %v1607 = vpop.permute.xlu0 %1606
        %1608 = vrot.lane.b32.xlu0 %v1522, 96
        %v1609 = vpop.permute.xlu0 %1608
        %1610 = vrot.lane.b32.xlu0 %v1523, 96
        %v1611 = vpop.permute.xlu0 %1610
        %1612 = vrot.lane.b32.xlu0 %v1524, 96
        %v1613 = vpop.permute.xlu0 %1612
        %1614 = vrot.lane.b32.xlu0 %v1525, 96
        %v1615 = vpop.permute.xlu0 %1614
        %1616 = vrot.lane.b32.xlu0 %v1526, 96
        %v1617 = vpop.permute.xlu0 %1616
        %1618 = vrot.lane.b32.xlu0 %v1527, 96
        %v1619 = vpop.permute.xlu0 %1618
        %1620 = vrot.lane.b32.xlu0 %v1528, 96
        %v1621 = vpop.permute.xlu0 %1620
        %1622 = vrot.lane.b32.xlu0 %v1529, 96
        %v1623 = vpop.permute.xlu0 %1622
        %1624 = vrot.lane.b32.xlu0 %v1530, 96
        %v1625 = vpop.permute.xlu0 %1624
        %1626 = vrot.lane.b32.xlu0 %v1531, 96
        %v1627 = vpop.permute.xlu0 %1626
        %v1660 = vsel %vm1084, %v1565, 0.0
        %1661 = vadd.xlane.f32.xlu0 %v1660
        %v1662 = vpop.xlane.xlu0 %1661
        %v1663 = vsel %vm1084, %v1567, 0.0
        %1664 = vadd.xlane.f32.xlu0 %v1663
        %v1665 = vpop.xlane.xlu0 %1664
        %v1666 = vsel %vm1084, %v1569, 0.0
        %1667 = vadd.xlane.f32.xlu0 %v1666
        %v1668 = vpop.xlane.xlu0 %1667
        %v1669 = vsel %vm1084, %v1571, 0.0
        %1670 = vadd.xlane.f32.xlu0 %v1669
        %v1671 = vpop.xlane.xlu0 %1670
        %v1672 = vsel %vm1084, %v1573, 0.0
        %1673 = vadd.xlane.f32.xlu0 %v1672
        %v1674 = vpop.xlane.xlu0 %1673
        %v1675 = vsel %vm1084, %v1575, 0.0
        %1676 = vadd.xlane.f32.xlu0 %v1675
        %v1677 = vpop.xlane.xlu0 %1676
        %v1678 = vsel %vm1084, %v1577, 0.0
        %1679 = vadd.xlane.f32.xlu0 %v1678
        %v1680 = vpop.xlane.xlu0 %1679
        %v1681 = vsel %vm1084, %v1579, 0.0
        %1682 = vadd.xlane.f32.xlu0 %v1681
        %v1683 = vpop.xlane.xlu0 %1682
        %v1684 = vsel %vm1084, %v1581, 0.0
        %1685 = vadd.xlane.f32.xlu0 %v1684
        %v1686 = vpop.xlane.xlu0 %1685
        %v1687 = vsel %vm1084, %v1583, 0.0
        %1688 = vadd.xlane.f32.xlu0 %v1687
        %v1689 = vpop.xlane.xlu0 %1688
        %v1690 = vsel %vm1084, %v1585, 0.0
        %1691 = vadd.xlane.f32.xlu0 %v1690
        %v1692 = vpop.xlane.xlu0 %1691
        %v1693 = vsel %vm1084, %v1587, 0.0
        %1694 = vadd.xlane.f32.xlu0 %v1693
        %v1695 = vpop.xlane.xlu0 %1694
        %v1696 = vsel %vm1084, %v1589, 0.0
        %1697 = vadd.xlane.f32.xlu0 %v1696
        %v1698 = vpop.xlane.xlu0 %1697
        %v1699 = vsel %vm1084, %v1591, 0.0
        %1700 = vadd.xlane.f32.xlu0 %v1699
        %v1701 = vpop.xlane.xlu0 %1700
        %v1702 = vsel %vm1084, %v1593, 0.0
        %1703 = vadd.xlane.f32.xlu0 %v1702
        %v1704 = vpop.xlane.xlu0 %1703
        %v1705 = vsel %vm1084, %v1595, 0.0
        %1706 = vadd.xlane.f32.xlu0 %v1705
        %v1707 = vpop.xlane.xlu0 %1706
        %v1708 = vsel %vm1084, %v1597, 0.0
        %1709 = vadd.xlane.f32.xlu0 %v1708
        %v1710 = vpop.xlane.xlu0 %1709
        %v1711 = vsel %vm1084, %v1599, 0.0
        %1712 = vadd.xlane.f32.xlu0 %v1711
        %v1713 = vpop.xlane.xlu0 %1712
        %v1714 = vsel %vm1084, %v1601, 0.0
        %1715 = vadd.xlane.f32.xlu0 %v1714
        %v1716 = vpop.xlane.xlu0 %1715
        %v1717 = vsel %vm1084, %v1603, 0.0
        %1718 = vadd.xlane.f32.xlu0 %v1717
        %v1719 = vpop.xlane.xlu0 %1718
        %v1720 = vsel %vm1084, %v1605, 0.0
        %1721 = vadd.xlane.f32.xlu0 %v1720
        %v1722 = vpop.xlane.xlu0 %1721
        %v1723 = vsel %vm1084, %v1607, 0.0
        %1724 = vadd.xlane.f32.xlu0 %v1723
        %v1725 = vpop.xlane.xlu0 %1724
        %v1726 = vsel %vm1084, %v1609, 0.0
        %1727 = vadd.xlane.f32.xlu0 %v1726
        %v1728 = vpop.xlane.xlu0 %1727
        %v1729 = vsel %vm1084, %v1611, 0.0
        %1730 = vadd.xlane.f32.xlu0 %v1729
        %v1731 = vpop.xlane.xlu0 %1730
        %v1732 = vsel %vm1084, %v1613, 0.0
        %1733 = vadd.xlane.f32.xlu0 %v1732
        %v1734 = vpop.xlane.xlu0 %1733
        %v1735 = vsel %vm1084, %v1615, 0.0
        %1736 = vadd.xlane.f32.xlu0 %v1735
        %v1737 = vpop.xlane.xlu0 %1736
        %v1738 = vsel %vm1084, %v1617, 0.0
        %1739 = vadd.xlane.f32.xlu0 %v1738
        %v1740 = vpop.xlane.xlu0 %1739
        %v1741 = vsel %vm1084, %v1619, 0.0
        %1742 = vadd.xlane.f32.xlu0 %v1741
        %v1743 = vpop.xlane.xlu0 %1742
        %v1744 = vsel %vm1084, %v1621, 0.0
        %1745 = vadd.xlane.f32.xlu0 %v1744
        %v1746 = vpop.xlane.xlu0 %1745
        %v1747 = vsel %vm1084, %v1623, 0.0
        %1748 = vadd.xlane.f32.xlu0 %v1747
        %v1749 = vpop.xlane.xlu0 %1748
        %v1750 = vsel %vm1084, %v1625, 0.0
        %1751 = vadd.xlane.f32.xlu0 %v1750
        %v1752 = vpop.xlane.xlu0 %1751
        %v1753 = vsel %vm1084, %v1627, 0.0
        %1754 = vadd.xlane.f32.xlu0 %v1753
        %v1755 = vpop.xlane.xlu0 %1754
        %v1788 = vlaneseq
        %v1789 = vshrl.u32 %v1788, 7
        %v1790 = vsub.s32 %v1216, %v1789
        %v1791 = vrot.slane %v1662, %v1790
        %v1792 = vlaneseq
        %v1793 = vshrl.u32 %v1792, 7
        %v1794 = vsub.s32 %v1221, %v1793
        %v1795 = vrot.slane %v1665, %v1794
        %v1796 = vsel %vm1226, %v1795, %v1791
        %v1797 = vlaneseq
        %v1798 = vshrl.u32 %v1797, 7
        %v1799 = vsub.s32 %v1216, %v1798
        %v1800 = vrot.slane %v1668, %v1799
        %v1801 = vlaneseq
        %v1802 = vshrl.u32 %v1801, 7
        %v1803 = vsub.s32 %v1221, %v1802
        %v1804 = vrot.slane %v1671, %v1803
        %v1805 = vsel %vm1226, %v1804, %v1800
        %v1806 = vlaneseq
        %v1807 = vshrl.u32 %v1806, 7
        %v1808 = vsub.s32 %v1216, %v1807
        %v1809 = vrot.slane %v1674, %v1808
        %v1810 = vlaneseq
        %v1811 = vshrl.u32 %v1810, 7
        %v1812 = vsub.s32 %v1221, %v1811
        %v1813 = vrot.slane %v1677, %v1812
        %v1814 = vsel %vm1226, %v1813, %v1809
        %v1815 = vlaneseq
        %v1816 = vshrl.u32 %v1815, 7
        %v1817 = vsub.s32 %v1216, %v1816
        %v1818 = vrot.slane %v1680, %v1817
        %v1819 = vlaneseq
        %v1820 = vshrl.u32 %v1819, 7
        %v1821 = vsub.s32 %v1221, %v1820
        %v1822 = vrot.slane %v1683, %v1821
        %v1823 = vsel %vm1226, %v1822, %v1818
        %v1824 = vlaneseq
        %v1825 = vshrl.u32 %v1824, 7
        %v1826 = vsub.s32 %v1216, %v1825
        %v1827 = vrot.slane %v1686, %v1826
        %v1828 = vlaneseq
        %v1829 = vshrl.u32 %v1828, 7
        %v1830 = vsub.s32 %v1221, %v1829
        %v1831 = vrot.slane %v1689, %v1830
        %v1832 = vsel %vm1226, %v1831, %v1827
        %v1833 = vlaneseq
        %v1834 = vshrl.u32 %v1833, 7
        %v1835 = vsub.s32 %v1216, %v1834
        %v1836 = vrot.slane %v1692, %v1835
        %v1837 = vlaneseq
        %v1838 = vshrl.u32 %v1837, 7
        %v1839 = vsub.s32 %v1221, %v1838
        %v1840 = vrot.slane %v1695, %v1839
        %v1841 = vsel %vm1226, %v1840, %v1836
        %v1842 = vlaneseq
        %v1843 = vshrl.u32 %v1842, 7
        %v1844 = vsub.s32 %v1216, %v1843
        %v1845 = vrot.slane %v1698, %v1844
        %v1846 = vlaneseq
        %v1847 = vshrl.u32 %v1846, 7
        %v1848 = vsub.s32 %v1221, %v1847
        %v1849 = vrot.slane %v1701, %v1848
        %v1850 = vsel %vm1226, %v1849, %v1845
        %v1851 = vlaneseq
        %v1852 = vshrl.u32 %v1851, 7
        %v1853 = vsub.s32 %v1216, %v1852
        %v1854 = vrot.slane %v1704, %v1853
        %v1855 = vlaneseq
        %v1856 = vshrl.u32 %v1855, 7
        %v1857 = vsub.s32 %v1221, %v1856
        %v1858 = vrot.slane %v1707, %v1857
        %v1859 = vsel %vm1226, %v1858, %v1854
        %v1860 = vlaneseq
        %v1861 = vshrl.u32 %v1860, 7
        %v1862 = vsub.s32 %v1216, %v1861
        %v1863 = vrot.slane %v1710, %v1862
        %v1864 = vlaneseq
        %v1865 = vshrl.u32 %v1864, 7
        %v1866 = vsub.s32 %v1221, %v1865
        %v1867 = vrot.slane %v1713, %v1866
        %v1868 = vsel %vm1226, %v1867, %v1863
        %v1869 = vlaneseq
        %v1870 = vshrl.u32 %v1869, 7
        %v1871 = vsub.s32 %v1216, %v1870
        %v1872 = vrot.slane %v1716, %v1871
        %v1873 = vlaneseq
        %v1874 = vshrl.u32 %v1873, 7
        %v1875 = vsub.s32 %v1221, %v1874
        %v1876 = vrot.slane %v1719, %v1875
        %v1877 = vsel %vm1226, %v1876, %v1872
        %v1878 = vlaneseq
        %v1879 = vshrl.u32 %v1878, 7
        %v1880 = vsub.s32 %v1216, %v1879
        %v1881 = vrot.slane %v1722, %v1880
        %v1882 = vlaneseq
        %v1883 = vshrl.u32 %v1882, 7
        %v1884 = vsub.s32 %v1221, %v1883
        %v1885 = vrot.slane %v1725, %v1884
        %v1886 = vsel %vm1226, %v1885, %v1881
        %v1887 = vlaneseq
        %v1888 = vshrl.u32 %v1887, 7
        %v1889 = vsub.s32 %v1216, %v1888
        %v1890 = vrot.slane %v1728, %v1889
        %v1891 = vlaneseq
        %v1892 = vshrl.u32 %v1891, 7
        %v1893 = vsub.s32 %v1221, %v1892
        %v1894 = vrot.slane %v1731, %v1893
        %v1895 = vsel %vm1226, %v1894, %v1890
        %v1896 = vlaneseq
        %v1897 = vshrl.u32 %v1896, 7
        %v1898 = vsub.s32 %v1216, %v1897
        %v1899 = vrot.slane %v1734, %v1898
        %v1900 = vlaneseq
        %v1901 = vshrl.u32 %v1900, 7
        %v1902 = vsub.s32 %v1221, %v1901
        %v1903 = vrot.slane %v1737, %v1902
        %v1904 = vsel %vm1226, %v1903, %v1899
        %v1905 = vlaneseq
        %v1906 = vshrl.u32 %v1905, 7
        %v1907 = vsub.s32 %v1216, %v1906
        %v1908 = vrot.slane %v1740, %v1907
        %v1909 = vlaneseq
        %v1910 = vshrl.u32 %v1909, 7
        %v1911 = vsub.s32 %v1221, %v1910
        %v1912 = vrot.slane %v1743, %v1911
        %v1913 = vsel %vm1226, %v1912, %v1908
        %v1914 = vlaneseq
        %v1915 = vshrl.u32 %v1914, 7
        %v1916 = vsub.s32 %v1216, %v1915
        %v1917 = vrot.slane %v1746, %v1916
        %v1918 = vlaneseq
        %v1919 = vshrl.u32 %v1918, 7
        %v1920 = vsub.s32 %v1221, %v1919
        %v1921 = vrot.slane %v1749, %v1920
        %v1922 = vsel %vm1226, %v1921, %v1917
        %v1923 = vlaneseq
        %v1924 = vshrl.u32 %v1923, 7
        %v1925 = vsub.s32 %v1216, %v1924
        %v1926 = vrot.slane %v1752, %v1925
        %v1927 = vlaneseq
        %v1928 = vshrl.u32 %v1927, 7
        %v1929 = vsub.s32 %v1221, %v1928
        %v1930 = vrot.slane %v1755, %v1929
        %v1931 = vsel %vm1226, %v1930, %v1926
        %v1932 = vsel %vm1363, %v1805, %v1796
        %v1933 = vsel %vm1365, %v1814, %v1932
        %v1934 = vsel %vm1367, %v1823, %v1933
        %v1935 = vsel %vm1369, %v1832, %v1934
        %v1936 = vsel %vm1371, %v1841, %v1935
        %v1937 = vsel %vm1373, %v1850, %v1936
        %v1938 = vsel %vm1375, %v1859, %v1937
        %v1939 = vsel %vm1363, %v1877, %v1868
        %v1940 = vsel %vm1365, %v1886, %v1939
        %v1941 = vsel %vm1367, %v1895, %v1940
        %v1942 = vsel %vm1369, %v1904, %v1941
        %v1943 = vsel %vm1371, %v1913, %v1942
        %v1944 = vsel %vm1373, %v1922, %v1943
        %v1945 = vsel %vm1375, %v1931, %v1944
        %v1948 = vsel %vm1181, %v1938, -1e+30
        %v1949 = vsel %vm1182, %v1945, -1e+30
        %v1950 = vsel %vm1388, %v1948, -inf
        %1951 = vmax.xlane.f32.xlu0 %v1950
        %v1952 = vpop.xlane.xlu0 %1951
        %v1953 = vsel %vm1388, %v1949, -inf
        %1954 = vmax.xlane.f32.xlu0 %v1953
        %v1955 = vpop.xlane.xlu0 %1954
        %v1956 = vsub.f32 %v1948, %v1952
        %v1957 = vsub.f32 %v1949, %v1955
        %v1958 = vmul.f32 %v1956, 1.442695
        %v1959 = vpow.pop %v1958
        %v1960 = vmul.f32 %v1957, 1.442695
        %v1961 = vpow.pop %v1960
        %v1962 = vsel %vm1388, %v1959, 0.0
        %1963 = vadd.xlane.f32.xlu0 %v1962
        %v1964 = vpop.xlane.xlu0 %1963
        %v1965 = vsel %vm1388, %v1961, 0.0
        %1966 = vadd.xlane.f32.xlu0 %v1965
        %v1967 = vpop.xlane.xlu0 %1966
        %v1968 = vrcp.pop %v1964
        %v1969 = vrcp.pop %v1967
        %v1970 = vmul.f32 %v1959, %v1968
        %v1971 = vmul.f32 %v1961, %v1969
        %1974 = vrot.lane.b32.xlu0 %v729, 96
        %v1975 = vpop.permute.xlu0 %1974
        %1976 = vrot.lane.b32.xlu0 %v735, 96
        %v1977 = vpop.permute.xlu0 %1976
        %v1981 = vsel %vm1388, %v1970, 0
        %v1984 = vsel %vm1388, %v1971, 0
        %1986 = vmatprep.subr.mxu0 0.0
        %1987 = vmatpush1.msra.mxu0 0.0
        %1988 = vmatprep.subr.mxu0 0.0
        %1989 = vmatpush1.msra.mxu0 0.0
        %1990 = vmatprep.subr.mxu0 0.0
        %1991 = vmatpush1.msra.mxu0 0.0
        %1992 = vmatprep.subr.mxu0 0.0
        %1993 = vmatpush1.msra.mxu0 0.0
        %1994 = vmatprep.subr.mxu0 0.0
        %1995 = vmatpush1.msra.mxu0 0.0
        %1996 = vmatprep.subr.mxu0 0.0
        %1997 = vmatpush1.msra.mxu0 0.0
        %1998 = vmatprep.subr.mxu0 0.0
        %1999 = vmatpush1.msra.mxu0 0.0
        %2000 = vmatprep.subr.mxu0 0.0
        %2001 = vmatpush1.msra.mxu0 0.0
        %2002 = vmatprep.subr.mxu0 0.0
        %2003 = vmatpush1.msra.mxu0 0.0
        %2004 = vmatprep.subr.mxu0 0.0
        %2005 = vmatpush1.msra.mxu0 0.0
        %2006 = vmatprep.subr.mxu0 0.0
        %2007 = vmatpush1.msra.mxu0 0.0
        %2008 = vmatprep.subr.mxu0 0.0
        %2009 = vmatpush1.msra.mxu0 0.0
        %2010 = vmatprep.subr.mxu0 0.0
        %2011 = vmatpush1.msra.mxu0 0.0
        %2012 = vmatprep.subr.mxu0 0.0
        %2013 = vmatpush1.msra.mxu0 0.0
        %2014 = vmatprep.subr.mxu0 0.0
        %2015 = vmatpush1.msra.mxu0 %v1977
        %2016 = vmatprep.subr.mxu0 0.0
        %2017 = vmatpush1.msra.mxu0 %v1975
        %2018 = vmatprep.subr.mxu0 0.0
        %2019 = vmatpush2.msra.mxu0 0.0
        %2020 = vmatprep.subr.mxu0 0.0
        %2021 = vmatpush2.msra.mxu0 0.0
        %2022 = vmatprep.subr.mxu0 0.0
        %2023 = vmatpush2.msra.mxu0 0.0
        %2024 = vmatprep.subr.mxu0 0.0
        %2025 = vmatpush2.msra.mxu0 0.0
        %2026 = vmatprep.subr.mxu0 0.0
        %2027 = vmatpush2.msra.mxu0 0.0
        %2028 = vmatprep.subr.mxu0 0.0
        %2029 = vmatpush2.msra.mxu0 0.0
        %2030 = vmatprep.subr.mxu0 0.0
        %2031 = vmatpush2.msra.mxu0 0.0
        %2032 = vmatprep.subr.mxu0 0.0
        %2033 = vmatpush2.msra.mxu0 0.0
        %2034 = vmatprep.subr.mxu0 0.0
        %2035 = vmatpush2.msra.mxu0 0.0
        %2036 = vmatprep.subr.mxu0 0.0
        %2037 = vmatpush2.msra.mxu0 0.0
        %2038 = vmatprep.subr.mxu0 0.0
        %2039 = vmatpush2.msra.mxu0 0.0
        %2040 = vmatprep.subr.mxu0 0.0
        %2041 = vmatpush2.msra.mxu0 0.0
        %2042 = vmatprep.subr.mxu0 0.0
        %2043 = vmatpush2.msra.mxu0 0.0
        %2044 = vmatprep.subr.mxu0 0.0
        %2045 = vmatpush2.msra.mxu0 0.0
        %2046 = vmatprep.subr.mxu0 0.0
        %2047 = vmatpush2.msra.mxu0 0.0
        %2048 = vmatprep.subr.mxu0 0.0
        %2049 = vmatpush2.msra.mxu0 0.0
        %2050 = vmatprep.mubr.f32.mxu0 0.0
        %2051 = vmatmul.mubr.f32.gmra.mxu0 %v1981
        %v2052 = vpop.f32.mrf.mxu0
        %v2053 = vadd.f32 0.0, %v2052
        %v2054 = vpop.f32.mrf.mxu0
        %2055 = vmatprep.mubr.f32.mxu0 0.0
        %2056 = vmatmul.mubr.f32.gmra.mxu0 %v1984
        %v2057 = vpop.f32.mrf.mxu0
        %v2058 = vadd.f32 0.0, %v2057
        %v2059 = vpop.f32.mrf.mxu0
        %2060 = vdwg.mxu0
        %v2061 = vlaneseq
        %v2062 = vshrl.u32 %v2061, 7
        %v2063 = vsub.s32 2, %v2062
        %v2064 = vrot.slane %v739, %v2063
        %2066 = vrot.lane.b32.xlu0 %v2064, 64
        %v2067 = vpop.permute.xlu0 %2066
        %v2069 = vmul.f32 %v1016, %v2067
        %v2070 = vmul.f32 %v1017, %v2067
        %v2071 = vmul.f32 %v1018, %v2067
        %v2072 = vmul.f32 %v1019, %v2067
        %v2073 = vmul.f32 %v1020, %v2067
        %v2074 = vmul.f32 %v1021, %v2067
        %v2075 = vmul.f32 %v1022, %v2067
        %v2076 = vmul.f32 %v1023, %v2067
        %v2077 = vmul.f32 %v1024, %v2067
        %v2078 = vmul.f32 %v1025, %v2067
        %v2079 = vmul.f32 %v1026, %v2067
        %v2080 = vmul.f32 %v1027, %v2067
        %v2081 = vmul.f32 %v1028, %v2067
        %v2082 = vmul.f32 %v1029, %v2067
        %v2083 = vmul.f32 %v1030, %v2067
        %v2084 = vmul.f32 %v1031, %v2067
        %v2085 = vmul.f32 %v1032, %v2067
        %v2086 = vmul.f32 %v1033, %v2067
        %v2087 = vmul.f32 %v1034, %v2067
        %v2088 = vmul.f32 %v1035, %v2067
        %v2089 = vmul.f32 %v1036, %v2067
        %v2090 = vmul.f32 %v1037, %v2067
        %v2091 = vmul.f32 %v1038, %v2067
        %v2092 = vmul.f32 %v1039, %v2067
        %v2093 = vmul.f32 %v1040, %v2067
        %v2094 = vmul.f32 %v1041, %v2067
        %v2095 = vmul.f32 %v1042, %v2067
        %v2096 = vmul.f32 %v1043, %v2067
        %v2097 = vmul.f32 %v1044, %v2067
        %v2098 = vmul.f32 %v1045, %v2067
        %v2099 = vmul.f32 %v1046, %v2067
        %v2100 = vmul.f32 %v1047, %v2067
        %2133 = vrot.lane.b32.xlu0 %v2069, 64
        %v2134 = vpop.permute.xlu0 %2133
        %2135 = vrot.lane.b32.xlu0 %v2070, 64
        %v2136 = vpop.permute.xlu0 %2135
        %2137 = vrot.lane.b32.xlu0 %v2071, 64
        %v2138 = vpop.permute.xlu0 %2137
        %2139 = vrot.lane.b32.xlu0 %v2072, 64
        %v2140 = vpop.permute.xlu0 %2139
        %2141 = vrot.lane.b32.xlu0 %v2073, 64
        %v2142 = vpop.permute.xlu0 %2141
        %2143 = vrot.lane.b32.xlu0 %v2074, 64
        %v2144 = vpop.permute.xlu0 %2143
        %2145 = vrot.lane.b32.xlu0 %v2075, 64
        %v2146 = vpop.permute.xlu0 %2145
        %2147 = vrot.lane.b32.xlu0 %v2076, 64
        %v2148 = vpop.permute.xlu0 %2147
        %2149 = vrot.lane.b32.xlu0 %v2077, 64
        %v2150 = vpop.permute.xlu0 %2149
        %2151 = vrot.lane.b32.xlu0 %v2078, 64
        %v2152 = vpop.permute.xlu0 %2151
        %2153 = vrot.lane.b32.xlu0 %v2079, 64
        %v2154 = vpop.permute.xlu0 %2153
        %2155 = vrot.lane.b32.xlu0 %v2080, 64
        %v2156 = vpop.permute.xlu0 %2155
        %2157 = vrot.lane.b32.xlu0 %v2081, 64
        %v2158 = vpop.permute.xlu0 %2157
        %2159 = vrot.lane.b32.xlu0 %v2082, 64
        %v2160 = vpop.permute.xlu0 %2159
        %2161 = vrot.lane.b32.xlu0 %v2083, 64
        %v2162 = vpop.permute.xlu0 %2161
        %2163 = vrot.lane.b32.xlu0 %v2084, 64
        %v2164 = vpop.permute.xlu0 %2163
        %2165 = vrot.lane.b32.xlu0 %v2085, 64
        %v2166 = vpop.permute.xlu0 %2165
        %2167 = vrot.lane.b32.xlu0 %v2086, 64
        %v2168 = vpop.permute.xlu0 %2167
        %2169 = vrot.lane.b32.xlu0 %v2087, 64
        %v2170 = vpop.permute.xlu0 %2169
        %2171 = vrot.lane.b32.xlu0 %v2088, 64
        %v2172 = vpop.permute.xlu0 %2171
        %2173 = vrot.lane.b32.xlu0 %v2089, 64
        %v2174 = vpop.permute.xlu0 %2173
        %2175 = vrot.lane.b32.xlu0 %v2090, 64
        %v2176 = vpop.permute.xlu0 %2175
        %2177 = vrot.lane.b32.xlu0 %v2091, 64
        %v2178 = vpop.permute.xlu0 %2177
        %2179 = vrot.lane.b32.xlu0 %v2092, 64
        %v2180 = vpop.permute.xlu0 %2179
        %2181 = vrot.lane.b32.xlu0 %v2093, 64
        %v2182 = vpop.permute.xlu0 %2181
        %2183 = vrot.lane.b32.xlu0 %v2094, 64
        %v2184 = vpop.permute.xlu0 %2183
        %2185 = vrot.lane.b32.xlu0 %v2095, 64
        %v2186 = vpop.permute.xlu0 %2185
        %2187 = vrot.lane.b32.xlu0 %v2096, 64
        %v2188 = vpop.permute.xlu0 %2187
        %2189 = vrot.lane.b32.xlu0 %v2097, 64
        %v2190 = vpop.permute.xlu0 %2189
        %2191 = vrot.lane.b32.xlu0 %v2098, 64
        %v2192 = vpop.permute.xlu0 %2191
        %2193 = vrot.lane.b32.xlu0 %v2099, 64
        %v2194 = vpop.permute.xlu0 %2193
        %2195 = vrot.lane.b32.xlu0 %v2100, 64
        %v2196 = vpop.permute.xlu0 %2195
        %v2229 = vsel %vm1084, %v2134, 0.0
        %2230 = vadd.xlane.f32.xlu0 %v2229
        %v2231 = vpop.xlane.xlu0 %2230
        %v2232 = vsel %vm1084, %v2136, 0.0
        %2233 = vadd.xlane.f32.xlu0 %v2232
        %v2234 = vpop.xlane.xlu0 %2233
        %v2235 = vsel %vm1084, %v2138, 0.0
        %2236 = vadd.xlane.f32.xlu0 %v2235
        %v2237 = vpop.xlane.xlu0 %2236
        %v2238 = vsel %vm1084, %v2140, 0.0
        %2239 = vadd.xlane.f32.xlu0 %v2238
        %v2240 = vpop.xlane.xlu0 %2239
        %v2241 = vsel %vm1084, %v2142, 0.0
        %2242 = vadd.xlane.f32.xlu0 %v2241
        %v2243 = vpop.xlane.xlu0 %2242
        %v2244 = vsel %vm1084, %v2144, 0.0
        %2245 = vadd.xlane.f32.xlu0 %v2244
        %v2246 = vpop.xlane.xlu0 %2245
        %v2247 = vsel %vm1084, %v2146, 0.0
        %2248 = vadd.xlane.f32.xlu0 %v2247
        %v2249 = vpop.xlane.xlu0 %2248
        %v2250 = vsel %vm1084, %v2148, 0.0
        %2251 = vadd.xlane.f32.xlu0 %v2250
        %v2252 = vpop.xlane.xlu0 %2251
        %v2253 = vsel %vm1084, %v2150, 0.0
        %2254 = vadd.xlane.f32.xlu0 %v2253
        %v2255 = vpop.xlane.xlu0 %2254
        %v2256 = vsel %vm1084, %v2152, 0.0
        %2257 = vadd.xlane.f32.xlu0 %v2256
        %v2258 = vpop.xlane.xlu0 %2257
        %v2259 = vsel %vm1084, %v2154, 0.0
        %2260 = vadd.xlane.f32.xlu0 %v2259
        %v2261 = vpop.xlane.xlu0 %2260
        %v2262 = vsel %vm1084, %v2156, 0.0
        %2263 = vadd.xlane.f32.xlu0 %v2262
        %v2264 = vpop.xlane.xlu0 %2263
        %v2265 = vsel %vm1084, %v2158, 0.0
        %2266 = vadd.xlane.f32.xlu0 %v2265
        %v2267 = vpop.xlane.xlu0 %2266
        %v2268 = vsel %vm1084, %v2160, 0.0
        %2269 = vadd.xlane.f32.xlu0 %v2268
        %v2270 = vpop.xlane.xlu0 %2269
        %v2271 = vsel %vm1084, %v2162, 0.0
        %2272 = vadd.xlane.f32.xlu0 %v2271
        %v2273 = vpop.xlane.xlu0 %2272
        %v2274 = vsel %vm1084, %v2164, 0.0
        %2275 = vadd.xlane.f32.xlu0 %v2274
        %v2276 = vpop.xlane.xlu0 %2275
        %v2277 = vsel %vm1084, %v2166, 0.0
        %2278 = vadd.xlane.f32.xlu0 %v2277
        %v2279 = vpop.xlane.xlu0 %2278
        %v2280 = vsel %vm1084, %v2168, 0.0
        %2281 = vadd.xlane.f32.xlu0 %v2280
        %v2282 = vpop.xlane.xlu0 %2281
        %v2283 = vsel %vm1084, %v2170, 0.0
        %2284 = vadd.xlane.f32.xlu0 %v2283
        %v2285 = vpop.xlane.xlu0 %2284
        %v2286 = vsel %vm1084, %v2172, 0.0
        %2287 = vadd.xlane.f32.xlu0 %v2286
        %v2288 = vpop.xlane.xlu0 %2287
        %v2289 = vsel %vm1084, %v2174, 0.0
        %2290 = vadd.xlane.f32.xlu0 %v2289
        %v2291 = vpop.xlane.xlu0 %2290
        %v2292 = vsel %vm1084, %v2176, 0.0
        %2293 = vadd.xlane.f32.xlu0 %v2292
        %v2294 = vpop.xlane.xlu0 %2293
        %v2295 = vsel %vm1084, %v2178, 0.0
        %2296 = vadd.xlane.f32.xlu0 %v2295
        %v2297 = vpop.xlane.xlu0 %2296
        %v2298 = vsel %vm1084, %v2180, 0.0
        %2299 = vadd.xlane.f32.xlu0 %v2298
        %v2300 = vpop.xlane.xlu0 %2299
        %v2301 = vsel %vm1084, %v2182, 0.0
        %2302 = vadd.xlane.f32.xlu0 %v2301
        %v2303 = vpop.xlane.xlu0 %2302
        %v2304 = vsel %vm1084, %v2184, 0.0
        %2305 = vadd.xlane.f32.xlu0 %v2304
        %v2306 = vpop.xlane.xlu0 %2305
        %v2307 = vsel %vm1084, %v2186, 0.0
        %2308 = vadd.xlane.f32.xlu0 %v2307
        %v2309 = vpop.xlane.xlu0 %2308
        %v2310 = vsel %vm1084, %v2188, 0.0
        %2311 = vadd.xlane.f32.xlu0 %v2310
        %v2312 = vpop.xlane.xlu0 %2311
        %v2313 = vsel %vm1084, %v2190, 0.0
        %2314 = vadd.xlane.f32.xlu0 %v2313
        %v2315 = vpop.xlane.xlu0 %2314
        %v2316 = vsel %vm1084, %v2192, 0.0
        %2317 = vadd.xlane.f32.xlu0 %v2316
        %v2318 = vpop.xlane.xlu0 %2317
        %v2319 = vsel %vm1084, %v2194, 0.0
        %2320 = vadd.xlane.f32.xlu0 %v2319
        %v2321 = vpop.xlane.xlu0 %2320
        %v2322 = vsel %vm1084, %v2196, 0.0
        %2323 = vadd.xlane.f32.xlu0 %v2322
        %v2324 = vpop.xlane.xlu0 %2323
        %v2357 = vlaneseq
        %v2358 = vshrl.u32 %v2357, 7
        %v2359 = vsub.s32 %v1216, %v2358
        %v2360 = vrot.slane %v2231, %v2359
        %v2361 = vlaneseq
        %v2362 = vshrl.u32 %v2361, 7
        %v2363 = vsub.s32 %v1221, %v2362
        %v2364 = vrot.slane %v2234, %v2363
        %v2365 = vsel %vm1226, %v2364, %v2360
        %v2366 = vlaneseq
        %v2367 = vshrl.u32 %v2366, 7
        %v2368 = vsub.s32 %v1216, %v2367
        %v2369 = vrot.slane %v2237, %v2368
        %v2370 = vlaneseq
        %v2371 = vshrl.u32 %v2370, 7
        %v2372 = vsub.s32 %v1221, %v2371
        %v2373 = vrot.slane %v2240, %v2372
        %v2374 = vsel %vm1226, %v2373, %v2369
        %v2375 = vlaneseq
        %v2376 = vshrl.u32 %v2375, 7
        %v2377 = vsub.s32 %v1216, %v2376
        %v2378 = vrot.slane %v2243, %v2377
        %v2379 = vlaneseq
        %v2380 = vshrl.u32 %v2379, 7
        %v2381 = vsub.s32 %v1221, %v2380
        %v2382 = vrot.slane %v2246, %v2381
        %v2383 = vsel %vm1226, %v2382, %v2378
        %v2384 = vlaneseq
        %v2385 = vshrl.u32 %v2384, 7
        %v2386 = vsub.s32 %v1216, %v2385
        %v2387 = vrot.slane %v2249, %v2386
        %v2388 = vlaneseq
        %v2389 = vshrl.u32 %v2388, 7
        %v2390 = vsub.s32 %v1221, %v2389
        %v2391 = vrot.slane %v2252, %v2390
        %v2392 = vsel %vm1226, %v2391, %v2387
        %v2393 = vlaneseq
        %v2394 = vshrl.u32 %v2393, 7
        %v2395 = vsub.s32 %v1216, %v2394
        %v2396 = vrot.slane %v2255, %v2395
        %v2397 = vlaneseq
        %v2398 = vshrl.u32 %v2397, 7
        %v2399 = vsub.s32 %v1221, %v2398
        %v2400 = vrot.slane %v2258, %v2399
        %v2401 = vsel %vm1226, %v2400, %v2396
        %v2402 = vlaneseq
        %v2403 = vshrl.u32 %v2402, 7
        %v2404 = vsub.s32 %v1216, %v2403
        %v2405 = vrot.slane %v2261, %v2404
        %v2406 = vlaneseq
        %v2407 = vshrl.u32 %v2406, 7
        %v2408 = vsub.s32 %v1221, %v2407
        %v2409 = vrot.slane %v2264, %v2408
        %v2410 = vsel %vm1226, %v2409, %v2405
        %v2411 = vlaneseq
        %v2412 = vshrl.u32 %v2411, 7
        %v2413 = vsub.s32 %v1216, %v2412
        %v2414 = vrot.slane %v2267, %v2413
        %v2415 = vlaneseq
        %v2416 = vshrl.u32 %v2415, 7
        %v2417 = vsub.s32 %v1221, %v2416
        %v2418 = vrot.slane %v2270, %v2417
        %v2419 = vsel %vm1226, %v2418, %v2414
        %v2420 = vlaneseq
        %v2421 = vshrl.u32 %v2420, 7
        %v2422 = vsub.s32 %v1216, %v2421
        %v2423 = vrot.slane %v2273, %v2422
        %v2424 = vlaneseq
        %v2425 = vshrl.u32 %v2424, 7
        %v2426 = vsub.s32 %v1221, %v2425
        %v2427 = vrot.slane %v2276, %v2426
        %v2428 = vsel %vm1226, %v2427, %v2423
        %v2429 = vlaneseq
        %v2430 = vshrl.u32 %v2429, 7
        %v2431 = vsub.s32 %v1216, %v2430
        %v2432 = vrot.slane %v2279, %v2431
        %v2433 = vlaneseq
        %v2434 = vshrl.u32 %v2433, 7
        %v2435 = vsub.s32 %v1221, %v2434
        %v2436 = vrot.slane %v2282, %v2435
        %v2437 = vsel %vm1226, %v2436, %v2432
        %v2438 = vlaneseq
        %v2439 = vshrl.u32 %v2438, 7
        %v2440 = vsub.s32 %v1216, %v2439
        %v2441 = vrot.slane %v2285, %v2440
        %v2442 = vlaneseq
        %v2443 = vshrl.u32 %v2442, 7
        %v2444 = vsub.s32 %v1221, %v2443
        %v2445 = vrot.slane %v2288, %v2444
        %v2446 = vsel %vm1226, %v2445, %v2441
        %v2447 = vlaneseq
        %v2448 = vshrl.u32 %v2447, 7
        %v2449 = vsub.s32 %v1216, %v2448
        %v2450 = vrot.slane %v2291, %v2449
        %v2451 = vlaneseq
        %v2452 = vshrl.u32 %v2451, 7
        %v2453 = vsub.s32 %v1221, %v2452
        %v2454 = vrot.slane %v2294, %v2453
        %v2455 = vsel %vm1226, %v2454, %v2450
        %v2456 = vlaneseq
        %v2457 = vshrl.u32 %v2456, 7
        %v2458 = vsub.s32 %v1216, %v2457
        %v2459 = vrot.slane %v2297, %v2458
        %v2460 = vlaneseq
        %v2461 = vshrl.u32 %v2460, 7
        %v2462 = vsub.s32 %v1221, %v2461
        %v2463 = vrot.slane %v2300, %v2462
        %v2464 = vsel %vm1226, %v2463, %v2459
        %v2465 = vlaneseq
        %v2466 = vshrl.u32 %v2465, 7
        %v2467 = vsub.s32 %v1216, %v2466
        %v2468 = vrot.slane %v2303, %v2467
        %v2469 = vlaneseq
        %v2470 = vshrl.u32 %v2469, 7
        %v2471 = vsub.s32 %v1221, %v2470
        %v2472 = vrot.slane %v2306, %v2471
        %v2473 = vsel %vm1226, %v2472, %v2468
        %v2474 = vlaneseq
        %v2475 = vshrl.u32 %v2474, 7
        %v2476 = vsub.s32 %v1216, %v2475
        %v2477 = vrot.slane %v2309, %v2476
        %v2478 = vlaneseq
        %v2479 = vshrl.u32 %v2478, 7
        %v2480 = vsub.s32 %v1221, %v2479
        %v2481 = vrot.slane %v2312, %v2480
        %v2482 = vsel %vm1226, %v2481, %v2477
        %v2483 = vlaneseq
        %v2484 = vshrl.u32 %v2483, 7
        %v2485 = vsub.s32 %v1216, %v2484
        %v2486 = vrot.slane %v2315, %v2485
        %v2487 = vlaneseq
        %v2488 = vshrl.u32 %v2487, 7
        %v2489 = vsub.s32 %v1221, %v2488
        %v2490 = vrot.slane %v2318, %v2489
        %v2491 = vsel %vm1226, %v2490, %v2486
        %v2492 = vlaneseq
        %v2493 = vshrl.u32 %v2492, 7
        %v2494 = vsub.s32 %v1216, %v2493
        %v2495 = vrot.slane %v2321, %v2494
        %v2496 = vlaneseq
        %v2497 = vshrl.u32 %v2496, 7
        %v2498 = vsub.s32 %v1221, %v2497
        %v2499 = vrot.slane %v2324, %v2498
        %v2500 = vsel %vm1226, %v2499, %v2495
        %v2501 = vsel %vm1363, %v2374, %v2365
        %v2502 = vsel %vm1365, %v2383, %v2501
        %v2503 = vsel %vm1367, %v2392, %v2502
        %v2504 = vsel %vm1369, %v2401, %v2503
        %v2505 = vsel %vm1371, %v2410, %v2504
        %v2506 = vsel %vm1373, %v2419, %v2505
        %v2507 = vsel %vm1375, %v2428, %v2506
        %v2508 = vsel %vm1363, %v2446, %v2437
        %v2509 = vsel %vm1365, %v2455, %v2508
        %v2510 = vsel %vm1367, %v2464, %v2509
        %v2511 = vsel %vm1369, %v2473, %v2510
        %v2512 = vsel %vm1371, %v2482, %v2511
        %v2513 = vsel %vm1373, %v2491, %v2512
        %v2514 = vsel %vm1375, %v2500, %v2513
        %v2517 = vsel %vm1181, %v2507, -1e+30
        %v2518 = vsel %vm1182, %v2514, -1e+30
        %v2519 = vsel %vm1388, %v2517, -inf
        %2520 = vmax.xlane.f32.xlu0 %v2519
        %v2521 = vpop.xlane.xlu0 %2520
        %v2522 = vsel %vm1388, %v2518, -inf
        %2523 = vmax.xlane.f32.xlu0 %v2522
        %v2524 = vpop.xlane.xlu0 %2523
        %v2525 = vsub.f32 %v2517, %v2521
        %v2526 = vsub.f32 %v2518, %v2524
        %v2527 = vmul.f32 %v2525, 1.442695
        %v2528 = vpow.pop %v2527
        %v2529 = vmul.f32 %v2526, 1.442695
        %v2530 = vpow.pop %v2529
        %v2531 = vsel %vm1388, %v2528, 0.0
        %2532 = vadd.xlane.f32.xlu0 %v2531
        %v2533 = vpop.xlane.xlu0 %2532
        %v2534 = vsel %vm1388, %v2530, 0.0
        %2535 = vadd.xlane.f32.xlu0 %v2534
        %v2536 = vpop.xlane.xlu0 %2535
        %v2537 = vrcp.pop %v2533
        %v2538 = vrcp.pop %v2536
        %v2539 = vmul.f32 %v2528, %v2537
        %v2540 = vmul.f32 %v2530, %v2538
        %2541 = vrot.lane.b32.xlu0 %v729, 64
        %v2542 = vpop.permute.xlu0 %2541
        %2543 = vrot.lane.b32.xlu0 %v735, 64
        %v2544 = vpop.permute.xlu0 %2543
        %v2548 = vsel %vm1388, %v2539, 0
        %v2551 = vsel %vm1388, %v2540, 0
        %2553 = vmatprep.subr.mxu0 0.0
        %2554 = vmatpush1.msra.mxu0 0.0
        %2555 = vmatprep.subr.mxu0 0.0
        %2556 = vmatpush1.msra.mxu0 0.0
        %2557 = vmatprep.subr.mxu0 0.0
        %2558 = vmatpush1.msra.mxu0 0.0
        %2559 = vmatprep.subr.mxu0 0.0
        %2560 = vmatpush1.msra.mxu0 0.0
        %2561 = vmatprep.subr.mxu0 0.0
        %2562 = vmatpush1.msra.mxu0 0.0
        %2563 = vmatprep.subr.mxu0 0.0
        %2564 = vmatpush1.msra.mxu0 0.0
        %2565 = vmatprep.subr.mxu0 0.0
        %2566 = vmatpush1.msra.mxu0 0.0
        %2567 = vmatprep.subr.mxu0 0.0
        %2568 = vmatpush1.msra.mxu0 0.0
        %2569 = vmatprep.subr.mxu0 0.0
        %2570 = vmatpush1.msra.mxu0 0.0
        %2571 = vmatprep.subr.mxu0 0.0
        %2572 = vmatpush1.msra.mxu0 0.0
        %2573 = vmatprep.subr.mxu0 0.0
        %2574 = vmatpush1.msra.mxu0 0.0
        %2575 = vmatprep.subr.mxu0 0.0
        %2576 = vmatpush1.msra.mxu0 0.0
        %2577 = vmatprep.subr.mxu0 0.0
        %2578 = vmatpush1.msra.mxu0 0.0
        %2579 = vmatprep.subr.mxu0 0.0
        %2580 = vmatpush1.msra.mxu0 0.0
        %2581 = vmatprep.subr.mxu0 0.0
        %2582 = vmatpush1.msra.mxu0 %v2544
        %2583 = vmatprep.subr.mxu0 0.0
        %2584 = vmatpush1.msra.mxu0 %v2542
        %2585 = vmatprep.subr.mxu0 0.0
        %2586 = vmatpush2.msra.mxu0 0.0
        %2587 = vmatprep.subr.mxu0 0.0
        %2588 = vmatpush2.msra.mxu0 0.0
        %2589 = vmatprep.subr.mxu0 0.0
        %2590 = vmatpush2.msra.mxu0 0.0
        %2591 = vmatprep.subr.mxu0 0.0
        %2592 = vmatpush2.msra.mxu0 0.0
        %2593 = vmatprep.subr.mxu0 0.0
        %2594 = vmatpush2.msra.mxu0 0.0
        %2595 = vmatprep.subr.mxu0 0.0
        %2596 = vmatpush2.msra.mxu0 0.0
        %2597 = vmatprep.subr.mxu0 0.0
        %2598 = vmatpush2.msra.mxu0 0.0
        %2599 = vmatprep.subr.mxu0 0.0
        %2600 = vmatpush2.msra.mxu0 0.0
        %2601 = vmatprep.subr.mxu0 0.0
        %2602 = vmatpush2.msra.mxu0 0.0
        %2603 = vmatprep.subr.mxu0 0.0
        %2604 = vmatpush2.msra.mxu0 0.0
        %2605 = vmatprep.subr.mxu0 0.0
        %2606 = vmatpush2.msra.mxu0 0.0
        %2607 = vmatprep.subr.mxu0 0.0
        %2608 = vmatpush2.msra.mxu0 0.0
        %2609 = vmatprep.subr.mxu0 0.0
        %2610 = vmatpush2.msra.mxu0 0.0
        %2611 = vmatprep.subr.mxu0 0.0
        %2612 = vmatpush2.msra.mxu0 0.0
        %2613 = vmatprep.subr.mxu0 0.0
        %2614 = vmatpush2.msra.mxu0 0.0
        %2615 = vmatprep.subr.mxu0 0.0
        %2616 = vmatpush2.msra.mxu0 0.0
        %2617 = vmatprep.mubr.f32.mxu0 0.0
        %2618 = vmatmul.mubr.f32.gmra.mxu0 %v2548
        %v2619 = vpop.f32.mrf.mxu0
        %v2620 = vadd.f32 0.0, %v2619
        %v2621 = vpop.f32.mrf.mxu0
        %2622 = vmatprep.mubr.f32.mxu0 0.0
        %2623 = vmatmul.mubr.f32.gmra.mxu0 %v2551
        %v2624 = vpop.f32.mrf.mxu0
        %v2625 = vadd.f32 0.0, %v2624
        %v2626 = vpop.f32.mrf.mxu0
        %2627 = vdwg.mxu0
        %v2628 = vlaneseq
        %v2629 = vshrl.u32 %v2628, 7
        %v2630 = vsub.s32 3, %v2629
        %v2631 = vrot.slane %v739, %v2630
        %2633 = vrot.lane.b32.xlu0 %v2631, 96
        %v2634 = vpop.permute.xlu0 %2633
        %v2636 = vmul.f32 %v1016, %v2634
        %v2637 = vmul.f32 %v1017, %v2634
        %v2638 = vmul.f32 %v1018, %v2634
        %v2639 = vmul.f32 %v1019, %v2634
        %v2640 = vmul.f32 %v1020, %v2634
        %v2641 = vmul.f32 %v1021, %v2634
        %v2642 = vmul.f32 %v1022, %v2634
        %v2643 = vmul.f32 %v1023, %v2634
        %v2644 = vmul.f32 %v1024, %v2634
        %v2645 = vmul.f32 %v1025, %v2634
        %v2646 = vmul.f32 %v1026, %v2634
        %v2647 = vmul.f32 %v1027, %v2634
        %v2648 = vmul.f32 %v1028, %v2634
        %v2649 = vmul.f32 %v1029, %v2634
        %v2650 = vmul.f32 %v1030, %v2634
        %v2651 = vmul.f32 %v1031, %v2634
        %v2652 = vmul.f32 %v1032, %v2634
        %v2653 = vmul.f32 %v1033, %v2634
        %v2654 = vmul.f32 %v1034, %v2634
        %v2655 = vmul.f32 %v1035, %v2634
        %v2656 = vmul.f32 %v1036, %v2634
        %v2657 = vmul.f32 %v1037, %v2634
        %v2658 = vmul.f32 %v1038, %v2634
        %v2659 = vmul.f32 %v1039, %v2634
        %v2660 = vmul.f32 %v1040, %v2634
        %v2661 = vmul.f32 %v1041, %v2634
        %v2662 = vmul.f32 %v1042, %v2634
        %v2663 = vmul.f32 %v1043, %v2634
        %v2664 = vmul.f32 %v1044, %v2634
        %v2665 = vmul.f32 %v1045, %v2634
        %v2666 = vmul.f32 %v1046, %v2634
        %v2667 = vmul.f32 %v1047, %v2634
        %2700 = vrot.lane.b32.xlu0 %v2636, 32
        %v2701 = vpop.permute.xlu0 %2700
        %2702 = vrot.lane.b32.xlu0 %v2637, 32
        %v2703 = vpop.permute.xlu0 %2702
        %2704 = vrot.lane.b32.xlu0 %v2638, 32
        %v2705 = vpop.permute.xlu0 %2704
        %2706 = vrot.lane.b32.xlu0 %v2639, 32
        %v2707 = vpop.permute.xlu0 %2706
        %2708 = vrot.lane.b32.xlu0 %v2640, 32
        %v2709 = vpop.permute.xlu0 %2708
        %2710 = vrot.lane.b32.xlu0 %v2641, 32
        %v2711 = vpop.permute.xlu0 %2710
        %2712 = vrot.lane.b32.xlu0 %v2642, 32
        %v2713 = vpop.permute.xlu0 %2712
        %2714 = vrot.lane.b32.xlu0 %v2643, 32
        %v2715 = vpop.permute.xlu0 %2714
        %2716 = vrot.lane.b32.xlu0 %v2644, 32
        %v2717 = vpop.permute.xlu0 %2716
        %2718 = vrot.lane.b32.xlu0 %v2645, 32
        %v2719 = vpop.permute.xlu0 %2718
        %2720 = vrot.lane.b32.xlu0 %v2646, 32
        %v2721 = vpop.permute.xlu0 %2720
        %2722 = vrot.lane.b32.xlu0 %v2647, 32
        %v2723 = vpop.permute.xlu0 %2722
        %2724 = vrot.lane.b32.xlu0 %v2648, 32
        %v2725 = vpop.permute.xlu0 %2724
        %2726 = vrot.lane.b32.xlu0 %v2649, 32
        %v2727 = vpop.permute.xlu0 %2726
        %2728 = vrot.lane.b32.xlu0 %v2650, 32
        %v2729 = vpop.permute.xlu0 %2728
        %2730 = vrot.lane.b32.xlu0 %v2651, 32
        %v2731 = vpop.permute.xlu0 %2730
        %2732 = vrot.lane.b32.xlu0 %v2652, 32
        %v2733 = vpop.permute.xlu0 %2732
        %2734 = vrot.lane.b32.xlu0 %v2653, 32
        %v2735 = vpop.permute.xlu0 %2734
        %2736 = vrot.lane.b32.xlu0 %v2654, 32
        %v2737 = vpop.permute.xlu0 %2736
        %2738 = vrot.lane.b32.xlu0 %v2655, 32
        %v2739 = vpop.permute.xlu0 %2738
        %2740 = vrot.lane.b32.xlu0 %v2656, 32
        %v2741 = vpop.permute.xlu0 %2740
        %2742 = vrot.lane.b32.xlu0 %v2657, 32
        %v2743 = vpop.permute.xlu0 %2742
        %2744 = vrot.lane.b32.xlu0 %v2658, 32
        %v2745 = vpop.permute.xlu0 %2744
        %2746 = vrot.lane.b32.xlu0 %v2659, 32
        %v2747 = vpop.permute.xlu0 %2746
        %2748 = vrot.lane.b32.xlu0 %v2660, 32
        %v2749 = vpop.permute.xlu0 %2748
        %2750 = vrot.lane.b32.xlu0 %v2661, 32
        %v2751 = vpop.permute.xlu0 %2750
        %2752 = vrot.lane.b32.xlu0 %v2662, 32
        %v2753 = vpop.permute.xlu0 %2752
        %2754 = vrot.lane.b32.xlu0 %v2663, 32
        %v2755 = vpop.permute.xlu0 %2754
        %2756 = vrot.lane.b32.xlu0 %v2664, 32
        %v2757 = vpop.permute.xlu0 %2756
        %2758 = vrot.lane.b32.xlu0 %v2665, 32
        %v2759 = vpop.permute.xlu0 %2758
        %2760 = vrot.lane.b32.xlu0 %v2666, 32
        %v2761 = vpop.permute.xlu0 %2760
        %2762 = vrot.lane.b32.xlu0 %v2667, 32
        %v2763 = vpop.permute.xlu0 %2762
        %v2796 = vsel %vm1084, %v2701, 0.0
        %2797 = vadd.xlane.f32.xlu0 %v2796
        %v2798 = vpop.xlane.xlu0 %2797
        %v2799 = vsel %vm1084, %v2703, 0.0
        %2800 = vadd.xlane.f32.xlu0 %v2799
        %v2801 = vpop.xlane.xlu0 %2800
        %v2802 = vsel %vm1084, %v2705, 0.0
        %2803 = vadd.xlane.f32.xlu0 %v2802
        %v2804 = vpop.xlane.xlu0 %2803
        %v2805 = vsel %vm1084, %v2707, 0.0
        %2806 = vadd.xlane.f32.xlu0 %v2805
        %v2807 = vpop.xlane.xlu0 %2806
        %v2808 = vsel %vm1084, %v2709, 0.0
        %2809 = vadd.xlane.f32.xlu0 %v2808
        %v2810 = vpop.xlane.xlu0 %2809
        %v2811 = vsel %vm1084, %v2711, 0.0
        %2812 = vadd.xlane.f32.xlu0 %v2811
        %v2813 = vpop.xlane.xlu0 %2812
        %v2814 = vsel %vm1084, %v2713, 0.0
        %2815 = vadd.xlane.f32.xlu0 %v2814
        %v2816 = vpop.xlane.xlu0 %2815
        %v2817 = vsel %vm1084, %v2715, 0.0
        %2818 = vadd.xlane.f32.xlu0 %v2817
        %v2819 = vpop.xlane.xlu0 %2818
        %v2820 = vsel %vm1084, %v2717, 0.0
        %2821 = vadd.xlane.f32.xlu0 %v2820
        %v2822 = vpop.xlane.xlu0 %2821
        %v2823 = vsel %vm1084, %v2719, 0.0
        %2824 = vadd.xlane.f32.xlu0 %v2823
        %v2825 = vpop.xlane.xlu0 %2824
        %v2826 = vsel %vm1084, %v2721, 0.0
        %2827 = vadd.xlane.f32.xlu0 %v2826
        %v2828 = vpop.xlane.xlu0 %2827
        %v2829 = vsel %vm1084, %v2723, 0.0
        %2830 = vadd.xlane.f32.xlu0 %v2829
        %v2831 = vpop.xlane.xlu0 %2830
        %v2832 = vsel %vm1084, %v2725, 0.0
        %2833 = vadd.xlane.f32.xlu0 %v2832
        %v2834 = vpop.xlane.xlu0 %2833
        %v2835 = vsel %vm1084, %v2727, 0.0
        %2836 = vadd.xlane.f32.xlu0 %v2835
        %v2837 = vpop.xlane.xlu0 %2836
        %v2838 = vsel %vm1084, %v2729, 0.0
        %2839 = vadd.xlane.f32.xlu0 %v2838
        %v2840 = vpop.xlane.xlu0 %2839
        %v2841 = vsel %vm1084, %v2731, 0.0
        %2842 = vadd.xlane.f32.xlu0 %v2841
        %v2843 = vpop.xlane.xlu0 %2842
        %v2844 = vsel %vm1084, %v2733, 0.0
        %2845 = vadd.xlane.f32.xlu0 %v2844
        %v2846 = vpop.xlane.xlu0 %2845
        %v2847 = vsel %vm1084, %v2735, 0.0
        %2848 = vadd.xlane.f32.xlu0 %v2847
        %v2849 = vpop.xlane.xlu0 %2848
        %v2850 = vsel %vm1084, %v2737, 0.0
        %2851 = vadd.xlane.f32.xlu0 %v2850
        %v2852 = vpop.xlane.xlu0 %2851
        %v2853 = vsel %vm1084, %v2739, 0.0
        %2854 = vadd.xlane.f32.xlu0 %v2853
        %v2855 = vpop.xlane.xlu0 %2854
        %v2856 = vsel %vm1084, %v2741, 0.0
        %2857 = vadd.xlane.f32.xlu0 %v2856
        %v2858 = vpop.xlane.xlu0 %2857
        %v2859 = vsel %vm1084, %v2743, 0.0
        %2860 = vadd.xlane.f32.xlu0 %v2859
        %v2861 = vpop.xlane.xlu0 %2860
        %v2862 = vsel %vm1084, %v2745, 0.0
        %2863 = vadd.xlane.f32.xlu0 %v2862
        %v2864 = vpop.xlane.xlu0 %2863
        %v2865 = vsel %vm1084, %v2747, 0.0
        %2866 = vadd.xlane.f32.xlu0 %v2865
        %v2867 = vpop.xlane.xlu0 %2866
        %v2868 = vsel %vm1084, %v2749, 0.0
        %2869 = vadd.xlane.f32.xlu0 %v2868
        %v2870 = vpop.xlane.xlu0 %2869
        %v2871 = vsel %vm1084, %v2751, 0.0
        %2872 = vadd.xlane.f32.xlu0 %v2871
        %v2873 = vpop.xlane.xlu0 %2872
        %v2874 = vsel %vm1084, %v2753, 0.0
        %2875 = vadd.xlane.f32.xlu0 %v2874
        %v2876 = vpop.xlane.xlu0 %2875
        %v2877 = vsel %vm1084, %v2755, 0.0
        %2878 = vadd.xlane.f32.xlu0 %v2877
        %v2879 = vpop.xlane.xlu0 %2878
        %v2880 = vsel %vm1084, %v2757, 0.0
        %2881 = vadd.xlane.f32.xlu0 %v2880
        %v2882 = vpop.xlane.xlu0 %2881
        %v2883 = vsel %vm1084, %v2759, 0.0
        %2884 = vadd.xlane.f32.xlu0 %v2883
        %v2885 = vpop.xlane.xlu0 %2884
        %v2886 = vsel %vm1084, %v2761, 0.0
        %2887 = vadd.xlane.f32.xlu0 %v2886
        %v2888 = vpop.xlane.xlu0 %2887
        %v2889 = vsel %vm1084, %v2763, 0.0
        %2890 = vadd.xlane.f32.xlu0 %v2889
        %v2891 = vpop.xlane.xlu0 %2890
        %v2924 = vlaneseq
        %v2925 = vshrl.u32 %v2924, 7
        %v2926 = vsub.s32 %v1216, %v2925
        %v2927 = vrot.slane %v2798, %v2926
        %v2928 = vlaneseq
        %v2929 = vshrl.u32 %v2928, 7
        %v2930 = vsub.s32 %v1221, %v2929
        %v2931 = vrot.slane %v2801, %v2930
        %v2932 = vsel %vm1226, %v2931, %v2927
        %v2933 = vlaneseq
        %v2934 = vshrl.u32 %v2933, 7
        %v2935 = vsub.s32 %v1216, %v2934
        %v2936 = vrot.slane %v2804, %v2935
        %v2937 = vlaneseq
        %v2938 = vshrl.u32 %v2937, 7
        %v2939 = vsub.s32 %v1221, %v2938
        %v2940 = vrot.slane %v2807, %v2939
        %v2941 = vsel %vm1226, %v2940, %v2936
        %v2942 = vlaneseq
        %v2943 = vshrl.u32 %v2942, 7
        %v2944 = vsub.s32 %v1216, %v2943
        %v2945 = vrot.slane %v2810, %v2944
        %v2946 = vlaneseq
        %v2947 = vshrl.u32 %v2946, 7
        %v2948 = vsub.s32 %v1221, %v2947
        %v2949 = vrot.slane %v2813, %v2948
        %v2950 = vsel %vm1226, %v2949, %v2945
        %v2951 = vlaneseq
        %v2952 = vshrl.u32 %v2951, 7
        %v2953 = vsub.s32 %v1216, %v2952
        %v2954 = vrot.slane %v2816, %v2953
        %v2955 = vlaneseq
        %v2956 = vshrl.u32 %v2955, 7
        %v2957 = vsub.s32 %v1221, %v2956
        %v2958 = vrot.slane %v2819, %v2957
        %v2959 = vsel %vm1226, %v2958, %v2954
        %v2960 = vlaneseq
        %v2961 = vshrl.u32 %v2960, 7
        %v2962 = vsub.s32 %v1216, %v2961
        %v2963 = vrot.slane %v2822, %v2962
        %v2964 = vlaneseq
        %v2965 = vshrl.u32 %v2964, 7
        %v2966 = vsub.s32 %v1221, %v2965
        %v2967 = vrot.slane %v2825, %v2966
        %v2968 = vsel %vm1226, %v2967, %v2963
        %v2969 = vlaneseq
        %v2970 = vshrl.u32 %v2969, 7
        %v2971 = vsub.s32 %v1216, %v2970
        %v2972 = vrot.slane %v2828, %v2971
        %v2973 = vlaneseq
        %v2974 = vshrl.u32 %v2973, 7
        %v2975 = vsub.s32 %v1221, %v2974
        %v2976 = vrot.slane %v2831, %v2975
        %v2977 = vsel %vm1226, %v2976, %v2972
        %v2978 = vlaneseq
        %v2979 = vshrl.u32 %v2978, 7
        %v2980 = vsub.s32 %v1216, %v2979
        %v2981 = vrot.slane %v2834, %v2980
        %v2982 = vlaneseq
        %v2983 = vshrl.u32 %v2982, 7
        %v2984 = vsub.s32 %v1221, %v2983
        %v2985 = vrot.slane %v2837, %v2984
        %v2986 = vsel %vm1226, %v2985, %v2981
        %v2987 = vlaneseq
        %v2988 = vshrl.u32 %v2987, 7
        %v2989 = vsub.s32 %v1216, %v2988
        %v2990 = vrot.slane %v2840, %v2989
        %v2991 = vlaneseq
        %v2992 = vshrl.u32 %v2991, 7
        %v2993 = vsub.s32 %v1221, %v2992
        %v2994 = vrot.slane %v2843, %v2993
        %v2995 = vsel %vm1226, %v2994, %v2990
        %v2996 = vlaneseq
        %v2997 = vshrl.u32 %v2996, 7
        %v2998 = vsub.s32 %v1216, %v2997
        %v2999 = vrot.slane %v2846, %v2998
        %v3000 = vlaneseq
        %v3001 = vshrl.u32 %v3000, 7
        %v3002 = vsub.s32 %v1221, %v3001
        %v3003 = vrot.slane %v2849, %v3002
        %v3004 = vsel %vm1226, %v3003, %v2999
        %v3005 = vlaneseq
        %v3006 = vshrl.u32 %v3005, 7
        %v3007 = vsub.s32 %v1216, %v3006
        %v3008 = vrot.slane %v2852, %v3007
        %v3009 = vlaneseq
        %v3010 = vshrl.u32 %v3009, 7
        %v3011 = vsub.s32 %v1221, %v3010
        %v3012 = vrot.slane %v2855, %v3011
        %v3013 = vsel %vm1226, %v3012, %v3008
        %v3014 = vlaneseq
        %v3015 = vshrl.u32 %v3014, 7
        %v3016 = vsub.s32 %v1216, %v3015
        %v3017 = vrot.slane %v2858, %v3016
        %v3018 = vlaneseq
        %v3019 = vshrl.u32 %v3018, 7
        %v3020 = vsub.s32 %v1221, %v3019
        %v3021 = vrot.slane %v2861, %v3020
        %v3022 = vsel %vm1226, %v3021, %v3017
        %v3023 = vlaneseq
        %v3024 = vshrl.u32 %v3023, 7
        %v3025 = vsub.s32 %v1216, %v3024
        %v3026 = vrot.slane %v2864, %v3025
        %v3027 = vlaneseq
        %v3028 = vshrl.u32 %v3027, 7
        %v3029 = vsub.s32 %v1221, %v3028
        %v3030 = vrot.slane %v2867, %v3029
        %v3031 = vsel %vm1226, %v3030, %v3026
        %v3032 = vlaneseq
        %v3033 = vshrl.u32 %v3032, 7
        %v3034 = vsub.s32 %v1216, %v3033
        %v3035 = vrot.slane %v2870, %v3034
        %v3036 = vlaneseq
        %v3037 = vshrl.u32 %v3036, 7
        %v3038 = vsub.s32 %v1221, %v3037
        %v3039 = vrot.slane %v2873, %v3038
        %v3040 = vsel %vm1226, %v3039, %v3035
        %v3041 = vlaneseq
        %v3042 = vshrl.u32 %v3041, 7
        %v3043 = vsub.s32 %v1216, %v3042
        %v3044 = vrot.slane %v2876, %v3043
        %v3045 = vlaneseq
        %v3046 = vshrl.u32 %v3045, 7
        %v3047 = vsub.s32 %v1221, %v3046
        %v3048 = vrot.slane %v2879, %v3047
        %v3049 = vsel %vm1226, %v3048, %v3044
        %v3050 = vlaneseq
        %v3051 = vshrl.u32 %v3050, 7
        %v3052 = vsub.s32 %v1216, %v3051
        %v3053 = vrot.slane %v2882, %v3052
        %v3054 = vlaneseq
        %v3055 = vshrl.u32 %v3054, 7
        %v3056 = vsub.s32 %v1221, %v3055
        %v3057 = vrot.slane %v2885, %v3056
        %v3058 = vsel %vm1226, %v3057, %v3053
        %v3059 = vlaneseq
        %v3060 = vshrl.u32 %v3059, 7
        %v3061 = vsub.s32 %v1216, %v3060
        %v3062 = vrot.slane %v2888, %v3061
        %v3063 = vlaneseq
        %v3064 = vshrl.u32 %v3063, 7
        %v3065 = vsub.s32 %v1221, %v3064
        %v3066 = vrot.slane %v2891, %v3065
        %v3067 = vsel %vm1226, %v3066, %v3062
        %v3068 = vsel %vm1363, %v2941, %v2932
        %v3069 = vsel %vm1365, %v2950, %v3068
        %v3070 = vsel %vm1367, %v2959, %v3069
        %v3071 = vsel %vm1369, %v2968, %v3070
        %v3072 = vsel %vm1371, %v2977, %v3071
        %v3073 = vsel %vm1373, %v2986, %v3072
        %v3074 = vsel %vm1375, %v2995, %v3073
        %v3075 = vsel %vm1363, %v3013, %v3004
        %v3076 = vsel %vm1365, %v3022, %v3075
        %v3077 = vsel %vm1367, %v3031, %v3076
        %v3078 = vsel %vm1369, %v3040, %v3077
        %v3079 = vsel %vm1371, %v3049, %v3078
        %v3080 = vsel %vm1373, %v3058, %v3079
        %v3081 = vsel %vm1375, %v3067, %v3080
        %v3084 = vsel %vm1181, %v3074, -1e+30
        %v3085 = vsel %vm1182, %v3081, -1e+30
        %v3086 = vsel %vm1388, %v3084, -inf
        %3087 = vmax.xlane.f32.xlu0 %v3086
        %v3088 = vpop.xlane.xlu0 %3087
        %v3089 = vsel %vm1388, %v3085, -inf
        %3090 = vmax.xlane.f32.xlu0 %v3089
        %v3091 = vpop.xlane.xlu0 %3090
        %v3092 = vsub.f32 %v3084, %v3088
        %v3093 = vsub.f32 %v3085, %v3091
        %v3094 = vmul.f32 %v3092, 1.442695
        %v3095 = vpow.pop %v3094
        %v3096 = vmul.f32 %v3093, 1.442695
        %v3097 = vpow.pop %v3096
        %v3098 = vsel %vm1388, %v3095, 0.0
        %3099 = vadd.xlane.f32.xlu0 %v3098
        %v3100 = vpop.xlane.xlu0 %3099
        %v3101 = vsel %vm1388, %v3097, 0.0
        %3102 = vadd.xlane.f32.xlu0 %v3101
        %v3103 = vpop.xlane.xlu0 %3102
        %v3104 = vrcp.pop %v3100
        %v3105 = vrcp.pop %v3103
        %v3106 = vmul.f32 %v3095, %v3104
        %v3107 = vmul.f32 %v3097, %v3105
        %3108 = vrot.lane.b32.xlu0 %v729, 32
        %v3109 = vpop.permute.xlu0 %3108
        %3110 = vrot.lane.b32.xlu0 %v735, 32
        %v3111 = vpop.permute.xlu0 %3110
        %v3115 = vsel %vm1388, %v3106, 0
        %v3118 = vsel %vm1388, %v3107, 0
        %3120 = vmatprep.subr.mxu0 0.0
        %3121 = vmatpush1.msra.mxu0 0.0
        %3122 = vmatprep.subr.mxu0 0.0
        %3123 = vmatpush1.msra.mxu0 0.0
        %3124 = vmatprep.subr.mxu0 0.0
        %3125 = vmatpush1.msra.mxu0 0.0
        %3126 = vmatprep.subr.mxu0 0.0
        %3127 = vmatpush1.msra.mxu0 0.0
        %3128 = vmatprep.subr.mxu0 0.0
        %3129 = vmatpush1.msra.mxu0 0.0
        %3130 = vmatprep.subr.mxu0 0.0
        %3131 = vmatpush1.msra.mxu0 0.0
        %3132 = vmatprep.subr.mxu0 0.0
        %3133 = vmatpush1.msra.mxu0 0.0
        %3134 = vmatprep.subr.mxu0 0.0
        %3135 = vmatpush1.msra.mxu0 0.0
        %3136 = vmatprep.subr.mxu0 0.0
        %3137 = vmatpush1.msra.mxu0 0.0
        %3138 = vmatprep.subr.mxu0 0.0
        %3139 = vmatpush1.msra.mxu0 0.0
        %3140 = vmatprep.subr.mxu0 0.0
        %3141 = vmatpush1.msra.mxu0 0.0
        %3142 = vmatprep.subr.mxu0 0.0
        %3143 = vmatpush1.msra.mxu0 0.0
        %3144 = vmatprep.subr.mxu0 0.0
        %3145 = vmatpush1.msra.mxu0 0.0
        %3146 = vmatprep.subr.mxu0 0.0
        %3147 = vmatpush1.msra.mxu0 0.0
        %3148 = vmatprep.subr.mxu0 0.0
        %3149 = vmatpush1.msra.mxu0 %v3111
        %3150 = vmatprep.subr.mxu0 0.0
        %3151 = vmatpush1.msra.mxu0 %v3109
        %3152 = vmatprep.subr.mxu0 0.0
        %3153 = vmatpush2.msra.mxu0 0.0
        %3154 = vmatprep.subr.mxu0 0.0
        %3155 = vmatpush2.msra.mxu0 0.0
        %3156 = vmatprep.subr.mxu0 0.0
        %3157 = vmatpush2.msra.mxu0 0.0
        %3158 = vmatprep.subr.mxu0 0.0
        %3159 = vmatpush2.msra.mxu0 0.0
        %3160 = vmatprep.subr.mxu0 0.0
        %3161 = vmatpush2.msra.mxu0 0.0
        %3162 = vmatprep.subr.mxu0 0.0
        %3163 = vmatpush2.msra.mxu0 0.0
        %3164 = vmatprep.subr.mxu0 0.0
        %3165 = vmatpush2.msra.mxu0 0.0
        %3166 = vmatprep.subr.mxu0 0.0
        %3167 = vmatpush2.msra.mxu0 0.0
        %3168 = vmatprep.subr.mxu0 0.0
        %3169 = vmatpush2.msra.mxu0 0.0
        %3170 = vmatprep.subr.mxu0 0.0
        %3171 = vmatpush2.msra.mxu0 0.0
        %3172 = vmatprep.subr.mxu0 0.0
        %3173 = vmatpush2.msra.mxu0 0.0
        %3174 = vmatprep.subr.mxu0 0.0
        %3175 = vmatpush2.msra.mxu0 0.0
        %3176 = vmatprep.subr.mxu0 0.0
        %3177 = vmatpush2.msra.mxu0 0.0
        %3178 = vmatprep.subr.mxu0 0.0
        %3179 = vmatpush2.msra.mxu0 0.0
        %3180 = vmatprep.subr.mxu0 0.0
        %3181 = vmatpush2.msra.mxu0 0.0
        %3182 = vmatprep.subr.mxu0 0.0
        %3183 = vmatpush2.msra.mxu0 0.0
        %3184 = vmatprep.mubr.f32.mxu0 0.0
        %3185 = vmatmul.mubr.f32.gmra.mxu0 %v3115
        %v3186 = vpop.f32.mrf.mxu0
        %v3187 = vadd.f32 0.0, %v3186
        %v3188 = vpop.f32.mrf.mxu0
        %3189 = vmatprep.mubr.f32.mxu0 0.0
        %3190 = vmatmul.mubr.f32.gmra.mxu0 %v3118
        %v3191 = vpop.f32.mrf.mxu0
        %v3192 = vadd.f32 0.0, %v3191
        %v3193 = vpop.f32.mrf.mxu0
        %3194 = vdwg.mxu0
        %3197 = vrot.lane.b32.xlu0 %v2053, 32
        %v3198 = vpop.permute.xlu0 %3197
        %3199 = vrot.lane.b32.xlu0 %v2058, 32
        %v3200 = vpop.permute.xlu0 %3199
        %3205 = vrot.lane.b32.xlu0 %v2620, 64
        %v3206 = vpop.permute.xlu0 %3205
        %3207 = vrot.lane.b32.xlu0 %v2625, 64
        %v3208 = vpop.permute.xlu0 %3207
        %3213 = vrot.lane.b32.xlu0 %v3187, 96
        %v3214 = vpop.permute.xlu0 %3213
        %3215 = vrot.lane.b32.xlu0 %v3192, 96
        %v3216 = vpop.permute.xlu0 %3215
        %v3219 = vsel %vm1084, %v1484, %v3198
        %v3220 = vsel %vm1084, %v1489, %v3200
        %vm3221 = vcmask 523264
        %v3222 = vsel %vm3221, %v3219, %v3206
        %v3223 = vsel %vm3221, %v3220, %v3208
        %vm3224 = vcmask 785408
        %v3225 = vsel %vm3224, %v3222, %v3214
        %v3226 = vsel %vm3224, %v3223, %v3216
        %v3227 = vld [vmem:[%s506] sm:$0x1]
        %v3229 = vlaneseq
        %v3230 = vshrl.u32 %v3229, 7
        %v3231 = vsub.s32 0, %v3230
        %v3232 = vrot.slane %v3227, %v3231
        %v3234 = vadd.f32 %v3225, %v3232
        %v3235 = vadd.f32 %v3226, %v3232
        %3236 = vadd.xlane.f32.xlu0 %v3234
        %v3237 = vpop.xlane.xlu0 %3236
        %3238 = vadd.xlane.f32.xlu0 %v3235
        %v3239 = vpop.xlane.xlu0 %3238
        %v3240 = vrcp.pop 128.0
        %v3241 = vmul.f32 %v3237, %v3240
        %v3242 = vmul.f32 %v3239, %v3240
        %v3243 = vsub.f32 %v3234, %v3241
        %v3244 = vsub.f32 %v3235, %v3242
        %v3245 = vmul.f32 %v3243, %v3243
        %v3246 = vmul.f32 %v3244, %v3244
        %3247 = vadd.xlane.f32.xlu0 %v3245
        %v3248 = vpop.xlane.xlu0 %3247
        %3249 = vadd.xlane.f32.xlu0 %v3246
        %v3250 = vpop.xlane.xlu0 %3249
        %v3251 = vmul.f32 %v3248, %v3240
        %v3252 = vmul.f32 %v3250, %v3240
        %v3253 = vadd.f32 %v3251, 1e-05
        %v3254 = vadd.f32 %v3252, 1e-05
        %v3255 = vrsqrt.pop %v3253
        %v3256 = vrsqrt.pop %v3254
        %v3257 = vmul.f32 %v3243, %v3255
        %v3258 = vmul.f32 %v3244, %v3256
        %v3259 = vld [vmem:[%s509] sm:$0x1]
        %v3261 = vlaneseq
        %v3262 = vshrl.u32 %v3261, 7
        %v3263 = vsub.s32 0, %v3262
        %v3264 = vrot.slane %v3259, %v3263
        %v3266 = vmul.f32 %v3257, %v3264
        %v3267 = vmul.f32 %v3258, %v3264
        %v3268 = vld [vmem:[%s512] sm:$0x1]
        %v3270 = vlaneseq
        %v3271 = vshrl.u32 %v3270, 7
        %v3272 = vsub.s32 0, %v3271
        %v3273 = vrot.slane %v3268, %v3272
        %v3275 = vadd.f32 %v3266, %v3273
        %v3276 = vadd.f32 %v3267, %v3273
        %vm3277 = vcmp.gt.f32.partialorder %v3275, 0.0
        %vm3278 = vcmp.gt.f32.partialorder %v3276, 0.0
        %v3279 = vmul.f32 %v3275, 1.442695
        %v3280 = vpow.pop %v3279
        %v3281 = vmul.f32 %v3276, 1.442695
        %v3282 = vpow.pop %v3281
        %v3283 = vsub.f32 %v3280, 1.0
        %v3284 = vsub.f32 %v3282, 1.0
        %v3285 = vsel %vm3277, %v3275, %v3283
        %v3286 = vsel %vm3278, %v3276, %v3284
        %3287 = vst [vmem:[#allocation2] sm:$0xff] %v3285
        %3288 = vst [vmem:[#allocation2 + $0x8] sm:$0xff] %v3286
        %3289 = vst [vmem:[#allocation13] sm:$0xff] %v3285
        %3290 = vst [vmem:[#allocation13 + $0x8] sm:$0xff] %v3286
        // Predicated region
        $region89: #{tpu_custom_call.1} parent=59 // pred_check
          %p3291 = pneg %p278
        $region90: #{tpu_custom_call.1} parent=59 // pred_check_branch
          %3293 = sbr.rel (%p3291) target = $region92
        $region91: #{tpu_custom_call.1} parent=59 // pred_region
          %s3295 = ssub.s32 256, 256
          %3296 = vsyncadd [#allocation5], %s3295
          %s3297 = sshll.u32 [#allocation13], 4
          %s3298 = int_to_ptr.vmem [resolvable:$true] %s3297
          %3303 = dma.vmem_to_hbm [thread:$0]  %s3298, 256, %s10, [#allocation5], 128, 128, 8
        $region92: #{tpu_custom_call.1} parent=59 // pred_fallthru
          _
        // Predicated region
        $region93: #{tpu_custom_call.1} parent=59 // pred_check
          %p3304 = pneg %p278
        $region94: #{tpu_custom_call.1} parent=59 // pred_check_branch
          %3306 = sbr.rel (%p3304) target = $region96
        $region95: #{tpu_custom_call.1} parent=59 // pred_region
          %3307 = dma.done [#allocation5], 256
        $region96: #{tpu_custom_call.1} parent=59 // pred_fallthru
          _
      $region60: #{tpu_custom_call.1} parent=5 // pred_fallthru
        _
      %p3308 = scmp.le.s32.totalorder 2, %s20
      // Predicated region
      $region97: #{tpu_custom_call.1} parent=5 // pred_check
        %p3309 = pneg %p3308
      $region98: #{tpu_custom_call.1} parent=5 // pred_check_branch
        %3311 = sbr.rel (%p3309) target = $region100
      $region99: #{tpu_custom_call.1} parent=5 // pred_region
        %s3312 = ssub.s32 %s20, 2
      $region100: #{tpu_custom_call.1} parent=5 // pred_fallthru
        _
    $region6: #{tpu_custom_call.1} parent=1 // loop_footer
      %s24 = sadd.s32 1, %s20
    $region7: #{tpu_custom_call.1} parent=1 // loop_footer_branch
      %19 = sbr.rel target = $region3
    $region8: #{tpu_custom_call.1} parent=1 // loop_exit
      _
    %3313 = vsyncpa [#allocation4], 1
    %s3314 = scalar_lea.sflag [#allocation4], 1
    %3315 = vsyncpa %s3314, 1
    %3316 = vsyncpa [#allocation7], 1
    %3317 = vsyncpa [#allocation10], 1
    %3318 = vsyncpa [#allocation5], 1
    %s3319 = scalar_lea.sflag [#allocation5], 1
    %3320 = vsyncpa %s3319, 1

</llo_original>
